<compile_context>
chip_gen: v6e
topology: v6e:2x2x1
jax: 0.10.0
libtpu: 0.0.40
codegen_flags: <defaults>
</compile_context>

<pallas_src>
from functools import partial

import numpy as np

import jax
import jax.numpy as jnp
from jax.experimental import pallas as pl
from jax.experimental.pallas import tpu as pltpu


# ------------------------------- fused group kernel -------------------------------

def _make_group_kernel(nb, Cp, H, W, M, NT, compute_dtype):
    HW = H * W
    P = M + HW                      # pitch between image strips in the shift buffer
    W_TOT = NT * P + M              # [margin][img0][margin][img1]...[imgNT-1][margin]
    taps = [(dy, dx) for dy in (-1, 0, 1) for dx in (-1, 0, 1)]

    def kernel(x_ref, w1_ref, b1_ref, w2_ref, b2_ref, mask_ref,
               o_ref, xm_ref, r_ref):
        # Zero only the margins around/between the image strips.  Done every grid step
        # (NOT under pl.when(program_id==0)) because scratch is per-TensorCore: with a
        # "parallel" grid the second core may never execute step 0.  Nothing else ever
        # writes the margins, which is the invariant the dy taps rely on.
        zeros_m = jnp.zeros((Cp, M), jnp.float32)
        for n in range(NT + 1):
            xm_ref[:, n * P:n * P + M] = zeros_m

        masks = mask_ref[...]                                    # (9, HW) {0,1} f32

        def conv3x3(act, w_r, b):
            # act: (Cp, NT*HW) f32, w_r: (Cp, 9*Cp) compute_dtype, b: (Cp, 1) f32
            for n in range(NT):                                  # lane-aligned strips
                xm_ref[:, M + n * P:M + n * P + HW] = act[:, n * HW:(n + 1) * HW]
            # Centre tap (dy=dx=0): straight from act — no mask, no shift-buffer load.
            r_ref[4 * Cp:5 * Cp, :] = act.astype(compute_dtype)
            for t, (dy, dx) in enumerate(taps):
                if dy == 0 and dx == 0:
                    continue
                s = dy * W + dx                                  # flat pixel shift
                for n in range(NT):
                    tap = xm_ref[:, M + n * P + s:M + n * P + s + HW]
                    if dx != 0:
                        # dx shifts wrap across rows inside an image -> mask needed;
                        # dx==0 taps only cross the zero margins, so no mask.
                        tap = tap * masks[t:t + 1, :]
                    r_ref[t * Cp:(t + 1) * Cp, n * HW:(n + 1) * HW] = (
                        tap.astype(compute_dtype))
            acc = jax.lax.dot_general(                           # one MXU matmul, K=9*Cp
                w_r, r_ref[...],
                dimension_numbers=(((1,), (0,)), ((), ())),
                preferred_element_type=jnp.float32)              # (Cp, NT*HW) f32 acc
            return acc + b

        x0 = x_ref[0].astype(jnp.float32)                        # (Cp, NT*HW)
        res = x0
        for i in range(nb):                                      # all blocks fused
            h = jnp.maximum(conv3x3(res, w1_ref[i], b1_ref[i]), 0.0)
            res = conv3x3(h, w2_ref[i], b2_ref[i]) + res         # block skip
        res = res + x0                                           # group skip
        o_ref[0] = res.astype(o_ref.dtype)                       # lane-dense store

    return kernel


# --------------------------------- host-side prep ---------------------------------

def _tap_masks(H, W):
    """(9, H*W) {0,1} f32 validity masks per 3x3 tap, taps (dy, dx) row-major.
    Only the dx != 0 taps are consumed in-kernel."""
    y, x = np.divmod(np.arange(H * W), W)
    rows = []
    for dy in (-1, 0, 1):
        for dx in (-1, 0, 1):
            valid = (y + dy >= 0) & (y + dy < H) & (x + dx >= 0) & (x + dx < W)
            rows.append(valid.astype(np.float32))
    return jnp.asarray(np.stack(rows))


def _pack_conv_weight(w, Cp, dtype):
    """HWIO (3,3,Cin,Cout) -> (Cp, 9*Cp): rows = padded out-channels, columns = tap-major
    padded in-channels, matching the in-kernel im2col row layout.  Pre-cast to the MXU
    operand dtype on the host (no per-conv casts in the kernel)."""
    kh, kw, cin, cout = w.shape
    wr = jnp.transpose(w, (3, 0, 1, 2)).reshape(cout, kh * kw, cin)
    wr = jnp.pad(wr, ((0, Cp - cout), (0, 0), (0, Cp - cin)))
    return wr.reshape(Cp, kh * kw * Cp).astype(dtype)


def _pick_image_tile(N, HW):
    """How many images to batch into the lane axis of one grid step."""
    if HW % 128 != 0:                      # per-image strips must stay lane-aligned
        return 1
    nt = max(1, min(N, 2048 // HW))        # keep matmul N-dim / per-step VMEM modest
    while N % nt != 0:
        nt -= 1
    return nt


@partial(jax.jit, static_argnames=("compute_dtype",))
def residual_group(x_nchw, block_params, compute_dtype=jnp.float32):
    """ResidualGroup forward.  x_nchw: (N, C, H, W), same interface as the PyTorch module."""
    N, C, H, W = x_nchw.shape
    nb = len(block_params)
    HW = H * W
    Cp = ((C + 7) // 8) * 8                       # channels padded to a sublane multiple
    M = ((W + 1 + 127) // 128) * 128              # zero margin (lane aligned, >= W+1)
    NT = _pick_image_tile(N, HW)
    NB = N // NT
    P = M + HW
    W_TOT = NT * P + M
    cdt = jnp.dtype(compute_dtype)

    w1 = jnp.stack([_pack_conv_weight(p[0], Cp, compute_dtype) for p in block_params])
    b1 = jnp.stack([jnp.pad(p[1], (0, Cp - C)).reshape(Cp, 1) for p in block_params])
    w2 = jnp.stack([_pack_conv_weight(p[2], Cp, compute_dtype) for p in block_params])
    b2 = jnp.stack([jnp.pad(p[3], (0, Cp - C)).reshape(Cp, 1) for p in block_params])
    masks = _tap_masks(H, W)                                     # (9, HW)

    # Lane-dense activation slab: NT images share the pixel (lane) axis per grid step.
    xp = jnp.pad(x_nchw, ((0, 0), (0, Cp - C), (0, 0), (0, 0))).reshape(N, Cp, HW)
    x2 = xp.reshape(NB, NT, Cp, HW).transpose(0, 2, 1, 3).reshape(NB, Cp, NT * HW)

    # VMEM footprint: pipelined operands are double buffered (x2), scratch is single,
    # plus an allowance for live f32 intermediates (x0/res/h/acc + taps), 25% slack.
    act_blk = Cp * NT * HW * 4
    resident = (w1.size + w2.size) * cdt.itemsize + (b1.size + b2.size + masks.size) * 4
    scratch = Cp * W_TOT * 4 + 9 * Cp * NT * HW * cdt.itemsize
    need = 2 * (2 * act_blk + resident) + scratch + 8 * act_blk
    try:
        vmem_cap = int(pltpu.get_tpu_info().vmem_capacity_bytes)  # 128 MiB v5e/v6e, 64 MiB v7x
    except Exception:
        vmem_cap = 64 * 1024 * 1024                               # conservative fallback
    vmem_limit = int(min(max(int(need * 1.25), 16 * 1024 * 1024), int(vmem_cap * 0.8)))

    grid_spec = pltpu.PrefetchScalarGridSpec(
        num_scalar_prefetch=0,
        grid=(NB,),
        in_specs=[
            pl.BlockSpec((1, Cp, NT * HW), lambda g: (g, 0, 0)),     # NT images / step
            pl.BlockSpec((nb, Cp, 9 * Cp), lambda g: (0, 0, 0)),     # weights: resident
            pl.BlockSpec((nb, Cp, 1), lambda g: (0, 0, 0)),
            pl.BlockSpec((nb, Cp, 9 * Cp), lambda g: (0, 0, 0)),
            pl.BlockSpec((nb, Cp, 1), lambda g: (0, 0, 0)),
            pl.BlockSpec((9, HW), lambda g: (0, 0)),                 # dx!=0 boundary masks
        ],
        out_specs=pl.BlockSpec((1, Cp, NT * HW), lambda g: (g, 0, 0)),
        scratch_shapes=[
            pltpu.VMEM((Cp, W_TOT), jnp.float32),                    # shift buffer
            pltpu.VMEM((9 * Cp, NT * HW), compute_dtype),            # im2col buffer
        ],
    )
    out = pl.pallas_call(
        _make_group_kernel(nb, Cp, H, W, M, NT, compute_dtype),
        out_shape=jax.ShapeDtypeStruct((NB, Cp, NT * HW), x_nchw.dtype),
        grid_spec=grid_spec,
        compiler_params=pltpu.CompilerParams(
            dimension_semantics=("parallel",),
            vmem_limit_bytes=vmem_limit,
        ),
    )(x2, w1, b1, w2, b2, masks)

    out = out.reshape(NB, Cp, NT, HW).transpose(0, 2, 1, 3).reshape(N, Cp, H, W)
    return out[:, :C]


# ----------------------- pure-JAX reference (for validation) -----------------------

def _conv3x3_ref(x, w, b):
    y = jax.lax.conv_general_dilated(
        x, w, window_strides=(1, 1), padding="SAME",
        dimension_numbers=("NCHW", "HWIO", "NCHW"))
    return y + b[None, :, None, None]


def residual_group_ref(x, block_params):
    res = x
    for (w1, b1, w2, b2) in block_params:
        h = jnp.maximum(_conv3x3_ref(res, w1, b1), 0.0)
        res = _conv3x3_ref(h, w2, b2) + res
    return res + x


# ---------------------------------- setup ----------------------------------

def init_params(key, n_resblocks, n_feat):
    params = []
    for _ in range(n_resblocks):
        key, k1, k2, k3, k4 = jax.random.split(key, 5)
        w1 = jax.random.normal(k1, (3, 3, n_feat, n_feat), jnp.float32) * 0.1
        b1 = jax.random.normal(k2, (n_feat,), jnp.float32) * 0.01
        w2 = jax.random.normal(k3, (3, 3, n_feat, n_feat), jnp.float32) * 0.1
        b2 = jax.random.normal(k4, (n_feat,), jnp.float32) * 0.01
        params.append((w1, b1, w2, b2))
    return params


if __name__ == "__main__":
    n_resblocks = 2
    n_feat = 4
    N, H, W = 2, 16, 16

    key = jax.random.PRNGKey(0)
    key, kx = jax.random.split(key)
    x = jax.random.normal(kx, (N, n_feat, H, W), jnp.float32)  # NCHW, like PyTorch
    params = init_params(key, n_resblocks, n_feat)

    ref = jax.block_until_ready(residual_group_ref(x, params))

    # f32 MXU operands (default) — strict check
    out = jax.block_until_ready(residual_group(x, params))
    assert out.shape == x.shape
    err = float(jnp.max(jnp.abs(out - ref)))
    assert err < 1e-3, f"f32 mismatch vs reference: {err}"

    # bf16 MXU operands + bf16 im2col scratch, f32 accumulation — loose check
    out_bf16 = jax.block_until_ready(
        residual_group(x, params, compute_dtype=jnp.bfloat16))
    err_bf16 = float(jnp.max(jnp.abs(out_bf16 - ref)))
    assert err_bf16 < 0.5, f"bf16 mismatch vs reference: {err_bf16}"

    print("KERNEL_OK")
</pallas_src>

<mosaic_0001>
module attributes {stable_mosaic.version = 11 : i64} {
  func.func @kernel(%arg0: i32, %arg1: memref<1x8x512xf32, #tpu.memory_space<vmem>>, %arg2: memref<2x8x72xf32, #tpu.memory_space<vmem>>, %arg3: memref<2x8x1xf32, #tpu.memory_space<vmem>>, %arg4: memref<2x8x72xf32, #tpu.memory_space<vmem>>, %arg5: memref<2x8x1xf32, #tpu.memory_space<vmem>>, %arg6: memref<9x256xf32, #tpu.memory_space<vmem>>, %arg7: memref<1x8x512xf32, #tpu.memory_space<vmem>>, %arg8: memref<8x896xf32, #tpu.memory_space<vmem>>, %arg9: memref<72x512xf32, #tpu.memory_space<vmem>>) attributes {dimension_semantics = [#tpu.dimension_semantics<parallel>], iteration_bounds = array<i64: 1>, scalar_prefetch = 0 : i64, scratch_operands = 2 : i64, tpu.core_type = #tpu.core_type<tc>, window_params = [{transform_indices = @transform_0, window_bounds = array<i64: 1, 8, 512>}, {pipeline_mode = #tpu.pipeline_mode<synchronous>, transform_indices = @transform_1, window_bounds = array<i64: 2, 8, 72>}, {pipeline_mode = #tpu.pipeline_mode<synchronous>, transform_indices = @transform_2, window_bounds = array<i64: 2, 8, 1>}, {pipeline_mode = #tpu.pipeline_mode<synchronous>, transform_indices = @transform_3, window_bounds = array<i64: 2, 8, 72>}, {pipeline_mode = #tpu.pipeline_mode<synchronous>, transform_indices = @transform_4, window_bounds = array<i64: 2, 8, 1>}, {pipeline_mode = #tpu.pipeline_mode<synchronous>, transform_indices = @transform_5, window_bounds = array<i64: 9, 256>}, {transform_indices = @transform_6, window_bounds = array<i64: 1, 8, 512>}]} {
    %cst = arith.constant 0.000000e+00 : f32
    %0 = vector.broadcast %cst : f32 to vector<8x128xf32>
    %c0 = arith.constant 0 : index
    %c0_0 = arith.constant 0 : index
    %1 = vector.load %arg8[%c0, %c0_0] : memref<8x896xf32, #tpu.memory_space<vmem>>, vector<8x128xf32>
    tpu.vector_store %arg8[%c0, %c0_0], %0 {strides = array<i32>} : memref<8x896xf32, #tpu.memory_space<vmem>>, vector<8x128xf32>,
    %c0_1 = arith.constant 0 : index
    %c384 = arith.constant 384 : index
    %2 = vector.load %arg8[%c0_1, %c384] : memref<8x896xf32, #tpu.memory_space<vmem>>, vector<8x128xf32>
    tpu.vector_store %arg8[%c0_1, %c384], %0 {strides = array<i32>} : memref<8x896xf32, #tpu.memory_space<vmem>>, vector<8x128xf32>,
    %c0_2 = arith.constant 0 : index
    %c768 = arith.constant 768 : index
    %3 = vector.load %arg8[%c0_2, %c768] : memref<8x896xf32, #tpu.memory_space<vmem>>, vector<8x128xf32>
    tpu.vector_store %arg8[%c0_2, %c768], %0 {strides = array<i32>} : memref<8x896xf32, #tpu.memory_space<vmem>>, vector<8x128xf32>,
    %c0_3 = arith.constant 0 : index
    %c0_4 = arith.constant 0 : index
    %4 = vector.load %arg6[%c0_3, %c0_4] : memref<9x256xf32, #tpu.memory_space<vmem>>, vector<9x256xf32>
    %c0_5 = arith.constant 0 : index
    %c0_6 = arith.constant 0 : index
    %c0_7 = arith.constant 0 : index
    %5 = vector.load %arg1[%c0_5, %c0_6, %c0_7] : memref<1x8x512xf32, #tpu.memory_space<vmem>>, vector<1x8x512xf32>
    %6 = vector.shape_cast %5 : vector<1x8x512xf32> to vector<8x512xf32>
    %c0_8 = arith.constant 0 : index
    %c0_9 = arith.constant 0 : index
    %c0_10 = arith.constant 0 : index
    %7 = vector.load %arg2[%c0_8, %c0_9, %c0_10] : memref<2x8x72xf32, #tpu.memory_space<vmem>>, vector<1x8x72xf32>
    %8 = vector.shape_cast %7 : vector<1x8x72xf32> to vector<8x72xf32>
    %c0_11 = arith.constant 0 : index
    %c0_12 = arith.constant 0 : index
    %c0_13 = arith.constant 0 : index
    %9 = vector.load %arg3[%c0_11, %c0_12, %c0_13] : memref<2x8x1xf32, #tpu.memory_space<vmem>>, vector<1x8x1xf32>
    %10 = vector.shape_cast %9 : vector<1x8x1xf32> to vector<8x1xf32>
    %11 = vector.extract_strided_slice %6 {offsets = [0, 0], sizes = [8, 256], strides = [1, 1]} : vector<8x512xf32> to vector<8x256xf32>
    %c0_14 = arith.constant 0 : index
    %c128 = arith.constant 128 : index
    %12 = vector.load %arg8[%c0_14, %c128] : memref<8x896xf32, #tpu.memory_space<vmem>>, vector<8x256xf32>
    tpu.vector_store %arg8[%c0_14, %c128], %11 {strides = array<i32>} : memref<8x896xf32, #tpu.memory_space<vmem>>, vector<8x256xf32>,
    %13 = vector.extract_strided_slice %6 {offsets = [0, 256], sizes = [8, 256], strides = [1, 1]} : vector<8x512xf32> to vector<8x256xf32>
    %c0_15 = arith.constant 0 : index
    %c512 = arith.constant 512 : index
    %14 = vector.load %arg8[%c0_15, %c512] : memref<8x896xf32, #tpu.memory_space<vmem>>, vector<8x256xf32>
    tpu.vector_store %arg8[%c0_15, %c512], %13 {strides = array<i32>} : memref<8x896xf32, #tpu.memory_space<vmem>>, vector<8x256xf32>,
    %c32 = arith.constant 32 : index
    %c0_16 = arith.constant 0 : index
    %15 = vector.load %arg9[%c32, %c0_16] : memref<72x512xf32, #tpu.memory_space<vmem>>, vector<8x512xf32>
    tpu.vector_store %arg9[%c32, %c0_16], %6 {strides = array<i32>} : memref<72x512xf32, #tpu.memory_space<vmem>>, vector<8x512xf32>,
    %c0_17 = arith.constant 0 : index
    %c111 = arith.constant 111 : index
    %16 = vector.load %arg8[%c0_17, %c111] : memref<8x896xf32, #tpu.memory_space<vmem>>, vector<8x256xf32>
    %17 = vector.extract_strided_slice %4 {offsets = [0, 0], sizes = [1, 256], strides = [1, 1]} : vector<9x256xf32> to vector<1x256xf32>
    %18 = vector.broadcast %17 : vector<1x256xf32> to vector<8x256xf32>
    %19 = arith.mulf %16, %18 : vector<8x256xf32>
    %c0_18 = arith.constant 0 : index
    %c0_19 = arith.constant 0 : index
    %20 = vector.load %arg9[%c0_18, %c0_19] : memref<72x512xf32, #tpu.memory_space<vmem>>, vector<8x256xf32>
    tpu.vector_store %arg9[%c0_18, %c0_19], %19 {strides = array<i32>} : memref<72x512xf32, #tpu.memory_space<vmem>>, vector<8x256xf32>,
    %c0_20 = arith.constant 0 : index
    %c495 = arith.constant 495 : index
    %21 = vector.load %arg8[%c0_20, %c495] : memref<8x896xf32, #tpu.memory_space<vmem>>, vector<8x256xf32>
    %22 = vector.extract_strided_slice %4 {offsets = [0, 0], sizes = [1, 256], strides = [1, 1]} : vector<9x256xf32> to vector<1x256xf32>
    %23 = vector.broadcast %22 : vector<1x256xf32> to vector<8x256xf32>
    %24 = arith.mulf %21, %23 : vector<8x256xf32>
    %c0_21 = arith.constant 0 : index
    %c256 = arith.constant 256 : index
    %25 = vector.load %arg9[%c0_21, %c256] : memref<72x512xf32, #tpu.memory_space<vmem>>, vector<8x256xf32>
    tpu.vector_store %arg9[%c0_21, %c256], %24 {strides = array<i32>} : memref<72x512xf32, #tpu.memory_space<vmem>>, vector<8x256xf32>,
    %c0_22 = arith.constant 0 : index
    %c112 = arith.constant 112 : index
    %26 = vector.load %arg8[%c0_22, %c112] : memref<8x896xf32, #tpu.memory_space<vmem>>, vector<8x256xf32>
    %c8 = arith.constant 8 : index
    %c0_23 = arith.constant 0 : index
    %27 = vector.load %arg9[%c8, %c0_23] : memref<72x512xf32, #tpu.memory_space<vmem>>, vector<8x256xf32>
    tpu.vector_store %arg9[%c8, %c0_23], %26 {strides = array<i32>} : memref<72x512xf32, #tpu.memory_space<vmem>>, vector<8x256xf32>,
    %c0_24 = arith.constant 0 : index
    %c496 = arith.constant 496 : index
    %28 = vector.load %arg8[%c0_24, %c496] : memref<8x896xf32, #tpu.memory_space<vmem>>, vector<8x256xf32>
    %c8_25 = arith.constant 8 : index
    %c256_26 = arith.constant 256 : index
    %29 = vector.load %arg9[%c8_25, %c256_26] : memref<72x512xf32, #tpu.memory_space<vmem>>, vector<8x256xf32>
    tpu.vector_store %arg9[%c8_25, %c256_26], %28 {strides = array<i32>} : memref<72x512xf32, #tpu.memory_space<vmem>>, vector<8x256xf32>,
    %c0_27 = arith.constant 0 : index
    %c113 = arith.constant 113 : index
    %30 = vector.load %arg8[%c0_27, %c113] : memref<8x896xf32, #tpu.memory_space<vmem>>, vector<8x256xf32>
    %31 = vector.extract_strided_slice %4 {offsets = [2, 0], sizes = [1, 256], strides = [1, 1]} : vector<9x256xf32> to vector<1x256xf32>
    %32 = vector.broadcast %31 : vector<1x256xf32> to vector<8x256xf32>
    %33 = arith.mulf %30, %32 : vector<8x256xf32>
    %c16 = arith.constant 16 : index
    %c0_28 = arith.constant 0 : index
    %34 = vector.load %arg9[%c16, %c0_28] : memref<72x512xf32, #tpu.memory_space<vmem>>, vector<8x256xf32>
    tpu.vector_store %arg9[%c16, %c0_28], %33 {strides = array<i32>} : memref<72x512xf32, #tpu.memory_space<vmem>>, vector<8x256xf32>,
    %c0_29 = arith.constant 0 : index
    %c497 = arith.constant 497 : index
    %35 = vector.load %arg8[%c0_29, %c497] : memref<8x896xf32, #tpu.memory_space<vmem>>, vector<8x256xf32>
    %36 = vector.extract_strided_slice %4 {offsets = [2, 0], sizes = [1, 256], strides = [1, 1]} : vector<9x256xf32> to vector<1x256xf32>
    %37 = vector.broadcast %36 : vector<1x256xf32> to vector<8x256xf32>
    %38 = arith.mulf %35, %37 : vector<8x256xf32>
    %c16_30 = arith.constant 16 : index
    %c256_31 = arith.constant 256 : index
    %39 = vector.load %arg9[%c16_30, %c256_31] : memref<72x512xf32, #tpu.memory_space<vmem>>, vector<8x256xf32>
    tpu.vector_store %arg9[%c16_30, %c256_31], %38 {strides = array<i32>} : memref<72x512xf32, #tpu.memory_space<vmem>>, vector<8x256xf32>,
    %c0_32 = arith.constant 0 : index
    %c127 = arith.constant 127 : index
    %40 = vector.load %arg8[%c0_32, %c127] : memref<8x896xf32, #tpu.memory_space<vmem>>, vector<8x256xf32>
    %41 = vector.extract_strided_slice %4 {offsets = [3, 0], sizes = [1, 256], strides = [1, 1]} : vector<9x256xf32> to vector<1x256xf32>
    %42 = vector.broadcast %41 : vector<1x256xf32> to vector<8x256xf32>
    %43 = arith.mulf %40, %42 : vector<8x256xf32>
    %c24 = arith.constant 24 : index
    %c0_33 = arith.constant 0 : index
    %44 = vector.load %arg9[%c24, %c0_33] : memref<72x512xf32, #tpu.memory_space<vmem>>, vector<8x256xf32>
    tpu.vector_store %arg9[%c24, %c0_33], %43 {strides = array<i32>} : memref<72x512xf32, #tpu.memory_space<vmem>>, vector<8x256xf32>,
    %c0_34 = arith.constant 0 : index
    %c511 = arith.constant 511 : index
    %45 = vector.load %arg8[%c0_34, %c511] : memref<8x896xf32, #tpu.memory_space<vmem>>, vector<8x256xf32>
    %46 = vector.extract_strided_slice %4 {offsets = [3, 0], sizes = [1, 256], strides = [1, 1]} : vector<9x256xf32> to vector<1x256xf32>
    %47 = vector.broadcast %46 : vector<1x256xf32> to vector<8x256xf32>
    %48 = arith.mulf %45, %47 : vector<8x256xf32>
    %c24_35 = arith.constant 24 : index
    %c256_36 = arith.constant 256 : index
    %49 = vector.load %arg9[%c24_35, %c256_36] : memref<72x512xf32, #tpu.memory_space<vmem>>, vector<8x256xf32>
    tpu.vector_store %arg9[%c24_35, %c256_36], %48 {strides = array<i32>} : memref<72x512xf32, #tpu.memory_space<vmem>>, vector<8x256xf32>,
    %c0_37 = arith.constant 0 : index
    %c129 = arith.constant 129 : index
    %50 = vector.load %arg8[%c0_37, %c129] : memref<8x896xf32, #tpu.memory_space<vmem>>, vector<8x256xf32>
    %51 = vector.extract_strided_slice %4 {offsets = [5, 0], sizes = [1, 256], strides = [1, 1]} : vector<9x256xf32> to vector<1x256xf32>
    %52 = vector.broadcast %51 : vector<1x256xf32> to vector<8x256xf32>
    %53 = arith.mulf %50, %52 : vector<8x256xf32>
    %c40 = arith.constant 40 : index
    %c0_38 = arith.constant 0 : index
    %54 = vector.load %arg9[%c40, %c0_38] : memref<72x512xf32, #tpu.memory_space<vmem>>, vector<8x256xf32>
    tpu.vector_store %arg9[%c40, %c0_38], %53 {strides = array<i32>} : memref<72x512xf32, #tpu.memory_space<vmem>>, vector<8x256xf32>,
    %c0_39 = arith.constant 0 : index
    %c513 = arith.constant 513 : index
    %55 = vector.load %arg8[%c0_39, %c513] : memref<8x896xf32, #tpu.memory_space<vmem>>, vector<8x256xf32>
    %56 = vector.extract_strided_slice %4 {offsets = [5, 0], sizes = [1, 256], strides = [1, 1]} : vector<9x256xf32> to vector<1x256xf32>
    %57 = vector.broadcast %56 : vector<1x256xf32> to vector<8x256xf32>
    %58 = arith.mulf %55, %57 : vector<8x256xf32>
    %c40_40 = arith.constant 40 : index
    %c256_41 = arith.constant 256 : index
    %59 = vector.load %arg9[%c40_40, %c256_41] : memref<72x512xf32, #tpu.memory_space<vmem>>, vector<8x256xf32>
    tpu.vector_store %arg9[%c40_40, %c256_41], %58 {strides = array<i32>} : memref<72x512xf32, #tpu.memory_space<vmem>>, vector<8x256xf32>,
    %c0_42 = arith.constant 0 : index
    %c143 = arith.constant 143 : index
    %60 = vector.load %arg8[%c0_42, %c143] : memref<8x896xf32, #tpu.memory_space<vmem>>, vector<8x256xf32>
    %61 = vector.extract_strided_slice %4 {offsets = [6, 0], sizes = [1, 256], strides = [1, 1]} : vector<9x256xf32> to vector<1x256xf32>
    %62 = vector.broadcast %61 : vector<1x256xf32> to vector<8x256xf32>
    %63 = arith.mulf %60, %62 : vector<8x256xf32>
    %c48 = arith.constant 48 : index
    %c0_43 = arith.constant 0 : index
    %64 = vector.load %arg9[%c48, %c0_43] : memref<72x512xf32, #tpu.memory_space<vmem>>, vector<8x256xf32>
    tpu.vector_store %arg9[%c48, %c0_43], %63 {strides = array<i32>} : memref<72x512xf32, #tpu.memory_space<vmem>>, vector<8x256xf32>,
    %c0_44 = arith.constant 0 : index
    %c527 = arith.constant 527 : index
    %65 = vector.load %arg8[%c0_44, %c527] : memref<8x896xf32, #tpu.memory_space<vmem>>, vector<8x256xf32>
    %66 = vector.extract_strided_slice %4 {offsets = [6, 0], sizes = [1, 256], strides = [1, 1]} : vector<9x256xf32> to vector<1x256xf32>
    %67 = vector.broadcast %66 : vector<1x256xf32> to vector<8x256xf32>
    %68 = arith.mulf %65, %67 : vector<8x256xf32>
    %c48_45 = arith.constant 48 : index
    %c256_46 = arith.constant 256 : index
    %69 = vector.load %arg9[%c48_45, %c256_46] : memref<72x512xf32, #tpu.memory_space<vmem>>, vector<8x256xf32>
    tpu.vector_store %arg9[%c48_45, %c256_46], %68 {strides = array<i32>} : memref<72x512xf32, #tpu.memory_space<vmem>>, vector<8x256xf32>,
    %c0_47 = arith.constant 0 : index
    %c144 = arith.constant 144 : index
    %70 = vector.load %arg8[%c0_47, %c144] : memref<8x896xf32, #tpu.memory_space<vmem>>, vector<8x256xf32>
    %c56 = arith.constant 56 : index
    %c0_48 = arith.constant 0 : index
    %71 = vector.load %arg9[%c56, %c0_48] : memref<72x512xf32, #tpu.memory_space<vmem>>, vector<8x256xf32>
    tpu.vector_store %arg9[%c56, %c0_48], %70 {strides = array<i32>} : memref<72x512xf32, #tpu.memory_space<vmem>>, vector<8x256xf32>,
    %c0_49 = arith.constant 0 : index
    %c528 = arith.constant 528 : index
    %72 = vector.load %arg8[%c0_49, %c528] : memref<8x896xf32, #tpu.memory_space<vmem>>, vector<8x256xf32>
    %c56_50 = arith.constant 56 : index
    %c256_51 = arith.constant 256 : index
    %73 = vector.load %arg9[%c56_50, %c256_51] : memref<72x512xf32, #tpu.memory_space<vmem>>, vector<8x256xf32>
    tpu.vector_store %arg9[%c56_50, %c256_51], %72 {strides = array<i32>} : memref<72x512xf32, #tpu.memory_space<vmem>>, vector<8x256xf32>,
    %c0_52 = arith.constant 0 : index
    %c145 = arith.constant 145 : index
    %74 = vector.load %arg8[%c0_52, %c145] : memref<8x896xf32, #tpu.memory_space<vmem>>, vector<8x256xf32>
    %75 = vector.extract_strided_slice %4 {offsets = [8, 0], sizes = [1, 256], strides = [1, 1]} : vector<9x256xf32> to vector<1x256xf32>
    %76 = vector.broadcast %75 : vector<1x256xf32> to vector<8x256xf32>
    %77 = arith.mulf %74, %76 : vector<8x256xf32>
    %c64 = arith.constant 64 : index
    %c0_53 = arith.constant 0 : index
    %78 = vector.load %arg9[%c64, %c0_53] : memref<72x512xf32, #tpu.memory_space<vmem>>, vector<8x256xf32>
    tpu.vector_store %arg9[%c64, %c0_53], %77 {strides = array<i32>} : memref<72x512xf32, #tpu.memory_space<vmem>>, vector<8x256xf32>,
    %c0_54 = arith.constant 0 : index
    %c529 = arith.constant 529 : index
    %79 = vector.load %arg8[%c0_54, %c529] : memref<8x896xf32, #tpu.memory_space<vmem>>, vector<8x256xf32>
    %80 = vector.extract_strided_slice %4 {offsets = [8, 0], sizes = [1, 256], strides = [1, 1]} : vector<9x256xf32> to vector<1x256xf32>
    %81 = vector.broadcast %80 : vector<1x256xf32> to vector<8x256xf32>
    %82 = arith.mulf %79, %81 : vector<8x256xf32>
    %c64_55 = arith.constant 64 : index
    %c256_56 = arith.constant 256 : index
    %83 = vector.load %arg9[%c64_55, %c256_56] : memref<72x512xf32, #tpu.memory_space<vmem>>, vector<8x256xf32>
    tpu.vector_store %arg9[%c64_55, %c256_56], %82 {strides = array<i32>} : memref<72x512xf32, #tpu.memory_space<vmem>>, vector<8x256xf32>,
    %c0_57 = arith.constant 0 : index
    %c0_58 = arith.constant 0 : index
    %84 = vector.load %arg9[%c0_57, %c0_58] : memref<72x512xf32, #tpu.memory_space<vmem>>, vector<72x512xf32>
    %cst_59 = arith.constant dense<0.000000e+00> : vector<8x512xf32>
    %85 = tpu.matmul %8, %84, %cst_59 {dimension_numbers = #tpu.dot_dimension_numbers<[1], [0], [0], [1], [0, 0, 1, 1], [], []>} : vector<8x72xf32>, vector<72x512xf32>, vector<8x512xf32> -> vector<8x512xf32>
    %86 = vector.broadcast %10 : vector<8x1xf32> to vector<8x512xf32>
    %87 = arith.addf %85, %86 : vector<8x512xf32>
    %cst_60 = arith.constant 0.000000e+00 : f32
    %88 = vector.broadcast %cst_60 : f32 to vector<8x512xf32>
    %89 = arith.maximumf %87, %88 : vector<8x512xf32>
    %c0_61 = arith.constant 0 : index
    %c0_62 = arith.constant 0 : index
    %c0_63 = arith.constant 0 : index
    %90 = vector.load %arg4[%c0_61, %c0_62, %c0_63] : memref<2x8x72xf32, #tpu.memory_space<vmem>>, vector<1x8x72xf32>
    %91 = vector.shape_cast %90 : vector<1x8x72xf32> to vector<8x72xf32>
    %c0_64 = arith.constant 0 : index
    %c0_65 = arith.constant 0 : index
    %c0_66 = arith.constant 0 : index
    %92 = vector.load %arg5[%c0_64, %c0_65, %c0_66] : memref<2x8x1xf32, #tpu.memory_space<vmem>>, vector<1x8x1xf32>
    %93 = vector.shape_cast %92 : vector<1x8x1xf32> to vector<8x1xf32>
    %94 = vector.extract_strided_slice %89 {offsets = [0, 0], sizes = [8, 256], strides = [1, 1]} : vector<8x512xf32> to vector<8x256xf32>
    %c0_67 = arith.constant 0 : index
    %c128_68 = arith.constant 128 : index
    %95 = vector.load %arg8[%c0_67, %c128_68] : memref<8x896xf32, #tpu.memory_space<vmem>>, vector<8x256xf32>
    tpu.vector_store %arg8[%c0_67, %c128_68], %94 {strides = array<i32>} : memref<8x896xf32, #tpu.memory_space<vmem>>, vector<8x256xf32>,
    %96 = vector.extract_strided_slice %89 {offsets = [0, 256], sizes = [8, 256], strides = [1, 1]} : vector<8x512xf32> to vector<8x256xf32>
    %c0_69 = arith.constant 0 : index
    %c512_70 = arith.constant 512 : index
    %97 = vector.load %arg8[%c0_69, %c512_70] : memref<8x896xf32, #tpu.memory_space<vmem>>, vector<8x256xf32>
    tpu.vector_store %arg8[%c0_69, %c512_70], %96 {strides = array<i32>} : memref<8x896xf32, #tpu.memory_space<vmem>>, vector<8x256xf32>,
    %c32_71 = arith.constant 32 : index
    %c0_72 = arith.constant 0 : index
    %98 = vector.load %arg9[%c32_71, %c0_72] : memref<72x512xf32, #tpu.memory_space<vmem>>, vector<8x512xf32>
    tpu.vector_store %arg9[%c32_71, %c0_72], %89 {strides = array<i32>} : memref<72x512xf32, #tpu.memory_space<vmem>>, vector<8x512xf32>,
    %c0_73 = arith.constant 0 : index
    %c111_74 = arith.constant 111 : index
    %99 = vector.load %arg8[%c0_73, %c111_74] : memref<8x896xf32, #tpu.memory_space<vmem>>, vector<8x256xf32>
    %100 = vector.extract_strided_slice %4 {offsets = [0, 0], sizes = [1, 256], strides = [1, 1]} : vector<9x256xf32> to vector<1x256xf32>
    %101 = vector.broadcast %100 : vector<1x256xf32> to vector<8x256xf32>
    %102 = arith.mulf %99, %101 : vector<8x256xf32>
    %c0_75 = arith.constant 0 : index
    %c0_76 = arith.constant 0 : index
    %103 = vector.load %arg9[%c0_75, %c0_76] : memref<72x512xf32, #tpu.memory_space<vmem>>, vector<8x256xf32>
    tpu.vector_store %arg9[%c0_75, %c0_76], %102 {strides = array<i32>} : memref<72x512xf32, #tpu.memory_space<vmem>>, vector<8x256xf32>,
    %c0_77 = arith.constant 0 : index
    %c495_78 = arith.constant 495 : index
    %104 = vector.load %arg8[%c0_77, %c495_78] : memref<8x896xf32, #tpu.memory_space<vmem>>, vector<8x256xf32>
    %105 = vector.extract_strided_slice %4 {offsets = [0, 0], sizes = [1, 256], strides = [1, 1]} : vector<9x256xf32> to vector<1x256xf32>
    %106 = vector.broadcast %105 : vector<1x256xf32> to vector<8x256xf32>
    %107 = arith.mulf %104, %106 : vector<8x256xf32>
    %c0_79 = arith.constant 0 : index
    %c256_80 = arith.constant 256 : index
    %108 = vector.load %arg9[%c0_79, %c256_80] : memref<72x512xf32, #tpu.memory_space<vmem>>, vector<8x256xf32>
    tpu.vector_store %arg9[%c0_79, %c256_80], %107 {strides = array<i32>} : memref<72x512xf32, #tpu.memory_space<vmem>>, vector<8x256xf32>,
    %c0_81 = arith.constant 0 : index
    %c112_82 = arith.constant 112 : index
    %109 = vector.load %arg8[%c0_81, %c112_82] : memref<8x896xf32, #tpu.memory_space<vmem>>, vector<8x256xf32>
    %c8_83 = arith.constant 8 : index
    %c0_84 = arith.constant 0 : index
    %110 = vector.load %arg9[%c8_83, %c0_84] : memref<72x512xf32, #tpu.memory_space<vmem>>, vector<8x256xf32>
    tpu.vector_store %arg9[%c8_83, %c0_84], %109 {strides = array<i32>} : memref<72x512xf32, #tpu.memory_space<vmem>>, vector<8x256xf32>,
    %c0_85 = arith.constant 0 : index
    %c496_86 = arith.constant 496 : index
    %111 = vector.load %arg8[%c0_85, %c496_86] : memref<8x896xf32, #tpu.memory_space<vmem>>, vector<8x256xf32>
    %c8_87 = arith.constant 8 : index
    %c256_88 = arith.constant 256 : index
    %112 = vector.load %arg9[%c8_87, %c256_88] : memref<72x512xf32, #tpu.memory_space<vmem>>, vector<8x256xf32>
    tpu.vector_store %arg9[%c8_87, %c256_88], %111 {strides = array<i32>} : memref<72x512xf32, #tpu.memory_space<vmem>>, vector<8x256xf32>,
    %c0_89 = arith.constant 0 : index
    %c113_90 = arith.constant 113 : index
    %113 = vector.load %arg8[%c0_89, %c113_90] : memref<8x896xf32, #tpu.memory_space<vmem>>, vector<8x256xf32>
    %114 = vector.extract_strided_slice %4 {offsets = [2, 0], sizes = [1, 256], strides = [1, 1]} : vector<9x256xf32> to vector<1x256xf32>
    %115 = vector.broadcast %114 : vector<1x256xf32> to vector<8x256xf32>
    %116 = arith.mulf %113, %115 : vector<8x256xf32>
    %c16_91 = arith.constant 16 : index
    %c0_92 = arith.constant 0 : index
    %117 = vector.load %arg9[%c16_91, %c0_92] : memref<72x512xf32, #tpu.memory_space<vmem>>, vector<8x256xf32>
    tpu.vector_store %arg9[%c16_91, %c0_92], %116 {strides = array<i32>} : memref<72x512xf32, #tpu.memory_space<vmem>>, vector<8x256xf32>,
    %c0_93 = arith.constant 0 : index
    %c497_94 = arith.constant 497 : index
    %118 = vector.load %arg8[%c0_93, %c497_94] : memref<8x896xf32, #tpu.memory_space<vmem>>, vector<8x256xf32>
    %119 = vector.extract_strided_slice %4 {offsets = [2, 0], sizes = [1, 256], strides = [1, 1]} : vector<9x256xf32> to vector<1x256xf32>
    %120 = vector.broadcast %119 : vector<1x256xf32> to vector<8x256xf32>
    %121 = arith.mulf %118, %120 : vector<8x256xf32>
    %c16_95 = arith.constant 16 : index
    %c256_96 = arith.constant 256 : index
    %122 = vector.load %arg9[%c16_95, %c256_96] : memref<72x512xf32, #tpu.memory_space<vmem>>, vector<8x256xf32>
    tpu.vector_store %arg9[%c16_95, %c256_96], %121 {strides = array<i32>} : memref<72x512xf32, #tpu.memory_space<vmem>>, vector<8x256xf32>,
    %c0_97 = arith.constant 0 : index
    %c127_98 = arith.constant 127 : index
    %123 = vector.load %arg8[%c0_97, %c127_98] : memref<8x896xf32, #tpu.memory_space<vmem>>, vector<8x256xf32>
    %124 = vector.extract_strided_slice %4 {offsets = [3, 0], sizes = [1, 256], strides = [1, 1]} : vector<9x256xf32> to vector<1x256xf32>
    %125 = vector.broadcast %124 : vector<1x256xf32> to vector<8x256xf32>
    %126 = arith.mulf %123, %125 : vector<8x256xf32>
    %c24_99 = arith.constant 24 : index
    %c0_100 = arith.constant 0 : index
    %127 = vector.load %arg9[%c24_99, %c0_100] : memref<72x512xf32, #tpu.memory_space<vmem>>, vector<8x256xf32>
    tpu.vector_store %arg9[%c24_99, %c0_100], %126 {strides = array<i32>} : memref<72x512xf32, #tpu.memory_space<vmem>>, vector<8x256xf32>,
    %c0_101 = arith.constant 0 : index
    %c511_102 = arith.constant 511 : index
    %128 = vector.load %arg8[%c0_101, %c511_102] : memref<8x896xf32, #tpu.memory_space<vmem>>, vector<8x256xf32>
    %129 = vector.extract_strided_slice %4 {offsets = [3, 0], sizes = [1, 256], strides = [1, 1]} : vector<9x256xf32> to vector<1x256xf32>
    %130 = vector.broadcast %129 : vector<1x256xf32> to vector<8x256xf32>
    %131 = arith.mulf %128, %130 : vector<8x256xf32>
    %c24_103 = arith.constant 24 : index
    %c256_104 = arith.constant 256 : index
    %132 = vector.load %arg9[%c24_103, %c256_104] : memref<72x512xf32, #tpu.memory_space<vmem>>, vector<8x256xf32>
    tpu.vector_store %arg9[%c24_103, %c256_104], %131 {strides = array<i32>} : memref<72x512xf32, #tpu.memory_space<vmem>>, vector<8x256xf32>,
    %c0_105 = arith.constant 0 : index
    %c129_106 = arith.constant 129 : index
    %133 = vector.load %arg8[%c0_105, %c129_106] : memref<8x896xf32, #tpu.memory_space<vmem>>, vector<8x256xf32>
    %134 = vector.extract_strided_slice %4 {offsets = [5, 0], sizes = [1, 256], strides = [1, 1]} : vector<9x256xf32> to vector<1x256xf32>
    %135 = vector.broadcast %134 : vector<1x256xf32> to vector<8x256xf32>
    %136 = arith.mulf %133, %135 : vector<8x256xf32>
    %c40_107 = arith.constant 40 : index
    %c0_108 = arith.constant 0 : index
    %137 = vector.load %arg9[%c40_107, %c0_108] : memref<72x512xf32, #tpu.memory_space<vmem>>, vector<8x256xf32>
    tpu.vector_store %arg9[%c40_107, %c0_108], %136 {strides = array<i32>} : memref<72x512xf32, #tpu.memory_space<vmem>>, vector<8x256xf32>,
    %c0_109 = arith.constant 0 : index
    %c513_110 = arith.constant 513 : index
    %138 = vector.load %arg8[%c0_109, %c513_110] : memref<8x896xf32, #tpu.memory_space<vmem>>, vector<8x256xf32>
    %139 = vector.extract_strided_slice %4 {offsets = [5, 0], sizes = [1, 256], strides = [1, 1]} : vector<9x256xf32> to vector<1x256xf32>
    %140 = vector.broadcast %139 : vector<1x256xf32> to vector<8x256xf32>
    %141 = arith.mulf %138, %140 : vector<8x256xf32>
    %c40_111 = arith.constant 40 : index
    %c256_112 = arith.constant 256 : index
    %142 = vector.load %arg9[%c40_111, %c256_112] : memref<72x512xf32, #tpu.memory_space<vmem>>, vector<8x256xf32>
    tpu.vector_store %arg9[%c40_111, %c256_112], %141 {strides = array<i32>} : memref<72x512xf32, #tpu.memory_space<vmem>>, vector<8x256xf32>,
    %c0_113 = arith.constant 0 : index
    %c143_114 = arith.constant 143 : index
    %143 = vector.load %arg8[%c0_113, %c143_114] : memref<8x896xf32, #tpu.memory_space<vmem>>, vector<8x256xf32>
    %144 = vector.extract_strided_slice %4 {offsets = [6, 0], sizes = [1, 256], strides = [1, 1]} : vector<9x256xf32> to vector<1x256xf32>
    %145 = vector.broadcast %144 : vector<1x256xf32> to vector<8x256xf32>
    %146 = arith.mulf %143, %145 : vector<8x256xf32>
    %c48_115 = arith.constant 48 : index
    %c0_116 = arith.constant 0 : index
    %147 = vector.load %arg9[%c48_115, %c0_116] : memref<72x512xf32, #tpu.memory_space<vmem>>, vector<8x256xf32>
    tpu.vector_store %arg9[%c48_115, %c0_116], %146 {strides = array<i32>} : memref<72x512xf32, #tpu.memory_space<vmem>>, vector<8x256xf32>,
    %c0_117 = arith.constant 0 : index
    %c527_118 = arith.constant 527 : index
    %148 = vector.load %arg8[%c0_117, %c527_118] : memref<8x896xf32, #tpu.memory_space<vmem>>, vector<8x256xf32>
    %149 = vector.extract_strided_slice %4 {offsets = [6, 0], sizes = [1, 256], strides = [1, 1]} : vector<9x256xf32> to vector<1x256xf32>
    %150 = vector.broadcast %149 : vector<1x256xf32> to vector<8x256xf32>
    %151 = arith.mulf %148, %150 : vector<8x256xf32>
    %c48_119 = arith.constant 48 : index
    %c256_120 = arith.constant 256 : index
    %152 = vector.load %arg9[%c48_119, %c256_120] : memref<72x512xf32, #tpu.memory_space<vmem>>, vector<8x256xf32>
    tpu.vector_store %arg9[%c48_119, %c256_120], %151 {strides = array<i32>} : memref<72x512xf32, #tpu.memory_space<vmem>>, vector<8x256xf32>,
    %c0_121 = arith.constant 0 : index
    %c144_122 = arith.constant 144 : index
    %153 = vector.load %arg8[%c0_121, %c144_122] : memref<8x896xf32, #tpu.memory_space<vmem>>, vector<8x256xf32>
    %c56_123 = arith.constant 56 : index
    %c0_124 = arith.constant 0 : index
    %154 = vector.load %arg9[%c56_123, %c0_124] : memref<72x512xf32, #tpu.memory_space<vmem>>, vector<8x256xf32>
    tpu.vector_store %arg9[%c56_123, %c0_124], %153 {strides = array<i32>} : memref<72x512xf32, #tpu.memory_space<vmem>>, vector<8x256xf32>,
    %c0_125 = arith.constant 0 : index
    %c528_126 = arith.constant 528 : index
    %155 = vector.load %arg8[%c0_125, %c528_126] : memref<8x896xf32, #tpu.memory_space<vmem>>, vector<8x256xf32>
    %c56_127 = arith.constant 56 : index
    %c256_128 = arith.constant 256 : index
    %156 = vector.load %arg9[%c56_127, %c256_128] : memref<72x512xf32, #tpu.memory_space<vmem>>, vector<8x256xf32>
    tpu.vector_store %arg9[%c56_127, %c256_128], %155 {strides = array<i32>} : memref<72x512xf32, #tpu.memory_space<vmem>>, vector<8x256xf32>,
    %c0_129 = arith.constant 0 : index
    %c145_130 = arith.constant 145 : index
    %157 = vector.load %arg8[%c0_129, %c145_130] : memref<8x896xf32, #tpu.memory_space<vmem>>, vector<8x256xf32>
    %158 = vector.extract_strided_slice %4 {offsets = [8, 0], sizes = [1, 256], strides = [1, 1]} : vector<9x256xf32> to vector<1x256xf32>
    %159 = vector.broadcast %158 : vector<1x256xf32> to vector<8x256xf32>
    %160 = arith.mulf %157, %159 : vector<8x256xf32>
    %c64_131 = arith.constant 64 : index
    %c0_132 = arith.constant 0 : index
    %161 = vector.load %arg9[%c64_131, %c0_132] : memref<72x512xf32, #tpu.memory_space<vmem>>, vector<8x256xf32>
    tpu.vector_store %arg9[%c64_131, %c0_132], %160 {strides = array<i32>} : memref<72x512xf32, #tpu.memory_space<vmem>>, vector<8x256xf32>,
    %c0_133 = arith.constant 0 : index
    %c529_134 = arith.constant 529 : index
    %162 = vector.load %arg8[%c0_133, %c529_134] : memref<8x896xf32, #tpu.memory_space<vmem>>, vector<8x256xf32>
    %163 = vector.extract_strided_slice %4 {offsets = [8, 0], sizes = [1, 256], strides = [1, 1]} : vector<9x256xf32> to vector<1x256xf32>
    %164 = vector.broadcast %163 : vector<1x256xf32> to vector<8x256xf32>
    %165 = arith.mulf %162, %164 : vector<8x256xf32>
    %c64_135 = arith.constant 64 : index
    %c256_136 = arith.constant 256 : index
    %166 = vector.load %arg9[%c64_135, %c256_136] : memref<72x512xf32, #tpu.memory_space<vmem>>, vector<8x256xf32>
    tpu.vector_store %arg9[%c64_135, %c256_136], %165 {strides = array<i32>} : memref<72x512xf32, #tpu.memory_space<vmem>>, vector<8x256xf32>,
    %c0_137 = arith.constant 0 : index
    %c0_138 = arith.constant 0 : index
    %167 = vector.load %arg9[%c0_137, %c0_138] : memref<72x512xf32, #tpu.memory_space<vmem>>, vector<72x512xf32>
    %cst_139 = arith.constant dense<0.000000e+00> : vector<8x512xf32>
    %168 = tpu.matmul %91, %167, %cst_139 {dimension_numbers = #tpu.dot_dimension_numbers<[1], [0], [0], [1], [0, 0, 1, 1], [], []>} : vector<8x72xf32>, vector<72x512xf32>, vector<8x512xf32> -> vector<8x512xf32>
    %169 = vector.broadcast %93 : vector<8x1xf32> to vector<8x512xf32>
    %170 = arith.addf %168, %169 : vector<8x512xf32>
    %171 = arith.addf %170, %6 : vector<8x512xf32>
    %c1 = arith.constant 1 : index
    %c0_140 = arith.constant 0 : index
    %c0_141 = arith.constant 0 : index
    %172 = vector.load %arg2[%c1, %c0_140, %c0_141] : memref<2x8x72xf32, #tpu.memory_space<vmem>>, vector<1x8x72xf32>
    %173 = vector.shape_cast %172 : vector<1x8x72xf32> to vector<8x72xf32>
    %c1_142 = arith.constant 1 : index
    %c0_143 = arith.constant 0 : index
    %c0_144 = arith.constant 0 : index
    %174 = vector.load %arg3[%c1_142, %c0_143, %c0_144] : memref<2x8x1xf32, #tpu.memory_space<vmem>>, vector<1x8x1xf32>
    %175 = vector.shape_cast %174 : vector<1x8x1xf32> to vector<8x1xf32>
    %176 = vector.extract_strided_slice %171 {offsets = [0, 0], sizes = [8, 256], strides = [1, 1]} : vector<8x512xf32> to vector<8x256xf32>
    %c0_145 = arith.constant 0 : index
    %c128_146 = arith.constant 128 : index
    %177 = vector.load %arg8[%c0_145, %c128_146] : memref<8x896xf32, #tpu.memory_space<vmem>>, vector<8x256xf32>
    tpu.vector_store %arg8[%c0_145, %c128_146], %176 {strides = array<i32>} : memref<8x896xf32, #tpu.memory_space<vmem>>, vector<8x256xf32>,
    %178 = vector.extract_strided_slice %171 {offsets = [0, 256], sizes = [8, 256], strides = [1, 1]} : vector<8x512xf32> to vector<8x256xf32>
    %c0_147 = arith.constant 0 : index
    %c512_148 = arith.constant 512 : index
    %179 = vector.load %arg8[%c0_147, %c512_148] : memref<8x896xf32, #tpu.memory_space<vmem>>, vector<8x256xf32>
    tpu.vector_store %arg8[%c0_147, %c512_148], %178 {strides = array<i32>} : memref<8x896xf32, #tpu.memory_space<vmem>>, vector<8x256xf32>,
    %c32_149 = arith.constant 32 : index
    %c0_150 = arith.constant 0 : index
    %180 = vector.load %arg9[%c32_149, %c0_150] : memref<72x512xf32, #tpu.memory_space<vmem>>, vector<8x512xf32>
    tpu.vector_store %arg9[%c32_149, %c0_150], %171 {strides = array<i32>} : memref<72x512xf32, #tpu.memory_space<vmem>>, vector<8x512xf32>,
    %c0_151 = arith.constant 0 : index
    %c111_152 = arith.constant 111 : index
    %181 = vector.load %arg8[%c0_151, %c111_152] : memref<8x896xf32, #tpu.memory_space<vmem>>, vector<8x256xf32>
    %182 = vector.extract_strided_slice %4 {offsets = [0, 0], sizes = [1, 256], strides = [1, 1]} : vector<9x256xf32> to vector<1x256xf32>
    %183 = vector.broadcast %182 : vector<1x256xf32> to vector<8x256xf32>
    %184 = arith.mulf %181, %183 : vector<8x256xf32>
    %c0_153 = arith.constant 0 : index
    %c0_154 = arith.constant 0 : index
    %185 = vector.load %arg9[%c0_153, %c0_154] : memref<72x512xf32, #tpu.memory_space<vmem>>, vector<8x256xf32>
    tpu.vector_store %arg9[%c0_153, %c0_154], %184 {strides = array<i32>} : memref<72x512xf32, #tpu.memory_space<vmem>>, vector<8x256xf32>,
    %c0_155 = arith.constant 0 : index
    %c495_156 = arith.constant 495 : index
    %186 = vector.load %arg8[%c0_155, %c495_156] : memref<8x896xf32, #tpu.memory_space<vmem>>, vector<8x256xf32>
    %187 = vector.extract_strided_slice %4 {offsets = [0, 0], sizes = [1, 256], strides = [1, 1]} : vector<9x256xf32> to vector<1x256xf32>
    %188 = vector.broadcast %187 : vector<1x256xf32> to vector<8x256xf32>
    %189 = arith.mulf %186, %188 : vector<8x256xf32>
    %c0_157 = arith.constant 0 : index
    %c256_158 = arith.constant 256 : index
    %190 = vector.load %arg9[%c0_157, %c256_158] : memref<72x512xf32, #tpu.memory_space<vmem>>, vector<8x256xf32>
    tpu.vector_store %arg9[%c0_157, %c256_158], %189 {strides = array<i32>} : memref<72x512xf32, #tpu.memory_space<vmem>>, vector<8x256xf32>,
    %c0_159 = arith.constant 0 : index
    %c112_160 = arith.constant 112 : index
    %191 = vector.load %arg8[%c0_159, %c112_160] : memref<8x896xf32, #tpu.memory_space<vmem>>, vector<8x256xf32>
    %c8_161 = arith.constant 8 : index
    %c0_162 = arith.constant 0 : index
    %192 = vector.load %arg9[%c8_161, %c0_162] : memref<72x512xf32, #tpu.memory_space<vmem>>, vector<8x256xf32>
    tpu.vector_store %arg9[%c8_161, %c0_162], %191 {strides = array<i32>} : memref<72x512xf32, #tpu.memory_space<vmem>>, vector<8x256xf32>,
    %c0_163 = arith.constant 0 : index
    %c496_164 = arith.constant 496 : index
    %193 = vector.load %arg8[%c0_163, %c496_164] : memref<8x896xf32, #tpu.memory_space<vmem>>, vector<8x256xf32>
    %c8_165 = arith.constant 8 : index
    %c256_166 = arith.constant 256 : index
    %194 = vector.load %arg9[%c8_165, %c256_166] : memref<72x512xf32, #tpu.memory_space<vmem>>, vector<8x256xf32>
    tpu.vector_store %arg9[%c8_165, %c256_166], %193 {strides = array<i32>} : memref<72x512xf32, #tpu.memory_space<vmem>>, vector<8x256xf32>,
    %c0_167 = arith.constant 0 : index
    %c113_168 = arith.constant 113 : index
    %195 = vector.load %arg8[%c0_167, %c113_168] : memref<8x896xf32, #tpu.memory_space<vmem>>, vector<8x256xf32>
    %196 = vector.extract_strided_slice %4 {offsets = [2, 0], sizes = [1, 256], strides = [1, 1]} : vector<9x256xf32> to vector<1x256xf32>
    %197 = vector.broadcast %196 : vector<1x256xf32> to vector<8x256xf32>
    %198 = arith.mulf %195, %197 : vector<8x256xf32>
    %c16_169 = arith.constant 16 : index
    %c0_170 = arith.constant 0 : index
    %199 = vector.load %arg9[%c16_169, %c0_170] : memref<72x512xf32, #tpu.memory_space<vmem>>, vector<8x256xf32>
    tpu.vector_store %arg9[%c16_169, %c0_170], %198 {strides = array<i32>} : memref<72x512xf32, #tpu.memory_space<vmem>>, vector<8x256xf32>,
    %c0_171 = arith.constant 0 : index
    %c497_172 = arith.constant 497 : index
    %200 = vector.load %arg8[%c0_171, %c497_172] : memref<8x896xf32, #tpu.memory_space<vmem>>, vector<8x256xf32>
    %201 = vector.extract_strided_slice %4 {offsets = [2, 0], sizes = [1, 256], strides = [1, 1]} : vector<9x256xf32> to vector<1x256xf32>
    %202 = vector.broadcast %201 : vector<1x256xf32> to vector<8x256xf32>
    %203 = arith.mulf %200, %202 : vector<8x256xf32>
    %c16_173 = arith.constant 16 : index
    %c256_174 = arith.constant 256 : index
    %204 = vector.load %arg9[%c16_173, %c256_174] : memref<72x512xf32, #tpu.memory_space<vmem>>, vector<8x256xf32>
    tpu.vector_store %arg9[%c16_173, %c256_174], %203 {strides = array<i32>} : memref<72x512xf32, #tpu.memory_space<vmem>>, vector<8x256xf32>,
    %c0_175 = arith.constant 0 : index
    %c127_176 = arith.constant 127 : index
    %205 = vector.load %arg8[%c0_175, %c127_176] : memref<8x896xf32, #tpu.memory_space<vmem>>, vector<8x256xf32>
    %206 = vector.extract_strided_slice %4 {offsets = [3, 0], sizes = [1, 256], strides = [1, 1]} : vector<9x256xf32> to vector<1x256xf32>
    %207 = vector.broadcast %206 : vector<1x256xf32> to vector<8x256xf32>
    %208 = arith.mulf %205, %207 : vector<8x256xf32>
    %c24_177 = arith.constant 24 : index
    %c0_178 = arith.constant 0 : index
    %209 = vector.load %arg9[%c24_177, %c0_178] : memref<72x512xf32, #tpu.memory_space<vmem>>, vector<8x256xf32>
    tpu.vector_store %arg9[%c24_177, %c0_178], %208 {strides = array<i32>} : memref<72x512xf32, #tpu.memory_space<vmem>>, vector<8x256xf32>,
    %c0_179 = arith.constant 0 : index
    %c511_180 = arith.constant 511 : index
    %210 = vector.load %arg8[%c0_179, %c511_180] : memref<8x896xf32, #tpu.memory_space<vmem>>, vector<8x256xf32>
    %211 = vector.extract_strided_slice %4 {offsets = [3, 0], sizes = [1, 256], strides = [1, 1]} : vector<9x256xf32> to vector<1x256xf32>
    %212 = vector.broadcast %211 : vector<1x256xf32> to vector<8x256xf32>
    %213 = arith.mulf %210, %212 : vector<8x256xf32>
    %c24_181 = arith.constant 24 : index
    %c256_182 = arith.constant 256 : index
    %214 = vector.load %arg9[%c24_181, %c256_182] : memref<72x512xf32, #tpu.memory_space<vmem>>, vector<8x256xf32>
    tpu.vector_store %arg9[%c24_181, %c256_182], %213 {strides = array<i32>} : memref<72x512xf32, #tpu.memory_space<vmem>>, vector<8x256xf32>,
    %c0_183 = arith.constant 0 : index
    %c129_184 = arith.constant 129 : index
    %215 = vector.load %arg8[%c0_183, %c129_184] : memref<8x896xf32, #tpu.memory_space<vmem>>, vector<8x256xf32>
    %216 = vector.extract_strided_slice %4 {offsets = [5, 0], sizes = [1, 256], strides = [1, 1]} : vector<9x256xf32> to vector<1x256xf32>
    %217 = vector.broadcast %216 : vector<1x256xf32> to vector<8x256xf32>
    %218 = arith.mulf %215, %217 : vector<8x256xf32>
    %c40_185 = arith.constant 40 : index
    %c0_186 = arith.constant 0 : index
    %219 = vector.load %arg9[%c40_185, %c0_186] : memref<72x512xf32, #tpu.memory_space<vmem>>, vector<8x256xf32>
    tpu.vector_store %arg9[%c40_185, %c0_186], %218 {strides = array<i32>} : memref<72x512xf32, #tpu.memory_space<vmem>>, vector<8x256xf32>,
    %c0_187 = arith.constant 0 : index
    %c513_188 = arith.constant 513 : index
    %220 = vector.load %arg8[%c0_187, %c513_188] : memref<8x896xf32, #tpu.memory_space<vmem>>, vector<8x256xf32>
    %221 = vector.extract_strided_slice %4 {offsets = [5, 0], sizes = [1, 256], strides = [1, 1]} : vector<9x256xf32> to vector<1x256xf32>
    %222 = vector.broadcast %221 : vector<1x256xf32> to vector<8x256xf32>
    %223 = arith.mulf %220, %222 : vector<8x256xf32>
    %c40_189 = arith.constant 40 : index
    %c256_190 = arith.constant 256 : index
    %224 = vector.load %arg9[%c40_189, %c256_190] : memref<72x512xf32, #tpu.memory_space<vmem>>, vector<8x256xf32>
    tpu.vector_store %arg9[%c40_189, %c256_190], %223 {strides = array<i32>} : memref<72x512xf32, #tpu.memory_space<vmem>>, vector<8x256xf32>,
    %c0_191 = arith.constant 0 : index
    %c143_192 = arith.constant 143 : index
    %225 = vector.load %arg8[%c0_191, %c143_192] : memref<8x896xf32, #tpu.memory_space<vmem>>, vector<8x256xf32>
    %226 = vector.extract_strided_slice %4 {offsets = [6, 0], sizes = [1, 256], strides = [1, 1]} : vector<9x256xf32> to vector<1x256xf32>
    %227 = vector.broadcast %226 : vector<1x256xf32> to vector<8x256xf32>
    %228 = arith.mulf %225, %227 : vector<8x256xf32>
    %c48_193 = arith.constant 48 : index
    %c0_194 = arith.constant 0 : index
    %229 = vector.load %arg9[%c48_193, %c0_194] : memref<72x512xf32, #tpu.memory_space<vmem>>, vector<8x256xf32>
    tpu.vector_store %arg9[%c48_193, %c0_194], %228 {strides = array<i32>} : memref<72x512xf32, #tpu.memory_space<vmem>>, vector<8x256xf32>,
    %c0_195 = arith.constant 0 : index
    %c527_196 = arith.constant 527 : index
    %230 = vector.load %arg8[%c0_195, %c527_196] : memref<8x896xf32, #tpu.memory_space<vmem>>, vector<8x256xf32>
    %231 = vector.extract_strided_slice %4 {offsets = [6, 0], sizes = [1, 256], strides = [1, 1]} : vector<9x256xf32> to vector<1x256xf32>
    %232 = vector.broadcast %231 : vector<1x256xf32> to vector<8x256xf32>
    %233 = arith.mulf %230, %232 : vector<8x256xf32>
    %c48_197 = arith.constant 48 : index
    %c256_198 = arith.constant 256 : index
    %234 = vector.load %arg9[%c48_197, %c256_198] : memref<72x512xf32, #tpu.memory_space<vmem>>, vector<8x256xf32>
    tpu.vector_store %arg9[%c48_197, %c256_198], %233 {strides = array<i32>} : memref<72x512xf32, #tpu.memory_space<vmem>>, vector<8x256xf32>,
    %c0_199 = arith.constant 0 : index
    %c144_200 = arith.constant 144 : index
    %235 = vector.load %arg8[%c0_199, %c144_200] : memref<8x896xf32, #tpu.memory_space<vmem>>, vector<8x256xf32>
    %c56_201 = arith.constant 56 : index
    %c0_202 = arith.constant 0 : index
    %236 = vector.load %arg9[%c56_201, %c0_202] : memref<72x512xf32, #tpu.memory_space<vmem>>, vector<8x256xf32>
    tpu.vector_store %arg9[%c56_201, %c0_202], %235 {strides = array<i32>} : memref<72x512xf32, #tpu.memory_space<vmem>>, vector<8x256xf32>,
    %c0_203 = arith.constant 0 : index
    %c528_204 = arith.constant 528 : index
    %237 = vector.load %arg8[%c0_203, %c528_204] : memref<8x896xf32, #tpu.memory_space<vmem>>, vector<8x256xf32>
    %c56_205 = arith.constant 56 : index
    %c256_206 = arith.constant 256 : index
    %238 = vector.load %arg9[%c56_205, %c256_206] : memref<72x512xf32, #tpu.memory_space<vmem>>, vector<8x256xf32>
    tpu.vector_store %arg9[%c56_205, %c256_206], %237 {strides = array<i32>} : memref<72x512xf32, #tpu.memory_space<vmem>>, vector<8x256xf32>,
    %c0_207 = arith.constant 0 : index
    %c145_208 = arith.constant 145 : index
    %239 = vector.load %arg8[%c0_207, %c145_208] : memref<8x896xf32, #tpu.memory_space<vmem>>, vector<8x256xf32>
    %240 = vector.extract_strided_slice %4 {offsets = [8, 0], sizes = [1, 256], strides = [1, 1]} : vector<9x256xf32> to vector<1x256xf32>
    %241 = vector.broadcast %240 : vector<1x256xf32> to vector<8x256xf32>
    %242 = arith.mulf %239, %241 : vector<8x256xf32>
    %c64_209 = arith.constant 64 : index
    %c0_210 = arith.constant 0 : index
    %243 = vector.load %arg9[%c64_209, %c0_210] : memref<72x512xf32, #tpu.memory_space<vmem>>, vector<8x256xf32>
    tpu.vector_store %arg9[%c64_209, %c0_210], %242 {strides = array<i32>} : memref<72x512xf32, #tpu.memory_space<vmem>>, vector<8x256xf32>,
    %c0_211 = arith.constant 0 : index
    %c529_212 = arith.constant 529 : index
    %244 = vector.load %arg8[%c0_211, %c529_212] : memref<8x896xf32, #tpu.memory_space<vmem>>, vector<8x256xf32>
    %245 = vector.extract_strided_slice %4 {offsets = [8, 0], sizes = [1, 256], strides = [1, 1]} : vector<9x256xf32> to vector<1x256xf32>
    %246 = vector.broadcast %245 : vector<1x256xf32> to vector<8x256xf32>
    %247 = arith.mulf %244, %246 : vector<8x256xf32>
    %c64_213 = arith.constant 64 : index
    %c256_214 = arith.constant 256 : index
    %248 = vector.load %arg9[%c64_213, %c256_214] : memref<72x512xf32, #tpu.memory_space<vmem>>, vector<8x256xf32>
    tpu.vector_store %arg9[%c64_213, %c256_214], %247 {strides = array<i32>} : memref<72x512xf32, #tpu.memory_space<vmem>>, vector<8x256xf32>,
    %c0_215 = arith.constant 0 : index
    %c0_216 = arith.constant 0 : index
    %249 = vector.load %arg9[%c0_215, %c0_216] : memref<72x512xf32, #tpu.memory_space<vmem>>, vector<72x512xf32>
    %cst_217 = arith.constant dense<0.000000e+00> : vector<8x512xf32>
    %250 = tpu.matmul %173, %249, %cst_217 {dimension_numbers = #tpu.dot_dimension_numbers<[1], [0], [0], [1], [0, 0, 1, 1], [], []>} : vector<8x72xf32>, vector<72x512xf32>, vector<8x512xf32> -> vector<8x512xf32>
    %251 = vector.broadcast %175 : vector<8x1xf32> to vector<8x512xf32>
    %252 = arith.addf %250, %251 : vector<8x512xf32>
    %cst_218 = arith.constant 0.000000e+00 : f32
    %253 = vector.broadcast %cst_218 : f32 to vector<8x512xf32>
    %254 = arith.maximumf %252, %253 : vector<8x512xf32>
    %c1_219 = arith.constant 1 : index
    %c0_220 = arith.constant 0 : index
    %c0_221 = arith.constant 0 : index
    %255 = vector.load %arg4[%c1_219, %c0_220, %c0_221] : memref<2x8x72xf32, #tpu.memory_space<vmem>>, vector<1x8x72xf32>
    %256 = vector.shape_cast %255 : vector<1x8x72xf32> to vector<8x72xf32>
    %c1_222 = arith.constant 1 : index
    %c0_223 = arith.constant 0 : index
    %c0_224 = arith.constant 0 : index
    %257 = vector.load %arg5[%c1_222, %c0_223, %c0_224] : memref<2x8x1xf32, #tpu.memory_space<vmem>>, vector<1x8x1xf32>
    %258 = vector.shape_cast %257 : vector<1x8x1xf32> to vector<8x1xf32>
    %259 = vector.extract_strided_slice %254 {offsets = [0, 0], sizes = [8, 256], strides = [1, 1]} : vector<8x512xf32> to vector<8x256xf32>
    %c0_225 = arith.constant 0 : index
    %c128_226 = arith.constant 128 : index
    %260 = vector.load %arg8[%c0_225, %c128_226] : memref<8x896xf32, #tpu.memory_space<vmem>>, vector<8x256xf32>
    tpu.vector_store %arg8[%c0_225, %c128_226], %259 {strides = array<i32>} : memref<8x896xf32, #tpu.memory_space<vmem>>, vector<8x256xf32>,
    %261 = vector.extract_strided_slice %254 {offsets = [0, 256], sizes = [8, 256], strides = [1, 1]} : vector<8x512xf32> to vector<8x256xf32>
    %c0_227 = arith.constant 0 : index
    %c512_228 = arith.constant 512 : index
    %262 = vector.load %arg8[%c0_227, %c512_228] : memref<8x896xf32, #tpu.memory_space<vmem>>, vector<8x256xf32>
    tpu.vector_store %arg8[%c0_227, %c512_228], %261 {strides = array<i32>} : memref<8x896xf32, #tpu.memory_space<vmem>>, vector<8x256xf32>,
    %c32_229 = arith.constant 32 : index
    %c0_230 = arith.constant 0 : index
    %263 = vector.load %arg9[%c32_229, %c0_230] : memref<72x512xf32, #tpu.memory_space<vmem>>, vector<8x512xf32>
    tpu.vector_store %arg9[%c32_229, %c0_230], %254 {strides = array<i32>} : memref<72x512xf32, #tpu.memory_space<vmem>>, vector<8x512xf32>,
    %c0_231 = arith.constant 0 : index
    %c111_232 = arith.constant 111 : index
    %264 = vector.load %arg8[%c0_231, %c111_232] : memref<8x896xf32, #tpu.memory_space<vmem>>, vector<8x256xf32>
    %265 = vector.extract_strided_slice %4 {offsets = [0, 0], sizes = [1, 256], strides = [1, 1]} : vector<9x256xf32> to vector<1x256xf32>
    %266 = vector.broadcast %265 : vector<1x256xf32> to vector<8x256xf32>
    %267 = arith.mulf %264, %266 : vector<8x256xf32>
    %c0_233 = arith.constant 0 : index
    %c0_234 = arith.constant 0 : index
    %268 = vector.load %arg9[%c0_233, %c0_234] : memref<72x512xf32, #tpu.memory_space<vmem>>, vector<8x256xf32>
    tpu.vector_store %arg9[%c0_233, %c0_234], %267 {strides = array<i32>} : memref<72x512xf32, #tpu.memory_space<vmem>>, vector<8x256xf32>,
    %c0_235 = arith.constant 0 : index
    %c495_236 = arith.constant 495 : index
    %269 = vector.load %arg8[%c0_235, %c495_236] : memref<8x896xf32, #tpu.memory_space<vmem>>, vector<8x256xf32>
    %270 = vector.extract_strided_slice %4 {offsets = [0, 0], sizes = [1, 256], strides = [1, 1]} : vector<9x256xf32> to vector<1x256xf32>
    %271 = vector.broadcast %270 : vector<1x256xf32> to vector<8x256xf32>
    %272 = arith.mulf %269, %271 : vector<8x256xf32>
    %c0_237 = arith.constant 0 : index
    %c256_238 = arith.constant 256 : index
    %273 = vector.load %arg9[%c0_237, %c256_238] : memref<72x512xf32, #tpu.memory_space<vmem>>, vector<8x256xf32>
    tpu.vector_store %arg9[%c0_237, %c256_238], %272 {strides = array<i32>} : memref<72x512xf32, #tpu.memory_space<vmem>>, vector<8x256xf32>,
    %c0_239 = arith.constant 0 : index
    %c112_240 = arith.constant 112 : index
    %274 = vector.load %arg8[%c0_239, %c112_240] : memref<8x896xf32, #tpu.memory_space<vmem>>, vector<8x256xf32>
    %c8_241 = arith.constant 8 : index
    %c0_242 = arith.constant 0 : index
    %275 = vector.load %arg9[%c8_241, %c0_242] : memref<72x512xf32, #tpu.memory_space<vmem>>, vector<8x256xf32>
    tpu.vector_store %arg9[%c8_241, %c0_242], %274 {strides = array<i32>} : memref<72x512xf32, #tpu.memory_space<vmem>>, vector<8x256xf32>,
    %c0_243 = arith.constant 0 : index
    %c496_244 = arith.constant 496 : index
    %276 = vector.load %arg8[%c0_243, %c496_244] : memref<8x896xf32, #tpu.memory_space<vmem>>, vector<8x256xf32>
    %c8_245 = arith.constant 8 : index
    %c256_246 = arith.constant 256 : index
    %277 = vector.load %arg9[%c8_245, %c256_246] : memref<72x512xf32, #tpu.memory_space<vmem>>, vector<8x256xf32>
    tpu.vector_store %arg9[%c8_245, %c256_246], %276 {strides = array<i32>} : memref<72x512xf32, #tpu.memory_space<vmem>>, vector<8x256xf32>,
    %c0_247 = arith.constant 0 : index
    %c113_248 = arith.constant 113 : index
    %278 = vector.load %arg8[%c0_247, %c113_248] : memref<8x896xf32, #tpu.memory_space<vmem>>, vector<8x256xf32>
    %279 = vector.extract_strided_slice %4 {offsets = [2, 0], sizes = [1, 256], strides = [1, 1]} : vector<9x256xf32> to vector<1x256xf32>
    %280 = vector.broadcast %279 : vector<1x256xf32> to vector<8x256xf32>
    %281 = arith.mulf %278, %280 : vector<8x256xf32>
    %c16_249 = arith.constant 16 : index
    %c0_250 = arith.constant 0 : index
    %282 = vector.load %arg9[%c16_249, %c0_250] : memref<72x512xf32, #tpu.memory_space<vmem>>, vector<8x256xf32>
    tpu.vector_store %arg9[%c16_249, %c0_250], %281 {strides = array<i32>} : memref<72x512xf32, #tpu.memory_space<vmem>>, vector<8x256xf32>,
    %c0_251 = arith.constant 0 : index
    %c497_252 = arith.constant 497 : index
    %283 = vector.load %arg8[%c0_251, %c497_252] : memref<8x896xf32, #tpu.memory_space<vmem>>, vector<8x256xf32>
    %284 = vector.extract_strided_slice %4 {offsets = [2, 0], sizes = [1, 256], strides = [1, 1]} : vector<9x256xf32> to vector<1x256xf32>
    %285 = vector.broadcast %284 : vector<1x256xf32> to vector<8x256xf32>
    %286 = arith.mulf %283, %285 : vector<8x256xf32>
    %c16_253 = arith.constant 16 : index
    %c256_254 = arith.constant 256 : index
    %287 = vector.load %arg9[%c16_253, %c256_254] : memref<72x512xf32, #tpu.memory_space<vmem>>, vector<8x256xf32>
    tpu.vector_store %arg9[%c16_253, %c256_254], %286 {strides = array<i32>} : memref<72x512xf32, #tpu.memory_space<vmem>>, vector<8x256xf32>,
    %c0_255 = arith.constant 0 : index
    %c127_256 = arith.constant 127 : index
    %288 = vector.load %arg8[%c0_255, %c127_256] : memref<8x896xf32, #tpu.memory_space<vmem>>, vector<8x256xf32>
    %289 = vector.extract_strided_slice %4 {offsets = [3, 0], sizes = [1, 256], strides = [1, 1]} : vector<9x256xf32> to vector<1x256xf32>
    %290 = vector.broadcast %289 : vector<1x256xf32> to vector<8x256xf32>
    %291 = arith.mulf %288, %290 : vector<8x256xf32>
    %c24_257 = arith.constant 24 : index
    %c0_258 = arith.constant 0 : index
    %292 = vector.load %arg9[%c24_257, %c0_258] : memref<72x512xf32, #tpu.memory_space<vmem>>, vector<8x256xf32>
    tpu.vector_store %arg9[%c24_257, %c0_258], %291 {strides = array<i32>} : memref<72x512xf32, #tpu.memory_space<vmem>>, vector<8x256xf32>,
    %c0_259 = arith.constant 0 : index
    %c511_260 = arith.constant 511 : index
    %293 = vector.load %arg8[%c0_259, %c511_260] : memref<8x896xf32, #tpu.memory_space<vmem>>, vector<8x256xf32>
    %294 = vector.extract_strided_slice %4 {offsets = [3, 0], sizes = [1, 256], strides = [1, 1]} : vector<9x256xf32> to vector<1x256xf32>
    %295 = vector.broadcast %294 : vector<1x256xf32> to vector<8x256xf32>
    %296 = arith.mulf %293, %295 : vector<8x256xf32>
    %c24_261 = arith.constant 24 : index
    %c256_262 = arith.constant 256 : index
    %297 = vector.load %arg9[%c24_261, %c256_262] : memref<72x512xf32, #tpu.memory_space<vmem>>, vector<8x256xf32>
    tpu.vector_store %arg9[%c24_261, %c256_262], %296 {strides = array<i32>} : memref<72x512xf32, #tpu.memory_space<vmem>>, vector<8x256xf32>,
    %c0_263 = arith.constant 0 : index
    %c129_264 = arith.constant 129 : index
    %298 = vector.load %arg8[%c0_263, %c129_264] : memref<8x896xf32, #tpu.memory_space<vmem>>, vector<8x256xf32>
    %299 = vector.extract_strided_slice %4 {offsets = [5, 0], sizes = [1, 256], strides = [1, 1]} : vector<9x256xf32> to vector<1x256xf32>
    %300 = vector.broadcast %299 : vector<1x256xf32> to vector<8x256xf32>
    %301 = arith.mulf %298, %300 : vector<8x256xf32>
    %c40_265 = arith.constant 40 : index
    %c0_266 = arith.constant 0 : index
    %302 = vector.load %arg9[%c40_265, %c0_266] : memref<72x512xf32, #tpu.memory_space<vmem>>, vector<8x256xf32>
    tpu.vector_store %arg9[%c40_265, %c0_266], %301 {strides = array<i32>} : memref<72x512xf32, #tpu.memory_space<vmem>>, vector<8x256xf32>,
    %c0_267 = arith.constant 0 : index
    %c513_268 = arith.constant 513 : index
    %303 = vector.load %arg8[%c0_267, %c513_268] : memref<8x896xf32, #tpu.memory_space<vmem>>, vector<8x256xf32>
    %304 = vector.extract_strided_slice %4 {offsets = [5, 0], sizes = [1, 256], strides = [1, 1]} : vector<9x256xf32> to vector<1x256xf32>
    %305 = vector.broadcast %304 : vector<1x256xf32> to vector<8x256xf32>
    %306 = arith.mulf %303, %305 : vector<8x256xf32>
    %c40_269 = arith.constant 40 : index
    %c256_270 = arith.constant 256 : index
    %307 = vector.load %arg9[%c40_269, %c256_270] : memref<72x512xf32, #tpu.memory_space<vmem>>, vector<8x256xf32>
    tpu.vector_store %arg9[%c40_269, %c256_270], %306 {strides = array<i32>} : memref<72x512xf32, #tpu.memory_space<vmem>>, vector<8x256xf32>,
    %c0_271 = arith.constant 0 : index
    %c143_272 = arith.constant 143 : index
    %308 = vector.load %arg8[%c0_271, %c143_272] : memref<8x896xf32, #tpu.memory_space<vmem>>, vector<8x256xf32>
    %309 = vector.extract_strided_slice %4 {offsets = [6, 0], sizes = [1, 256], strides = [1, 1]} : vector<9x256xf32> to vector<1x256xf32>
    %310 = vector.broadcast %309 : vector<1x256xf32> to vector<8x256xf32>
    %311 = arith.mulf %308, %310 : vector<8x256xf32>
    %c48_273 = arith.constant 48 : index
    %c0_274 = arith.constant 0 : index
    %312 = vector.load %arg9[%c48_273, %c0_274] : memref<72x512xf32, #tpu.memory_space<vmem>>, vector<8x256xf32>
    tpu.vector_store %arg9[%c48_273, %c0_274], %311 {strides = array<i32>} : memref<72x512xf32, #tpu.memory_space<vmem>>, vector<8x256xf32>,
    %c0_275 = arith.constant 0 : index
    %c527_276 = arith.constant 527 : index
    %313 = vector.load %arg8[%c0_275, %c527_276] : memref<8x896xf32, #tpu.memory_space<vmem>>, vector<8x256xf32>
    %314 = vector.extract_strided_slice %4 {offsets = [6, 0], sizes = [1, 256], strides = [1, 1]} : vector<9x256xf32> to vector<1x256xf32>
    %315 = vector.broadcast %314 : vector<1x256xf32> to vector<8x256xf32>
    %316 = arith.mulf %313, %315 : vector<8x256xf32>
    %c48_277 = arith.constant 48 : index
    %c256_278 = arith.constant 256 : index
    %317 = vector.load %arg9[%c48_277, %c256_278] : memref<72x512xf32, #tpu.memory_space<vmem>>, vector<8x256xf32>
    tpu.vector_store %arg9[%c48_277, %c256_278], %316 {strides = array<i32>} : memref<72x512xf32, #tpu.memory_space<vmem>>, vector<8x256xf32>,
    %c0_279 = arith.constant 0 : index
    %c144_280 = arith.constant 144 : index
    %318 = vector.load %arg8[%c0_279, %c144_280] : memref<8x896xf32, #tpu.memory_space<vmem>>, vector<8x256xf32>
    %c56_281 = arith.constant 56 : index
    %c0_282 = arith.constant 0 : index
    %319 = vector.load %arg9[%c56_281, %c0_282] : memref<72x512xf32, #tpu.memory_space<vmem>>, vector<8x256xf32>
    tpu.vector_store %arg9[%c56_281, %c0_282], %318 {strides = array<i32>} : memref<72x512xf32, #tpu.memory_space<vmem>>, vector<8x256xf32>,
    %c0_283 = arith.constant 0 : index
    %c528_284 = arith.constant 528 : index
    %320 = vector.load %arg8[%c0_283, %c528_284] : memref<8x896xf32, #tpu.memory_space<vmem>>, vector<8x256xf32>
    %c56_285 = arith.constant 56 : index
    %c256_286 = arith.constant 256 : index
    %321 = vector.load %arg9[%c56_285, %c256_286] : memref<72x512xf32, #tpu.memory_space<vmem>>, vector<8x256xf32>
    tpu.vector_store %arg9[%c56_285, %c256_286], %320 {strides = array<i32>} : memref<72x512xf32, #tpu.memory_space<vmem>>, vector<8x256xf32>,
    %c0_287 = arith.constant 0 : index
    %c145_288 = arith.constant 145 : index
    %322 = vector.load %arg8[%c0_287, %c145_288] : memref<8x896xf32, #tpu.memory_space<vmem>>, vector<8x256xf32>
    %323 = vector.extract_strided_slice %4 {offsets = [8, 0], sizes = [1, 256], strides = [1, 1]} : vector<9x256xf32> to vector<1x256xf32>
    %324 = vector.broadcast %323 : vector<1x256xf32> to vector<8x256xf32>
    %325 = arith.mulf %322, %324 : vector<8x256xf32>
    %c64_289 = arith.constant 64 : index
    %c0_290 = arith.constant 0 : index
    %326 = vector.load %arg9[%c64_289, %c0_290] : memref<72x512xf32, #tpu.memory_space<vmem>>, vector<8x256xf32>
    tpu.vector_store %arg9[%c64_289, %c0_290], %325 {strides = array<i32>} : memref<72x512xf32, #tpu.memory_space<vmem>>, vector<8x256xf32>,
    %c0_291 = arith.constant 0 : index
    %c529_292 = arith.constant 529 : index
    %327 = vector.load %arg8[%c0_291, %c529_292] : memref<8x896xf32, #tpu.memory_space<vmem>>, vector<8x256xf32>
    %328 = vector.extract_strided_slice %4 {offsets = [8, 0], sizes = [1, 256], strides = [1, 1]} : vector<9x256xf32> to vector<1x256xf32>
    %329 = vector.broadcast %328 : vector<1x256xf32> to vector<8x256xf32>
    %330 = arith.mulf %327, %329 : vector<8x256xf32>
    %c64_293 = arith.constant 64 : index
    %c256_294 = arith.constant 256 : index
    %331 = vector.load %arg9[%c64_293, %c256_294] : memref<72x512xf32, #tpu.memory_space<vmem>>, vector<8x256xf32>
    tpu.vector_store %arg9[%c64_293, %c256_294], %330 {strides = array<i32>} : memref<72x512xf32, #tpu.memory_space<vmem>>, vector<8x256xf32>,
    %c0_295 = arith.constant 0 : index
    %c0_296 = arith.constant 0 : index
    %332 = vector.load %arg9[%c0_295, %c0_296] : memref<72x512xf32, #tpu.memory_space<vmem>>, vector<72x512xf32>
    %cst_297 = arith.constant dense<0.000000e+00> : vector<8x512xf32>
    %333 = tpu.matmul %256, %332, %cst_297 {dimension_numbers = #tpu.dot_dimension_numbers<[1], [0], [0], [1], [0, 0, 1, 1], [], []>} : vector<8x72xf32>, vector<72x512xf32>, vector<8x512xf32> -> vector<8x512xf32>
    %334 = vector.broadcast %258 : vector<8x1xf32> to vector<8x512xf32>
    %335 = arith.addf %333, %334 : vector<8x512xf32>
    %336 = arith.addf %335, %171 : vector<8x512xf32>
    %337 = arith.addf %336, %6 : vector<8x512xf32>
    %c0_298 = arith.constant 0 : index
    %c0_299 = arith.constant 0 : index
    %c0_300 = arith.constant 0 : index
    %338 = vector.load %arg7[%c0_298, %c0_299, %c0_300] : memref<1x8x512xf32, #tpu.memory_space<vmem>>, vector<1x8x512xf32>
    %339 = vector.shape_cast %338 : vector<1x8x512xf32> to vector<8x512xf32>
    %340 = vector.shape_cast %337 : vector<8x512xf32> to vector<1x8x512xf32>
    tpu.vector_store %arg7[%c0_298, %c0_299, %c0_300], %340 {strides = array<i32>} : memref<1x8x512xf32, #tpu.memory_space<vmem>>, vector<1x8x512xf32>,
    return
  }
  func.func @transform_0(%arg0: i32) -> (i32, i32, i32) {
    %c0_i32 = arith.constant 0 : i32
    %c0_i32_0 = arith.constant 0 : i32
    %c0_i32_1 = arith.constant 0 : i32
    return %arg0, %c0_i32, %c0_i32_0 : i32, i32, i32
  }
  func.func @transform_1(%arg0: i32) -> (i32, i32, i32) {
    %c0_i32 = arith.constant 0 : i32
    %c0_i32_0 = arith.constant 0 : i32
    %c0_i32_1 = arith.constant 0 : i32
    %c0_i32_2 = arith.constant 0 : i32
    return %c0_i32, %c0_i32_0, %c0_i32_1 : i32, i32, i32
  }
  func.func @transform_2(%arg0: i32) -> (i32, i32, i32) {
    %c0_i32 = arith.constant 0 : i32
    %c0_i32_0 = arith.constant 0 : i32
    %c0_i32_1 = arith.constant 0 : i32
    %c0_i32_2 = arith.constant 0 : i32
    return %c0_i32, %c0_i32_0, %c0_i32_1 : i32, i32, i32
  }
  func.func @transform_3(%arg0: i32) -> (i32, i32, i32) {
    %c0_i32 = arith.constant 0 : i32
    %c0_i32_0 = arith.constant 0 : i32
    %c0_i32_1 = arith.constant 0 : i32
    %c0_i32_2 = arith.constant 0 : i32
    return %c0_i32, %c0_i32_0, %c0_i32_1 : i32, i32, i32
  }
  func.func @transform_4(%arg0: i32) -> (i32, i32, i32) {
    %c0_i32 = arith.constant 0 : i32
    %c0_i32_0 = arith.constant 0 : i32
    %c0_i32_1 = arith.constant 0 : i32
    %c0_i32_2 = arith.constant 0 : i32
    return %c0_i32, %c0_i32_0, %c0_i32_1 : i32, i32, i32
  }
  func.func @transform_5(%arg0: i32) -> (i32, i32) {
    %c0_i32 = arith.constant 0 : i32
    %c0_i32_0 = arith.constant 0 : i32
    %c0_i32_1 = arith.constant 0 : i32
    return %c0_i32, %c0_i32_0 : i32, i32
  }
  func.func @transform_6(%arg0: i32) -> (i32, i32, i32) {
    %c0_i32 = arith.constant 0 : i32
    %c0_i32_0 = arith.constant 0 : i32
    %c0_i32_1 = arith.constant 0 : i32
    return %arg0, %c0_i32, %c0_i32_0 : i32, i32, i32
  }
}

</mosaic_0001>

<llo_original>
// kernel: residual_group.1
$region0: #{residual_group.1}
  #allocation0 [shape = 'u32[]', space=smem, size = 0x4, offset = 0x4, fixed_abs, tag = 'smem constant byte address 0x4 - core index']
  #allocation1 [shape = 'u32[144,128]{1,0:T(1,128)}', space=vmem, size = 0x12000, scoped, tag = 'internal scratch']
  #allocation2 [shape = 'f32[8,896]{1,0:T(8,128)}', space=vmem, size = 0x7000, scoped, tag = 'scratch operand']
  #allocation3 [shape = 'f32[72,512]{1,0:T(8,128)}', space=vmem, size = 0x24000, scoped, tag = 'scratch operand']
  %s0 = inlined_call_operand.vmem [shape: f32[1,8,512], index: 0, kind: input, shape index: {}]
  %s1 = inlined_call_operand.vmem [shape: f32[2,8,72], index: 1, kind: input, shape index: {}]
  %s2 = inlined_call_operand.vmem [shape: f32[2,8,1], index: 2, kind: input, shape index: {}]
  %s3 = inlined_call_operand.vmem [shape: f32[2,8,72], index: 3, kind: input, shape index: {}]
  %s4 = inlined_call_operand.vmem [shape: f32[2,8,1], index: 4, kind: input, shape index: {}]
  %s5 = inlined_call_operand.vmem [shape: f32[9,256], index: 5, kind: input, shape index: {}]
  %s6 = inlined_call_operand.vmem [shape: f32[1,8,512], index: 6, kind: output, shape index: {}]
  %s7 = sld [smem:[#allocation0]]
  $region34: #{residual_group.1} parent=0
    _
  %s9 = ssub.s32 1, %s7
  %s10 = scalar_select 0, %s9, %s7
  // Predicated region
  $region2: #{residual_group.1} parent=0 // pred_check
    _
  $region3: #{residual_group.1} parent=0 // pred_check_branch
    %12 = sbr.rel (0) target = $region5
  $region4: #{residual_group.1} parent=0 // pred_region
    _
  $region5: #{residual_group.1} parent=0 // pred_fallthru
    _
  // Predicated region
  $region6: #{residual_group.1} parent=0 // pred_check
    _
  $region7: #{residual_group.1} parent=0 // pred_check_branch
    %14 = sbr.rel (0) target = $region9
  $region8: #{residual_group.1} parent=0 // pred_region
    _
  $region9: #{residual_group.1} parent=0 // pred_fallthru
    _
  // Predicated region
  $region10: #{residual_group.1} parent=0 // pred_check
    _
  $region11: #{residual_group.1} parent=0 // pred_check_branch
    %16 = sbr.rel (0) target = $region13
  $region12: #{residual_group.1} parent=0 // pred_region
    _
  $region13: #{residual_group.1} parent=0 // pred_fallthru
    _
  // Predicated region
  $region14: #{residual_group.1} parent=0 // pred_check
    _
  $region15: #{residual_group.1} parent=0 // pred_check_branch
    %18 = sbr.rel (0) target = $region17
  $region16: #{residual_group.1} parent=0 // pred_region
    _
  $region17: #{residual_group.1} parent=0 // pred_fallthru
    _
  // Predicated region
  $region18: #{residual_group.1} parent=0 // pred_check
    _
  $region19: #{residual_group.1} parent=0 // pred_check_branch
    %20 = sbr.rel (0) target = $region21
  $region20: #{residual_group.1} parent=0 // pred_region
    _
  $region21: #{residual_group.1} parent=0 // pred_fallthru
    _
  // Predicated region
  $region22: #{residual_group.1} parent=0 // pred_check
    _
  $region23: #{residual_group.1} parent=0 // pred_check_branch
    %22 = sbr.rel (0) target = $region25
  $region24: #{residual_group.1} parent=0 // pred_region
    _
  $region25: #{residual_group.1} parent=0 // pred_fallthru
    _
  %23 = vst [vmem:[#allocation2] sm:$0xff] 0.0
  %24 = vst [vmem:[#allocation2 + $0x18] sm:$0xff] 0.0
  %25 = vst [vmem:[#allocation2 + $0x30] sm:$0xff] 0.0
  %v26 = vld [vmem:[%s5] sm:$0xff]
  %v27 = vld [vmem:[%s5 + $0x8] sm:$0xff]
  %v28 = vld [vmem:[%s5 + $0x10] sm:$0x1]
  %v29 = vld [vmem:[%s5 + $0x18] sm:$0x1]
  %v30 = vld [vmem:[%s0] sm:$0xff]
  %v31 = vld [vmem:[%s0 + $0x8] sm:$0xff]
  %v32 = vld [vmem:[%s0 + $0x10] sm:$0xff]
  %v33 = vld [vmem:[%s0 + $0x18] sm:$0xff]
  %v34 = vld [vmem:[%s1] sm:$0xff]
  %v35 = vld [vmem:[%s2] sm:$0xff]
  %36 = vst [vmem:[#allocation2 + $0x8] sm:$0xff] %v30
  %37 = vst [vmem:[#allocation2 + $0x10] sm:$0xff] %v31
  %38 = vst [vmem:[#allocation2 + $0x20] sm:$0xff] %v32
  %39 = vst [vmem:[#allocation2 + $0x28] sm:$0xff] %v33
  %40 = vst [vmem:[#allocation3 + $0x80] sm:$0xff] %v30
  %41 = vst [vmem:[#allocation3 + $0x88] sm:$0xff] %v31
  %42 = vst [vmem:[#allocation3 + $0x90] sm:$0xff] %v32
  %43 = vst [vmem:[#allocation3 + $0x98] sm:$0xff] %v33
  %v44 = vld [vmem:[#allocation2] sm:$0xff]
  %v45 = vld [vmem:[#allocation2 + $0x8] sm:$0xff]
  %v46 = vld [vmem:[#allocation2 + $0x10] sm:$0xff]
  %v47 = vlaneseq
  %v48 = vshrl.u32 %v47, 7
  %v49 = vsub.s32 0, %v48
  %v50 = vrot.slane %v26, %v49
  %v51 = vlaneseq
  %v52 = vshrl.u32 %v51, 7
  %v53 = vsub.s32 0, %v52
  %v54 = vrot.slane %v27, %v53
  %57 = vrot.lane.b32.xlu0 %v50, 111
  %v58 = vpop.permute.xlu0 %57
  %59 = vrot.lane.b32.xlu0 %v54, 111
  %v60 = vpop.permute.xlu0 %59
  %vm61 = vcmask 908288
  %v62 = vsel %vm61, %v58, %v60
  %v66 = vmul.f32 %v44, %v58
  %v67 = vmul.f32 %v45, %v62
  %v68 = vmul.f32 %v46, %v60
  %72 = vrot.lane.b32.xlu0 %v66, 17
  %v73 = vpop.permute.xlu0 %72
  %74 = vrot.lane.b32.xlu0 %v67, 17
  %v75 = vpop.permute.xlu0 %74
  %76 = vrot.lane.b32.xlu0 %v68, 17
  %v77 = vpop.permute.xlu0 %76
  %vm78 = vcmask 138240
  %v79 = vsel %vm78, %v73, %v75
  %v80 = vsel %vm78, %v75, %v77
  %83 = vst [vmem:[#allocation3] sm:$0xff] %v79
  %84 = vst [vmem:[#allocation3 + $0x8] sm:$0xff] %v80
  %v85 = vld [vmem:[#allocation2 + $0x18] sm:$0xff]
  %v86 = vld [vmem:[#allocation2 + $0x20] sm:$0xff]
  %v87 = vld [vmem:[#allocation2 + $0x28] sm:$0xff]
  %v88 = vmul.f32 %v85, %v58
  %v89 = vmul.f32 %v86, %v62
  %v90 = vmul.f32 %v87, %v60
  %94 = vrot.lane.b32.xlu0 %v88, 17
  %v95 = vpop.permute.xlu0 %94
  %96 = vrot.lane.b32.xlu0 %v89, 17
  %v97 = vpop.permute.xlu0 %96
  %98 = vrot.lane.b32.xlu0 %v90, 17
  %v99 = vpop.permute.xlu0 %98
  %v100 = vsel %vm78, %v95, %v97
  %v101 = vsel %vm78, %v97, %v99
  %104 = vst [vmem:[#allocation3 + $0x10] sm:$0xff] %v100
  %105 = vst [vmem:[#allocation3 + $0x18] sm:$0xff] %v101
  %v106 = vld [vmem:[#allocation2] sm:$0xff]
  %v107 = vld [vmem:[#allocation2 + $0x8] sm:$0xff]
  %v108 = vld [vmem:[#allocation2 + $0x10] sm:$0xff]
  %112 = vrot.lane.b32.xlu0 %v106, 16
  %v113 = vpop.permute.xlu0 %112
  %114 = vrot.lane.b32.xlu0 %v107, 16
  %v115 = vpop.permute.xlu0 %114
  %116 = vrot.lane.b32.xlu0 %v108, 16
  %v117 = vpop.permute.xlu0 %116
  %vm118 = vcmask 130048
  %v119 = vsel %vm118, %v113, %v115
  %v120 = vsel %vm118, %v115, %v117
  %123 = vst [vmem:[#allocation3 + $0x20] sm:$0xff] %v119
  %124 = vst [vmem:[#allocation3 + $0x28] sm:$0xff] %v120
  %v125 = vld [vmem:[#allocation2 + $0x18] sm:$0xff]
  %v126 = vld [vmem:[#allocation2 + $0x20] sm:$0xff]
  %v127 = vld [vmem:[#allocation2 + $0x28] sm:$0xff]
  %131 = vrot.lane.b32.xlu0 %v125, 16
  %v132 = vpop.permute.xlu0 %131
  %133 = vrot.lane.b32.xlu0 %v126, 16
  %v134 = vpop.permute.xlu0 %133
  %135 = vrot.lane.b32.xlu0 %v127, 16
  %v136 = vpop.permute.xlu0 %135
  %v137 = vsel %vm118, %v132, %v134
  %v138 = vsel %vm118, %v134, %v136
  %141 = vst [vmem:[#allocation3 + $0x30] sm:$0xff] %v137
  %142 = vst [vmem:[#allocation3 + $0x38] sm:$0xff] %v138
  %v143 = vld [vmem:[#allocation2] sm:$0xff]
  %v144 = vld [vmem:[#allocation2 + $0x8] sm:$0xff]
  %v145 = vld [vmem:[#allocation2 + $0x10] sm:$0xff]
  %v146 = vlaneseq
  %v147 = vshrl.u32 %v146, 7
  %v148 = vsub.s32 2, %v147
  %v149 = vrot.slane %v26, %v148
  %v150 = vlaneseq
  %v151 = vshrl.u32 %v150, 7
  %v152 = vsub.s32 2, %v151
  %v153 = vrot.slane %v27, %v152
  %156 = vrot.lane.b32.xlu0 %v149, 113
  %v157 = vpop.permute.xlu0 %156
  %158 = vrot.lane.b32.xlu0 %v153, 113
  %v159 = vpop.permute.xlu0 %158
  %vm160 = vcmask 924672
  %v161 = vsel %vm160, %v157, %v159
  %v165 = vmul.f32 %v143, %v157
  %v166 = vmul.f32 %v144, %v161
  %v167 = vmul.f32 %v145, %v159
  %171 = vrot.lane.b32.xlu0 %v165, 15
  %v172 = vpop.permute.xlu0 %171
  %173 = vrot.lane.b32.xlu0 %v166, 15
  %v174 = vpop.permute.xlu0 %173
  %175 = vrot.lane.b32.xlu0 %v167, 15
  %v176 = vpop.permute.xlu0 %175
  %vm177 = vcmask 121856
  %v178 = vsel %vm177, %v172, %v174
  %v179 = vsel %vm177, %v174, %v176
  %182 = vst [vmem:[#allocation3 + $0x40] sm:$0xff] %v178
  %183 = vst [vmem:[#allocation3 + $0x48] sm:$0xff] %v179
  %v184 = vld [vmem:[#allocation2 + $0x18] sm:$0xff]
  %v185 = vld [vmem:[#allocation2 + $0x20] sm:$0xff]
  %v186 = vld [vmem:[#allocation2 + $0x28] sm:$0xff]
  %v187 = vmul.f32 %v184, %v157
  %v188 = vmul.f32 %v185, %v161
  %v189 = vmul.f32 %v186, %v159
  %193 = vrot.lane.b32.xlu0 %v187, 15
  %v194 = vpop.permute.xlu0 %193
  %195 = vrot.lane.b32.xlu0 %v188, 15
  %v196 = vpop.permute.xlu0 %195
  %197 = vrot.lane.b32.xlu0 %v189, 15
  %v198 = vpop.permute.xlu0 %197
  %v199 = vsel %vm177, %v194, %v196
  %v200 = vsel %vm177, %v196, %v198
  %203 = vst [vmem:[#allocation3 + $0x50] sm:$0xff] %v199
  %204 = vst [vmem:[#allocation3 + $0x58] sm:$0xff] %v200
  %v205 = vld [vmem:[#allocation2] sm:$0xff]
  %v206 = vld [vmem:[#allocation2 + $0x8] sm:$0xff]
  %v207 = vld [vmem:[#allocation2 + $0x10] sm:$0xff]
  %v208 = vlaneseq
  %v209 = vshrl.u32 %v208, 7
  %v210 = vsub.s32 3, %v209
  %v211 = vrot.slane %v26, %v210
  %v212 = vlaneseq
  %v213 = vshrl.u32 %v212, 7
  %v214 = vsub.s32 3, %v213
  %v215 = vrot.slane %v27, %v214
  %218 = vrot.lane.b32.xlu0 %v211, 127
  %v219 = vpop.permute.xlu0 %218
  %220 = vrot.lane.b32.xlu0 %v215, 127
  %v221 = vpop.permute.xlu0 %220
  %vm222 = vcmask 1039360
  %v223 = vsel %vm222, %v219, %v221
  %v227 = vmul.f32 %v205, %v219
  %v228 = vmul.f32 %v206, %v223
  %v229 = vmul.f32 %v207, %v221
  %233 = vrot.lane.b32.xlu0 %v227, 1
  %v234 = vpop.permute.xlu0 %233
  %235 = vrot.lane.b32.xlu0 %v228, 1
  %v236 = vpop.permute.xlu0 %235
  %237 = vrot.lane.b32.xlu0 %v229, 1
  %v238 = vpop.permute.xlu0 %237
  %vm239 = vcmask 7168
  %v240 = vsel %vm239, %v234, %v236
  %v241 = vsel %vm239, %v236, %v238
  %244 = vst [vmem:[#allocation3 + $0x60] sm:$0xff] %v240
  %245 = vst [vmem:[#allocation3 + $0x68] sm:$0xff] %v241
  %v246 = vld [vmem:[#allocation2 + $0x18] sm:$0xff]
  %v247 = vld [vmem:[#allocation2 + $0x20] sm:$0xff]
  %v248 = vld [vmem:[#allocation2 + $0x28] sm:$0xff]
  %v249 = vmul.f32 %v246, %v219
  %v250 = vmul.f32 %v247, %v223
  %v251 = vmul.f32 %v248, %v221
  %255 = vrot.lane.b32.xlu0 %v249, 1
  %v256 = vpop.permute.xlu0 %255
  %257 = vrot.lane.b32.xlu0 %v250, 1
  %v258 = vpop.permute.xlu0 %257
  %259 = vrot.lane.b32.xlu0 %v251, 1
  %v260 = vpop.permute.xlu0 %259
  %v261 = vsel %vm239, %v256, %v258
  %v262 = vsel %vm239, %v258, %v260
  %265 = vst [vmem:[#allocation3 + $0x70] sm:$0xff] %v261
  %266 = vst [vmem:[#allocation3 + $0x78] sm:$0xff] %v262
  %v267 = vld [vmem:[#allocation2 + $0x8] sm:$0xff]
  %v268 = vld [vmem:[#allocation2 + $0x10] sm:$0xff]
  %v269 = vld [vmem:[#allocation2 + $0x18] sm:$0xff]
  %v270 = vlaneseq
  %v271 = vshrl.u32 %v270, 7
  %v272 = vsub.s32 5, %v271
  %v273 = vrot.slane %v26, %v272
  %v274 = vlaneseq
  %v275 = vshrl.u32 %v274, 7
  %v276 = vsub.s32 5, %v275
  %v277 = vrot.slane %v27, %v276
  %280 = vrot.lane.b32.xlu0 %v273, 1
  %v281 = vpop.permute.xlu0 %280
  %282 = vrot.lane.b32.xlu0 %v277, 1
  %v283 = vpop.permute.xlu0 %282
  %v284 = vsel %vm239, %v281, %v283
  %v288 = vmul.f32 %v267, %v281
  %v289 = vmul.f32 %v268, %v284
  %v290 = vmul.f32 %v269, %v283
  %294 = vrot.lane.b32.xlu0 %v288, 127
  %v295 = vpop.permute.xlu0 %294
  %296 = vrot.lane.b32.xlu0 %v289, 127
  %v297 = vpop.permute.xlu0 %296
  %298 = vrot.lane.b32.xlu0 %v290, 127
  %v299 = vpop.permute.xlu0 %298
  %v300 = vsel %vm222, %v295, %v297
  %v301 = vsel %vm222, %v297, %v299
  %304 = vst [vmem:[#allocation3 + $0xa0] sm:$0xff] %v300
  %305 = vst [vmem:[#allocation3 + $0xa8] sm:$0xff] %v301
  %v306 = vld [vmem:[#allocation2 + $0x20] sm:$0xff]
  %v307 = vld [vmem:[#allocation2 + $0x28] sm:$0xff]
  %v308 = vld [vmem:[#allocation2 + $0x30] sm:$0xff]
  %v309 = vmul.f32 %v306, %v281
  %v310 = vmul.f32 %v307, %v284
  %v311 = vmul.f32 %v308, %v283
  %315 = vrot.lane.b32.xlu0 %v309, 127
  %v316 = vpop.permute.xlu0 %315
  %317 = vrot.lane.b32.xlu0 %v310, 127
  %v318 = vpop.permute.xlu0 %317
  %319 = vrot.lane.b32.xlu0 %v311, 127
  %v320 = vpop.permute.xlu0 %319
  %v321 = vsel %vm222, %v316, %v318
  %v322 = vsel %vm222, %v318, %v320
  %325 = vst [vmem:[#allocation3 + $0xb0] sm:$0xff] %v321
  %326 = vst [vmem:[#allocation3 + $0xb8] sm:$0xff] %v322
  %v327 = vld [vmem:[#allocation2 + $0x8] sm:$0xff]
  %v328 = vld [vmem:[#allocation2 + $0x10] sm:$0xff]
  %v329 = vld [vmem:[#allocation2 + $0x18] sm:$0xff]
  %v330 = vlaneseq
  %v331 = vshrl.u32 %v330, 7
  %v332 = vsub.s32 6, %v331
  %v333 = vrot.slane %v26, %v332
  %v334 = vlaneseq
  %v335 = vshrl.u32 %v334, 7
  %v336 = vsub.s32 6, %v335
  %v337 = vrot.slane %v27, %v336
  %340 = vrot.lane.b32.xlu0 %v333, 15
  %v341 = vpop.permute.xlu0 %340
  %342 = vrot.lane.b32.xlu0 %v337, 15
  %v343 = vpop.permute.xlu0 %342
  %v344 = vsel %vm177, %v341, %v343
  %v348 = vmul.f32 %v327, %v341
  %v349 = vmul.f32 %v328, %v344
  %v350 = vmul.f32 %v329, %v343
  %354 = vrot.lane.b32.xlu0 %v348, 113
  %v355 = vpop.permute.xlu0 %354
  %356 = vrot.lane.b32.xlu0 %v349, 113
  %v357 = vpop.permute.xlu0 %356
  %358 = vrot.lane.b32.xlu0 %v350, 113
  %v359 = vpop.permute.xlu0 %358
  %v360 = vsel %vm160, %v355, %v357
  %v361 = vsel %vm160, %v357, %v359
  %364 = vst [vmem:[#allocation3 + $0xc0] sm:$0xff] %v360
  %365 = vst [vmem:[#allocation3 + $0xc8] sm:$0xff] %v361
  %v366 = vld [vmem:[#allocation2 + $0x20] sm:$0xff]
  %v367 = vld [vmem:[#allocation2 + $0x28] sm:$0xff]
  %v368 = vld [vmem:[#allocation2 + $0x30] sm:$0xff]
  %v369 = vmul.f32 %v366, %v341
  %v370 = vmul.f32 %v367, %v344
  %v371 = vmul.f32 %v368, %v343
  %375 = vrot.lane.b32.xlu0 %v369, 113
  %v376 = vpop.permute.xlu0 %375
  %377 = vrot.lane.b32.xlu0 %v370, 113
  %v378 = vpop.permute.xlu0 %377
  %379 = vrot.lane.b32.xlu0 %v371, 113
  %v380 = vpop.permute.xlu0 %379
  %v381 = vsel %vm160, %v376, %v378
  %v382 = vsel %vm160, %v378, %v380
  %385 = vst [vmem:[#allocation3 + $0xd0] sm:$0xff] %v381
  %386 = vst [vmem:[#allocation3 + $0xd8] sm:$0xff] %v382
  %v387 = vld [vmem:[#allocation2 + $0x8] sm:$0xff]
  %v388 = vld [vmem:[#allocation2 + $0x10] sm:$0xff]
  %v389 = vld [vmem:[#allocation2 + $0x18] sm:$0xff]
  %393 = vrot.lane.b32.xlu0 %v387, 112
  %v394 = vpop.permute.xlu0 %393
  %395 = vrot.lane.b32.xlu0 %v388, 112
  %v396 = vpop.permute.xlu0 %395
  %397 = vrot.lane.b32.xlu0 %v389, 112
  %v398 = vpop.permute.xlu0 %397
  %vm399 = vcmask 916480
  %v400 = vsel %vm399, %v394, %v396
  %v401 = vsel %vm399, %v396, %v398
  %404 = vst [vmem:[#allocation3 + $0xe0] sm:$0xff] %v400
  %405 = vst [vmem:[#allocation3 + $0xe8] sm:$0xff] %v401
  %v406 = vld [vmem:[#allocation2 + $0x20] sm:$0xff]
  %v407 = vld [vmem:[#allocation2 + $0x28] sm:$0xff]
  %v408 = vld [vmem:[#allocation2 + $0x30] sm:$0xff]
  %412 = vrot.lane.b32.xlu0 %v406, 112
  %v413 = vpop.permute.xlu0 %412
  %414 = vrot.lane.b32.xlu0 %v407, 112
  %v415 = vpop.permute.xlu0 %414
  %416 = vrot.lane.b32.xlu0 %v408, 112
  %v417 = vpop.permute.xlu0 %416
  %v418 = vsel %vm399, %v413, %v415
  %v419 = vsel %vm399, %v415, %v417
  %422 = vst [vmem:[#allocation3 + $0xf0] sm:$0xff] %v418
  %423 = vst [vmem:[#allocation3 + $0xf8] sm:$0xff] %v419
  %v424 = vld [vmem:[#allocation2 + $0x8] sm:$0xff]
  %v425 = vld [vmem:[#allocation2 + $0x10] sm:$0xff]
  %v426 = vld [vmem:[#allocation2 + $0x18] sm:$0xff]
  %v427 = vlaneseq
  %v428 = vshrl.u32 %v427, 7
  %v429 = vsub.s32 0, %v428
  %v430 = vrot.slane %v28, %v429
  %v431 = vlaneseq
  %v432 = vshrl.u32 %v431, 7
  %v433 = vsub.s32 0, %v432
  %v434 = vrot.slane %v29, %v433
  %437 = vrot.lane.b32.xlu0 %v430, 17
  %v438 = vpop.permute.xlu0 %437
  %439 = vrot.lane.b32.xlu0 %v434, 17
  %v440 = vpop.permute.xlu0 %439
  %v441 = vsel %vm78, %v438, %v440
  %v445 = vmul.f32 %v424, %v438
  %v446 = vmul.f32 %v425, %v441
  %v447 = vmul.f32 %v426, %v440
  %451 = vrot.lane.b32.xlu0 %v445, 111
  %v452 = vpop.permute.xlu0 %451
  %453 = vrot.lane.b32.xlu0 %v446, 111
  %v454 = vpop.permute.xlu0 %453
  %455 = vrot.lane.b32.xlu0 %v447, 111
  %v456 = vpop.permute.xlu0 %455
  %v457 = vsel %vm61, %v452, %v454
  %v458 = vsel %vm61, %v454, %v456
  %461 = vst [vmem:[#allocation3 + $0x100] sm:$0xff] %v457
  %462 = vst [vmem:[#allocation3 + $0x108] sm:$0xff] %v458
  %v463 = vld [vmem:[#allocation2 + $0x20] sm:$0xff]
  %v464 = vld [vmem:[#allocation2 + $0x28] sm:$0xff]
  %v465 = vld [vmem:[#allocation2 + $0x30] sm:$0xff]
  %v466 = vmul.f32 %v463, %v438
  %v467 = vmul.f32 %v464, %v441
  %v468 = vmul.f32 %v465, %v440
  %472 = vrot.lane.b32.xlu0 %v466, 111
  %v473 = vpop.permute.xlu0 %472
  %474 = vrot.lane.b32.xlu0 %v467, 111
  %v475 = vpop.permute.xlu0 %474
  %476 = vrot.lane.b32.xlu0 %v468, 111
  %v477 = vpop.permute.xlu0 %476
  %v478 = vsel %vm61, %v473, %v475
  %v479 = vsel %vm61, %v475, %v477
  %482 = vst [vmem:[#allocation3 + $0x110] sm:$0xff] %v478
  %483 = vst [vmem:[#allocation3 + $0x118] sm:$0xff] %v479
  %v484 = vld [vmem:[#allocation3] sm:$0xff]
  %v485 = vld [vmem:[#allocation3 + $0x8] sm:$0xff]
  %v486 = vld [vmem:[#allocation3 + $0x10] sm:$0xff]
  %v487 = vld [vmem:[#allocation3 + $0x18] sm:$0xff]
  %v488 = vld [vmem:[#allocation3 + $0x20] sm:$0xff]
  %v489 = vld [vmem:[#allocation3 + $0x28] sm:$0xff]
  %v490 = vld [vmem:[#allocation3 + $0x30] sm:$0xff]
  %v491 = vld [vmem:[#allocation3 + $0x38] sm:$0xff]
  %v492 = vld [vmem:[#allocation3 + $0x40] sm:$0xff]
  %v493 = vld [vmem:[#allocation3 + $0x48] sm:$0xff]
  %v494 = vld [vmem:[#allocation3 + $0x50] sm:$0xff]
  %v495 = vld [vmem:[#allocation3 + $0x58] sm:$0xff]
  %v496 = vld [vmem:[#allocation3 + $0x60] sm:$0xff]
  %v497 = vld [vmem:[#allocation3 + $0x68] sm:$0xff]
  %v498 = vld [vmem:[#allocation3 + $0x70] sm:$0xff]
  %v499 = vld [vmem:[#allocation3 + $0x78] sm:$0xff]
  %v500 = vld [vmem:[#allocation3 + $0x80] sm:$0xff]
  %v501 = vld [vmem:[#allocation3 + $0x88] sm:$0xff]
  %v502 = vld [vmem:[#allocation3 + $0x90] sm:$0xff]
  %v503 = vld [vmem:[#allocation3 + $0x98] sm:$0xff]
  %v504 = vld [vmem:[#allocation3 + $0xa0] sm:$0xff]
  %v505 = vld [vmem:[#allocation3 + $0xa8] sm:$0xff]
  %v506 = vld [vmem:[#allocation3 + $0xb0] sm:$0xff]
  %v507 = vld [vmem:[#allocation3 + $0xb8] sm:$0xff]
  %v508 = vld [vmem:[#allocation3 + $0xc0] sm:$0xff]
  %v509 = vld [vmem:[#allocation3 + $0xc8] sm:$0xff]
  %v510 = vld [vmem:[#allocation3 + $0xd0] sm:$0xff]
  %v511 = vld [vmem:[#allocation3 + $0xd8] sm:$0xff]
  %v512 = vld [vmem:[#allocation3 + $0xe0] sm:$0xff]
  %v513 = vld [vmem:[#allocation3 + $0xe8] sm:$0xff]
  %v514 = vld [vmem:[#allocation3 + $0xf0] sm:$0xff]
  %v515 = vld [vmem:[#allocation3 + $0xf8] sm:$0xff]
  %v516 = vld [vmem:[#allocation3 + $0x100] sm:$0xff]
  %v517 = vld [vmem:[#allocation3 + $0x108] sm:$0xff]
  %v518 = vld [vmem:[#allocation3 + $0x110] sm:$0xff]
  %v519 = vld [vmem:[#allocation3 + $0x118] sm:$0xff]
  %521 = vset.pattern.permute.xlu0 0
  %522 = vperm.xlu0 %521, %v35
  %v523 = vpop.permute.xlu0 %522
  %vm525 = vcmask 588800
  %v527 = vsel %vm525, %v34, 0
  %529 = vmatprep.subr.mxu0 0.0
  %530 = vmatpush1.msra.mxu0 0.0
  %531 = vmatprep.subr.mxu0 0.0
  %532 = vmatpush1.msra.mxu0 0.0
  %533 = vmatprep.subr.mxu0 0.0
  %534 = vmatpush1.msra.mxu0 0.0
  %535 = vmatprep.subr.mxu0 0.0
  %536 = vmatpush1.msra.mxu0 0.0
  %537 = vmatprep.subr.mxu0 0.0
  %538 = vmatpush1.msra.mxu0 0.0
  %539 = vmatprep.subr.mxu0 0.0
  %540 = vmatpush1.msra.mxu0 0.0
  %541 = vmatprep.subr.mxu0 0.0
  %542 = vmatpush1.msra.mxu0 0.0
  %543 = vmatprep.subr.mxu0 %v517
  %544 = vmatpush1.msra.mxu0 %v516
  %545 = vmatprep.subr.mxu0 %v513
  %546 = vmatpush1.msra.mxu0 %v512
  %547 = vmatprep.subr.mxu0 %v509
  %548 = vmatpush1.msra.mxu0 %v508
  %549 = vmatprep.subr.mxu0 %v505
  %550 = vmatpush1.msra.mxu0 %v504
  %551 = vmatprep.subr.mxu0 %v501
  %552 = vmatpush1.msra.mxu0 %v500
  %553 = vmatprep.subr.mxu0 %v497
  %554 = vmatpush1.msra.mxu0 %v496
  %555 = vmatprep.subr.mxu0 %v493
  %556 = vmatpush1.msra.mxu0 %v492
  %557 = vmatprep.subr.mxu0 %v489
  %558 = vmatpush1.msra.mxu0 %v488
  %559 = vmatprep.subr.mxu0 %v485
  %560 = vmatpush1.msra.mxu0 %v484
  %561 = vmatprep.subr.mxu0 0.0
  %562 = vmatpush2.msra.mxu0 0.0
  %563 = vmatprep.subr.mxu0 0.0
  %564 = vmatpush2.msra.mxu0 0.0
  %565 = vmatprep.subr.mxu0 0.0
  %566 = vmatpush2.msra.mxu0 0.0
  %567 = vmatprep.subr.mxu0 0.0
  %568 = vmatpush2.msra.mxu0 0.0
  %569 = vmatprep.subr.mxu0 0.0
  %570 = vmatpush2.msra.mxu0 0.0
  %571 = vmatprep.subr.mxu0 0.0
  %572 = vmatpush2.msra.mxu0 0.0
  %573 = vmatprep.subr.mxu0 0.0
  %574 = vmatpush2.msra.mxu0 0.0
  %575 = vmatprep.subr.mxu0 0.0
  %576 = vmatpush2.msra.mxu0 0.0
  %577 = vmatprep.subr.mxu0 0.0
  %578 = vmatpush2.msra.mxu0 0.0
  %579 = vmatprep.subr.mxu0 0.0
  %580 = vmatpush2.msra.mxu0 0.0
  %581 = vmatprep.subr.mxu0 0.0
  %582 = vmatpush2.msra.mxu0 0.0
  %583 = vmatprep.subr.mxu0 0.0
  %584 = vmatpush2.msra.mxu0 0.0
  %585 = vmatprep.subr.mxu0 0.0
  %586 = vmatpush2.msra.mxu0 0.0
  %587 = vmatprep.subr.mxu0 0.0
  %588 = vmatpush2.msra.mxu0 0.0
  %589 = vmatprep.subr.mxu0 0.0
  %590 = vmatpush2.msra.mxu0 0.0
  %591 = vmatprep.subr.mxu0 0.0
  %592 = vmatpush2.msra.mxu0 0.0
  %593 = vmatprep.mubr.f32.mxu0 0.0
  %594 = vmatmul.mubr.f32.gmra.mxu0 %v527
  %v595 = vpop.f32.mrf.mxu0
  %v596 = vadd.f32 %v523, %v595
  %v597 = vpop.f32.mrf.mxu0
  %v598 = vadd.f32 %v523, %v597
  %599 = vdwg.mxu0
  %600 = vmatprep.subr.mxu0 0.0
  %601 = vmatpush1.msra.mxu0 0.0
  %602 = vmatprep.subr.mxu0 0.0
  %603 = vmatpush1.msra.mxu0 0.0
  %604 = vmatprep.subr.mxu0 0.0
  %605 = vmatpush1.msra.mxu0 0.0
  %606 = vmatprep.subr.mxu0 0.0
  %607 = vmatpush1.msra.mxu0 0.0
  %608 = vmatprep.subr.mxu0 0.0
  %609 = vmatpush1.msra.mxu0 0.0
  %610 = vmatprep.subr.mxu0 0.0
  %611 = vmatpush1.msra.mxu0 0.0
  %612 = vmatprep.subr.mxu0 0.0
  %613 = vmatpush1.msra.mxu0 0.0
  %614 = vmatprep.subr.mxu0 %v519
  %615 = vmatpush1.msra.mxu0 %v518
  %616 = vmatprep.subr.mxu0 %v515
  %617 = vmatpush1.msra.mxu0 %v514
  %618 = vmatprep.subr.mxu0 %v511
  %619 = vmatpush1.msra.mxu0 %v510
  %620 = vmatprep.subr.mxu0 %v507
  %621 = vmatpush1.msra.mxu0 %v506
  %622 = vmatprep.subr.mxu0 %v503
  %623 = vmatpush1.msra.mxu0 %v502
  %624 = vmatprep.subr.mxu0 %v499
  %625 = vmatpush1.msra.mxu0 %v498
  %626 = vmatprep.subr.mxu0 %v495
  %627 = vmatpush1.msra.mxu0 %v494
  %628 = vmatprep.subr.mxu0 %v491
  %629 = vmatpush1.msra.mxu0 %v490
  %630 = vmatprep.subr.mxu0 %v487
  %631 = vmatpush1.msra.mxu0 %v486
  %632 = vmatprep.subr.mxu0 0.0
  %633 = vmatpush2.msra.mxu0 0.0
  %634 = vmatprep.subr.mxu0 0.0
  %635 = vmatpush2.msra.mxu0 0.0
  %636 = vmatprep.subr.mxu0 0.0
  %637 = vmatpush2.msra.mxu0 0.0
  %638 = vmatprep.subr.mxu0 0.0
  %639 = vmatpush2.msra.mxu0 0.0
  %640 = vmatprep.subr.mxu0 0.0
  %641 = vmatpush2.msra.mxu0 0.0
  %642 = vmatprep.subr.mxu0 0.0
  %643 = vmatpush2.msra.mxu0 0.0
  %644 = vmatprep.subr.mxu0 0.0
  %645 = vmatpush2.msra.mxu0 0.0
  %646 = vmatprep.subr.mxu0 0.0
  %647 = vmatpush2.msra.mxu0 0.0
  %648 = vmatprep.subr.mxu0 0.0
  %649 = vmatpush2.msra.mxu0 0.0
  %650 = vmatprep.subr.mxu0 0.0
  %651 = vmatpush2.msra.mxu0 0.0
  %652 = vmatprep.subr.mxu0 0.0
  %653 = vmatpush2.msra.mxu0 0.0
  %654 = vmatprep.subr.mxu0 0.0
  %655 = vmatpush2.msra.mxu0 0.0
  %656 = vmatprep.subr.mxu0 0.0
  %657 = vmatpush2.msra.mxu0 0.0
  %658 = vmatprep.subr.mxu0 0.0
  %659 = vmatpush2.msra.mxu0 0.0
  %660 = vmatprep.subr.mxu0 0.0
  %661 = vmatpush2.msra.mxu0 0.0
  %662 = vmatprep.subr.mxu0 0.0
  %663 = vmatpush2.msra.mxu0 0.0
  %664 = vmatprep.mubr.f32.mxu0 0.0
  %665 = vmatmul.mubr.f32.gmra.mxu0 %v527
  %v666 = vpop.f32.mrf.mxu0
  %v667 = vadd.f32 %v523, %v666
  %v668 = vpop.f32.mrf.mxu0
  %v669 = vadd.f32 %v523, %v668
  %670 = vdwg.mxu0
  %v671 = vmax.f32 %v596, 0.0
  %v672 = vmax.f32 %v598, 0.0
  %v673 = vmax.f32 %v667, 0.0
  %v674 = vmax.f32 %v669, 0.0
  %v675 = vld [vmem:[%s3] sm:$0xff]
  %v676 = vld [vmem:[%s4] sm:$0xff]
  %677 = vst [vmem:[#allocation2 + $0x8] sm:$0xff] %v671
  %678 = vst [vmem:[#allocation2 + $0x10] sm:$0xff] %v672
  %679 = vst [vmem:[#allocation2 + $0x20] sm:$0xff] %v673
  %680 = vst [vmem:[#allocation2 + $0x28] sm:$0xff] %v674
  %681 = vst [vmem:[#allocation3 + $0x80] sm:$0xff] %v671
  %682 = vst [vmem:[#allocation3 + $0x88] sm:$0xff] %v672
  %683 = vst [vmem:[#allocation3 + $0x90] sm:$0xff] %v673
  %684 = vst [vmem:[#allocation3 + $0x98] sm:$0xff] %v674
  %v685 = vld [vmem:[#allocation2] sm:$0xff]
  %v686 = vld [vmem:[#allocation2 + $0x8] sm:$0xff]
  %v687 = vld [vmem:[#allocation2 + $0x10] sm:$0xff]
  %v688 = vmul.f32 %v685, %v58
  %v689 = vmul.f32 %v686, %v62
  %v690 = vmul.f32 %v687, %v60
  %694 = vrot.lane.b32.xlu0 %v688, 17
  %v695 = vpop.permute.xlu0 %694
  %696 = vrot.lane.b32.xlu0 %v689, 17
  %v697 = vpop.permute.xlu0 %696
  %698 = vrot.lane.b32.xlu0 %v690, 17
  %v699 = vpop.permute.xlu0 %698
  %v700 = vsel %vm78, %v695, %v697
  %v701 = vsel %vm78, %v697, %v699
  %704 = vst [vmem:[#allocation3] sm:$0xff] %v700
  %705 = vst [vmem:[#allocation3 + $0x8] sm:$0xff] %v701
  %v706 = vld [vmem:[#allocation2 + $0x18] sm:$0xff]
  %v707 = vld [vmem:[#allocation2 + $0x20] sm:$0xff]
  %v708 = vld [vmem:[#allocation2 + $0x28] sm:$0xff]
  %v709 = vmul.f32 %v706, %v58
  %v710 = vmul.f32 %v707, %v62
  %v711 = vmul.f32 %v708, %v60
  %715 = vrot.lane.b32.xlu0 %v709, 17
  %v716 = vpop.permute.xlu0 %715
  %717 = vrot.lane.b32.xlu0 %v710, 17
  %v718 = vpop.permute.xlu0 %717
  %719 = vrot.lane.b32.xlu0 %v711, 17
  %v720 = vpop.permute.xlu0 %719
  %v721 = vsel %vm78, %v716, %v718
  %v722 = vsel %vm78, %v718, %v720
  %725 = vst [vmem:[#allocation3 + $0x10] sm:$0xff] %v721
  %726 = vst [vmem:[#allocation3 + $0x18] sm:$0xff] %v722
  %v727 = vld [vmem:[#allocation2] sm:$0xff]
  %v728 = vld [vmem:[#allocation2 + $0x8] sm:$0xff]
  %v729 = vld [vmem:[#allocation2 + $0x10] sm:$0xff]
  %733 = vrot.lane.b32.xlu0 %v727, 16
  %v734 = vpop.permute.xlu0 %733
  %735 = vrot.lane.b32.xlu0 %v728, 16
  %v736 = vpop.permute.xlu0 %735
  %737 = vrot.lane.b32.xlu0 %v729, 16
  %v738 = vpop.permute.xlu0 %737
  %v739 = vsel %vm118, %v734, %v736
  %v740 = vsel %vm118, %v736, %v738
  %743 = vst [vmem:[#allocation3 + $0x20] sm:$0xff] %v739
  %744 = vst [vmem:[#allocation3 + $0x28] sm:$0xff] %v740
  %v745 = vld [vmem:[#allocation2 + $0x18] sm:$0xff]
  %v746 = vld [vmem:[#allocation2 + $0x20] sm:$0xff]
  %v747 = vld [vmem:[#allocation2 + $0x28] sm:$0xff]
  %751 = vrot.lane.b32.xlu0 %v745, 16
  %v752 = vpop.permute.xlu0 %751
  %753 = vrot.lane.b32.xlu0 %v746, 16
  %v754 = vpop.permute.xlu0 %753
  %755 = vrot.lane.b32.xlu0 %v747, 16
  %v756 = vpop.permute.xlu0 %755
  %v757 = vsel %vm118, %v752, %v754
  %v758 = vsel %vm118, %v754, %v756
  %761 = vst [vmem:[#allocation3 + $0x30] sm:$0xff] %v757
  %762 = vst [vmem:[#allocation3 + $0x38] sm:$0xff] %v758
  %v763 = vld [vmem:[#allocation2] sm:$0xff]
  %v764 = vld [vmem:[#allocation2 + $0x8] sm:$0xff]
  %v765 = vld [vmem:[#allocation2 + $0x10] sm:$0xff]
  %v766 = vmul.f32 %v763, %v157
  %v767 = vmul.f32 %v764, %v161
  %v768 = vmul.f32 %v765, %v159
  %772 = vrot.lane.b32.xlu0 %v766, 15
  %v773 = vpop.permute.xlu0 %772
  %774 = vrot.lane.b32.xlu0 %v767, 15
  %v775 = vpop.permute.xlu0 %774
  %776 = vrot.lane.b32.xlu0 %v768, 15
  %v777 = vpop.permute.xlu0 %776
  %v778 = vsel %vm177, %v773, %v775
  %v779 = vsel %vm177, %v775, %v777
  %782 = vst [vmem:[#allocation3 + $0x40] sm:$0xff] %v778
  %783 = vst [vmem:[#allocation3 + $0x48] sm:$0xff] %v779
  %v784 = vld [vmem:[#allocation2 + $0x18] sm:$0xff]
  %v785 = vld [vmem:[#allocation2 + $0x20] sm:$0xff]
  %v786 = vld [vmem:[#allocation2 + $0x28] sm:$0xff]
  %v787 = vmul.f32 %v784, %v157
  %v788 = vmul.f32 %v785, %v161
  %v789 = vmul.f32 %v786, %v159
  %793 = vrot.lane.b32.xlu0 %v787, 15
  %v794 = vpop.permute.xlu0 %793
  %795 = vrot.lane.b32.xlu0 %v788, 15
  %v796 = vpop.permute.xlu0 %795
  %797 = vrot.lane.b32.xlu0 %v789, 15
  %v798 = vpop.permute.xlu0 %797
  %v799 = vsel %vm177, %v794, %v796
  %v800 = vsel %vm177, %v796, %v798
  %803 = vst [vmem:[#allocation3 + $0x50] sm:$0xff] %v799
  %804 = vst [vmem:[#allocation3 + $0x58] sm:$0xff] %v800
  %v805 = vld [vmem:[#allocation2] sm:$0xff]
  %v806 = vld [vmem:[#allocation2 + $0x8] sm:$0xff]
  %v807 = vld [vmem:[#allocation2 + $0x10] sm:$0xff]
  %v808 = vmul.f32 %v805, %v219
  %v809 = vmul.f32 %v806, %v223
  %v810 = vmul.f32 %v807, %v221
  %814 = vrot.lane.b32.xlu0 %v808, 1
  %v815 = vpop.permute.xlu0 %814
  %816 = vrot.lane.b32.xlu0 %v809, 1
  %v817 = vpop.permute.xlu0 %816
  %818 = vrot.lane.b32.xlu0 %v810, 1
  %v819 = vpop.permute.xlu0 %818
  %v820 = vsel %vm239, %v815, %v817
  %v821 = vsel %vm239, %v817, %v819
  %824 = vst [vmem:[#allocation3 + $0x60] sm:$0xff] %v820
  %825 = vst [vmem:[#allocation3 + $0x68] sm:$0xff] %v821
  %v826 = vld [vmem:[#allocation2 + $0x18] sm:$0xff]
  %v827 = vld [vmem:[#allocation2 + $0x20] sm:$0xff]
  %v828 = vld [vmem:[#allocation2 + $0x28] sm:$0xff]
  %v829 = vmul.f32 %v826, %v219
  %v830 = vmul.f32 %v827, %v223
  %v831 = vmul.f32 %v828, %v221
  %835 = vrot.lane.b32.xlu0 %v829, 1
  %v836 = vpop.permute.xlu0 %835
  %837 = vrot.lane.b32.xlu0 %v830, 1
  %v838 = vpop.permute.xlu0 %837
  %839 = vrot.lane.b32.xlu0 %v831, 1
  %v840 = vpop.permute.xlu0 %839
  %v841 = vsel %vm239, %v836, %v838
  %v842 = vsel %vm239, %v838, %v840
  %845 = vst [vmem:[#allocation3 + $0x70] sm:$0xff] %v841
  %846 = vst [vmem:[#allocation3 + $0x78] sm:$0xff] %v842
  %v847 = vld [vmem:[#allocation2 + $0x8] sm:$0xff]
  %v848 = vld [vmem:[#allocation2 + $0x10] sm:$0xff]
  %v849 = vld [vmem:[#allocation2 + $0x18] sm:$0xff]
  %v850 = vmul.f32 %v847, %v281
  %v851 = vmul.f32 %v848, %v284
  %v852 = vmul.f32 %v849, %v283
  %856 = vrot.lane.b32.xlu0 %v850, 127
  %v857 = vpop.permute.xlu0 %856
  %858 = vrot.lane.b32.xlu0 %v851, 127
  %v859 = vpop.permute.xlu0 %858
  %860 = vrot.lane.b32.xlu0 %v852, 127
  %v861 = vpop.permute.xlu0 %860
  %v862 = vsel %vm222, %v857, %v859
  %v863 = vsel %vm222, %v859, %v861
  %866 = vst [vmem:[#allocation3 + $0xa0] sm:$0xff] %v862
  %867 = vst [vmem:[#allocation3 + $0xa8] sm:$0xff] %v863
  %v868 = vld [vmem:[#allocation2 + $0x20] sm:$0xff]
  %v869 = vld [vmem:[#allocation2 + $0x28] sm:$0xff]
  %v870 = vld [vmem:[#allocation2 + $0x30] sm:$0xff]
  %v871 = vmul.f32 %v868, %v281
  %v872 = vmul.f32 %v869, %v284
  %v873 = vmul.f32 %v870, %v283
  %877 = vrot.lane.b32.xlu0 %v871, 127
  %v878 = vpop.permute.xlu0 %877
  %879 = vrot.lane.b32.xlu0 %v872, 127
  %v880 = vpop.permute.xlu0 %879
  %881 = vrot.lane.b32.xlu0 %v873, 127
  %v882 = vpop.permute.xlu0 %881
  %v883 = vsel %vm222, %v878, %v880
  %v884 = vsel %vm222, %v880, %v882
  %887 = vst [vmem:[#allocation3 + $0xb0] sm:$0xff] %v883
  %888 = vst [vmem:[#allocation3 + $0xb8] sm:$0xff] %v884
  %v889 = vld [vmem:[#allocation2 + $0x8] sm:$0xff]
  %v890 = vld [vmem:[#allocation2 + $0x10] sm:$0xff]
  %v891 = vld [vmem:[#allocation2 + $0x18] sm:$0xff]
  %v892 = vmul.f32 %v889, %v341
  %v893 = vmul.f32 %v890, %v344
  %v894 = vmul.f32 %v891, %v343
  %898 = vrot.lane.b32.xlu0 %v892, 113
  %v899 = vpop.permute.xlu0 %898
  %900 = vrot.lane.b32.xlu0 %v893, 113
  %v901 = vpop.permute.xlu0 %900
  %902 = vrot.lane.b32.xlu0 %v894, 113
  %v903 = vpop.permute.xlu0 %902
  %v904 = vsel %vm160, %v899, %v901
  %v905 = vsel %vm160, %v901, %v903
  %908 = vst [vmem:[#allocation3 + $0xc0] sm:$0xff] %v904
  %909 = vst [vmem:[#allocation3 + $0xc8] sm:$0xff] %v905
  %v910 = vld [vmem:[#allocation2 + $0x20] sm:$0xff]
  %v911 = vld [vmem:[#allocation2 + $0x28] sm:$0xff]
  %v912 = vld [vmem:[#allocation2 + $0x30] sm:$0xff]
  %v913 = vmul.f32 %v910, %v341
  %v914 = vmul.f32 %v911, %v344
  %v915 = vmul.f32 %v912, %v343
  %919 = vrot.lane.b32.xlu0 %v913, 113
  %v920 = vpop.permute.xlu0 %919
  %921 = vrot.lane.b32.xlu0 %v914, 113
  %v922 = vpop.permute.xlu0 %921
  %923 = vrot.lane.b32.xlu0 %v915, 113
  %v924 = vpop.permute.xlu0 %923
  %v925 = vsel %vm160, %v920, %v922
  %v926 = vsel %vm160, %v922, %v924
  %929 = vst [vmem:[#allocation3 + $0xd0] sm:$0xff] %v925
  %930 = vst [vmem:[#allocation3 + $0xd8] sm:$0xff] %v926
  %v931 = vld [vmem:[#allocation2 + $0x8] sm:$0xff]
  %v932 = vld [vmem:[#allocation2 + $0x10] sm:$0xff]
  %v933 = vld [vmem:[#allocation2 + $0x18] sm:$0xff]
  %937 = vrot.lane.b32.xlu0 %v931, 112
  %v938 = vpop.permute.xlu0 %937
  %939 = vrot.lane.b32.xlu0 %v932, 112
  %v940 = vpop.permute.xlu0 %939
  %941 = vrot.lane.b32.xlu0 %v933, 112
  %v942 = vpop.permute.xlu0 %941
  %v943 = vsel %vm399, %v938, %v940
  %v944 = vsel %vm399, %v940, %v942
  %947 = vst [vmem:[#allocation3 + $0xe0] sm:$0xff] %v943
  %948 = vst [vmem:[#allocation3 + $0xe8] sm:$0xff] %v944
  %v949 = vld [vmem:[#allocation2 + $0x20] sm:$0xff]
  %v950 = vld [vmem:[#allocation2 + $0x28] sm:$0xff]
  %v951 = vld [vmem:[#allocation2 + $0x30] sm:$0xff]
  %955 = vrot.lane.b32.xlu0 %v949, 112
  %v956 = vpop.permute.xlu0 %955
  %957 = vrot.lane.b32.xlu0 %v950, 112
  %v958 = vpop.permute.xlu0 %957
  %959 = vrot.lane.b32.xlu0 %v951, 112
  %v960 = vpop.permute.xlu0 %959
  %v961 = vsel %vm399, %v956, %v958
  %v962 = vsel %vm399, %v958, %v960
  %965 = vst [vmem:[#allocation3 + $0xf0] sm:$0xff] %v961
  %966 = vst [vmem:[#allocation3 + $0xf8] sm:$0xff] %v962
  %v967 = vld [vmem:[#allocation2 + $0x8] sm:$0xff]
  %v968 = vld [vmem:[#allocation2 + $0x10] sm:$0xff]
  %v969 = vld [vmem:[#allocation2 + $0x18] sm:$0xff]
  %v970 = vmul.f32 %v967, %v438
  %v971 = vmul.f32 %v968, %v441
  %v972 = vmul.f32 %v969, %v440
  %976 = vrot.lane.b32.xlu0 %v970, 111
  %v977 = vpop.permute.xlu0 %976
  %978 = vrot.lane.b32.xlu0 %v971, 111
  %v979 = vpop.permute.xlu0 %978
  %980 = vrot.lane.b32.xlu0 %v972, 111
  %v981 = vpop.permute.xlu0 %980
  %v982 = vsel %vm61, %v977, %v979
  %v983 = vsel %vm61, %v979, %v981
  %986 = vst [vmem:[#allocation3 + $0x100] sm:$0xff] %v982
  %987 = vst [vmem:[#allocation3 + $0x108] sm:$0xff] %v983
  %v988 = vld [vmem:[#allocation2 + $0x20] sm:$0xff]
  %v989 = vld [vmem:[#allocation2 + $0x28] sm:$0xff]
  %v990 = vld [vmem:[#allocation2 + $0x30] sm:$0xff]
  %v991 = vmul.f32 %v988, %v438
  %v992 = vmul.f32 %v989, %v441
  %v993 = vmul.f32 %v990, %v440
  %997 = vrot.lane.b32.xlu0 %v991, 111
  %v998 = vpop.permute.xlu0 %997
  %999 = vrot.lane.b32.xlu0 %v992, 111
  %v1000 = vpop.permute.xlu0 %999
  %1001 = vrot.lane.b32.xlu0 %v993, 111
  %v1002 = vpop.permute.xlu0 %1001
  %v1003 = vsel %vm61, %v998, %v1000
  %v1004 = vsel %vm61, %v1000, %v1002
  %1007 = vst [vmem:[#allocation3 + $0x110] sm:$0xff] %v1003
  %1008 = vst [vmem:[#allocation3 + $0x118] sm:$0xff] %v1004
  %v1009 = vld [vmem:[#allocation3] sm:$0xff]
  %v1010 = vld [vmem:[#allocation3 + $0x8] sm:$0xff]
  %v1011 = vld [vmem:[#allocation3 + $0x10] sm:$0xff]
  %v1012 = vld [vmem:[#allocation3 + $0x18] sm:$0xff]
  %v1013 = vld [vmem:[#allocation3 + $0x20] sm:$0xff]
  %v1014 = vld [vmem:[#allocation3 + $0x28] sm:$0xff]
  %v1015 = vld [vmem:[#allocation3 + $0x30] sm:$0xff]
  %v1016 = vld [vmem:[#allocation3 + $0x38] sm:$0xff]
  %v1017 = vld [vmem:[#allocation3 + $0x40] sm:$0xff]
  %v1018 = vld [vmem:[#allocation3 + $0x48] sm:$0xff]
  %v1019 = vld [vmem:[#allocation3 + $0x50] sm:$0xff]
  %v1020 = vld [vmem:[#allocation3 + $0x58] sm:$0xff]
  %v1021 = vld [vmem:[#allocation3 + $0x60] sm:$0xff]
  %v1022 = vld [vmem:[#allocation3 + $0x68] sm:$0xff]
  %v1023 = vld [vmem:[#allocation3 + $0x70] sm:$0xff]
  %v1024 = vld [vmem:[#allocation3 + $0x78] sm:$0xff]
  %v1025 = vld [vmem:[#allocation3 + $0x80] sm:$0xff]
  %v1026 = vld [vmem:[#allocation3 + $0x88] sm:$0xff]
  %v1027 = vld [vmem:[#allocation3 + $0x90] sm:$0xff]
  %v1028 = vld [vmem:[#allocation3 + $0x98] sm:$0xff]
  %v1029 = vld [vmem:[#allocation3 + $0xa0] sm:$0xff]
  %v1030 = vld [vmem:[#allocation3 + $0xa8] sm:$0xff]
  %v1031 = vld [vmem:[#allocation3 + $0xb0] sm:$0xff]
  %v1032 = vld [vmem:[#allocation3 + $0xb8] sm:$0xff]
  %v1033 = vld [vmem:[#allocation3 + $0xc0] sm:$0xff]
  %v1034 = vld [vmem:[#allocation3 + $0xc8] sm:$0xff]
  %v1035 = vld [vmem:[#allocation3 + $0xd0] sm:$0xff]
  %v1036 = vld [vmem:[#allocation3 + $0xd8] sm:$0xff]
  %v1037 = vld [vmem:[#allocation3 + $0xe0] sm:$0xff]
  %v1038 = vld [vmem:[#allocation3 + $0xe8] sm:$0xff]
  %v1039 = vld [vmem:[#allocation3 + $0xf0] sm:$0xff]
  %v1040 = vld [vmem:[#allocation3 + $0xf8] sm:$0xff]
  %v1041 = vld [vmem:[#allocation3 + $0x100] sm:$0xff]
  %v1042 = vld [vmem:[#allocation3 + $0x108] sm:$0xff]
  %v1043 = vld [vmem:[#allocation3 + $0x110] sm:$0xff]
  %v1044 = vld [vmem:[#allocation3 + $0x118] sm:$0xff]
  %1046 = vset.pattern.permute.xlu0 0
  %1047 = vperm.xlu0 %1046, %v676
  %v1048 = vpop.permute.xlu0 %1047
  %v1051 = vsel %vm525, %v675, 0
  %1053 = vmatprep.subr.mxu0 0.0
  %1054 = vmatpush1.msra.mxu0 0.0
  %1055 = vmatprep.subr.mxu0 0.0
  %1056 = vmatpush1.msra.mxu0 0.0
  %1057 = vmatprep.subr.mxu0 0.0
  %1058 = vmatpush1.msra.mxu0 0.0
  %1059 = vmatprep.subr.mxu0 0.0
  %1060 = vmatpush1.msra.mxu0 0.0
  %1061 = vmatprep.subr.mxu0 0.0
  %1062 = vmatpush1.msra.mxu0 0.0
  %1063 = vmatprep.subr.mxu0 0.0
  %1064 = vmatpush1.msra.mxu0 0.0
  %1065 = vmatprep.subr.mxu0 0.0
  %1066 = vmatpush1.msra.mxu0 0.0
  %1067 = vmatprep.subr.mxu0 %v1042
  %1068 = vmatpush1.msra.mxu0 %v1041
  %1069 = vmatprep.subr.mxu0 %v1038
  %1070 = vmatpush1.msra.mxu0 %v1037
  %1071 = vmatprep.subr.mxu0 %v1034
  %1072 = vmatpush1.msra.mxu0 %v1033
  %1073 = vmatprep.subr.mxu0 %v1030
  %1074 = vmatpush1.msra.mxu0 %v1029
  %1075 = vmatprep.subr.mxu0 %v1026
  %1076 = vmatpush1.msra.mxu0 %v1025
  %1077 = vmatprep.subr.mxu0 %v1022
  %1078 = vmatpush1.msra.mxu0 %v1021
  %1079 = vmatprep.subr.mxu0 %v1018
  %1080 = vmatpush1.msra.mxu0 %v1017
  %1081 = vmatprep.subr.mxu0 %v1014
  %1082 = vmatpush1.msra.mxu0 %v1013
  %1083 = vmatprep.subr.mxu0 %v1010
  %1084 = vmatpush1.msra.mxu0 %v1009
  %1085 = vmatprep.subr.mxu0 0.0
  %1086 = vmatpush2.msra.mxu0 0.0
  %1087 = vmatprep.subr.mxu0 0.0
  %1088 = vmatpush2.msra.mxu0 0.0
  %1089 = vmatprep.subr.mxu0 0.0
  %1090 = vmatpush2.msra.mxu0 0.0
  %1091 = vmatprep.subr.mxu0 0.0
  %1092 = vmatpush2.msra.mxu0 0.0
  %1093 = vmatprep.subr.mxu0 0.0
  %1094 = vmatpush2.msra.mxu0 0.0
  %1095 = vmatprep.subr.mxu0 0.0
  %1096 = vmatpush2.msra.mxu0 0.0
  %1097 = vmatprep.subr.mxu0 0.0
  %1098 = vmatpush2.msra.mxu0 0.0
  %1099 = vmatprep.subr.mxu0 0.0
  %1100 = vmatpush2.msra.mxu0 0.0
  %1101 = vmatprep.subr.mxu0 0.0
  %1102 = vmatpush2.msra.mxu0 0.0
  %1103 = vmatprep.subr.mxu0 0.0
  %1104 = vmatpush2.msra.mxu0 0.0
  %1105 = vmatprep.subr.mxu0 0.0
  %1106 = vmatpush2.msra.mxu0 0.0
  %1107 = vmatprep.subr.mxu0 0.0
  %1108 = vmatpush2.msra.mxu0 0.0
  %1109 = vmatprep.subr.mxu0 0.0
  %1110 = vmatpush2.msra.mxu0 0.0
  %1111 = vmatprep.subr.mxu0 0.0
  %1112 = vmatpush2.msra.mxu0 0.0
  %1113 = vmatprep.subr.mxu0 0.0
  %1114 = vmatpush2.msra.mxu0 0.0
  %1115 = vmatprep.subr.mxu0 0.0
  %1116 = vmatpush2.msra.mxu0 0.0
  %1117 = vmatprep.mubr.f32.mxu0 0.0
  %1118 = vmatmul.mubr.f32.gmra.mxu0 %v1051
  %v1119 = vpop.f32.mrf.mxu0
  %v1120 = vadd.f32 %v1048, %v1119
  %v1121 = vpop.f32.mrf.mxu0
  %v1122 = vadd.f32 %v1048, %v1121
  %1123 = vdwg.mxu0
  %1124 = vmatprep.subr.mxu0 0.0
  %1125 = vmatpush1.msra.mxu0 0.0
  %1126 = vmatprep.subr.mxu0 0.0
  %1127 = vmatpush1.msra.mxu0 0.0
  %1128 = vmatprep.subr.mxu0 0.0
  %1129 = vmatpush1.msra.mxu0 0.0
  %1130 = vmatprep.subr.mxu0 0.0
  %1131 = vmatpush1.msra.mxu0 0.0
  %1132 = vmatprep.subr.mxu0 0.0
  %1133 = vmatpush1.msra.mxu0 0.0
  %1134 = vmatprep.subr.mxu0 0.0
  %1135 = vmatpush1.msra.mxu0 0.0
  %1136 = vmatprep.subr.mxu0 0.0
  %1137 = vmatpush1.msra.mxu0 0.0
  %1138 = vmatprep.subr.mxu0 %v1044
  %1139 = vmatpush1.msra.mxu0 %v1043
  %1140 = vmatprep.subr.mxu0 %v1040
  %1141 = vmatpush1.msra.mxu0 %v1039
  %1142 = vmatprep.subr.mxu0 %v1036
  %1143 = vmatpush1.msra.mxu0 %v1035
  %1144 = vmatprep.subr.mxu0 %v1032
  %1145 = vmatpush1.msra.mxu0 %v1031
  %1146 = vmatprep.subr.mxu0 %v1028
  %1147 = vmatpush1.msra.mxu0 %v1027
  %1148 = vmatprep.subr.mxu0 %v1024
  %1149 = vmatpush1.msra.mxu0 %v1023
  %1150 = vmatprep.subr.mxu0 %v1020
  %1151 = vmatpush1.msra.mxu0 %v1019
  %1152 = vmatprep.subr.mxu0 %v1016
  %1153 = vmatpush1.msra.mxu0 %v1015
  %1154 = vmatprep.subr.mxu0 %v1012
  %1155 = vmatpush1.msra.mxu0 %v1011
  %1156 = vmatprep.subr.mxu0 0.0
  %1157 = vmatpush2.msra.mxu0 0.0
  %1158 = vmatprep.subr.mxu0 0.0
  %1159 = vmatpush2.msra.mxu0 0.0
  %1160 = vmatprep.subr.mxu0 0.0
  %1161 = vmatpush2.msra.mxu0 0.0
  %1162 = vmatprep.subr.mxu0 0.0
  %1163 = vmatpush2.msra.mxu0 0.0
  %1164 = vmatprep.subr.mxu0 0.0
  %1165 = vmatpush2.msra.mxu0 0.0
  %1166 = vmatprep.subr.mxu0 0.0
  %1167 = vmatpush2.msra.mxu0 0.0
  %1168 = vmatprep.subr.mxu0 0.0
  %1169 = vmatpush2.msra.mxu0 0.0
  %1170 = vmatprep.subr.mxu0 0.0
  %1171 = vmatpush2.msra.mxu0 0.0
  %1172 = vmatprep.subr.mxu0 0.0
  %1173 = vmatpush2.msra.mxu0 0.0
  %1174 = vmatprep.subr.mxu0 0.0
  %1175 = vmatpush2.msra.mxu0 0.0
  %1176 = vmatprep.subr.mxu0 0.0
  %1177 = vmatpush2.msra.mxu0 0.0
  %1178 = vmatprep.subr.mxu0 0.0
  %1179 = vmatpush2.msra.mxu0 0.0
  %1180 = vmatprep.subr.mxu0 0.0
  %1181 = vmatpush2.msra.mxu0 0.0
  %1182 = vmatprep.subr.mxu0 0.0
  %1183 = vmatpush2.msra.mxu0 0.0
  %1184 = vmatprep.subr.mxu0 0.0
  %1185 = vmatpush2.msra.mxu0 0.0
  %1186 = vmatprep.subr.mxu0 0.0
  %1187 = vmatpush2.msra.mxu0 0.0
  %1188 = vmatprep.mubr.f32.mxu0 0.0
  %1189 = vmatmul.mubr.f32.gmra.mxu0 %v1051
  %v1190 = vpop.f32.mrf.mxu0
  %v1191 = vadd.f32 %v1048, %v1190
  %v1192 = vpop.f32.mrf.mxu0
  %v1193 = vadd.f32 %v1048, %v1192
  %1194 = vdwg.mxu0
  %v1195 = vadd.f32 %v1120, %v30
  %v1196 = vadd.f32 %v1122, %v31
  %v1197 = vadd.f32 %v1191, %v32
  %v1198 = vadd.f32 %v1193, %v33
  %s1199 = scalar_lea.vmem %s1, 8
  %v1200 = vld [vmem:[%s1199] sm:$0xff]
  %s1201 = scalar_lea.vmem %s2, 8
  %v1202 = vld [vmem:[%s1201] sm:$0xff]
  %1203 = vst [vmem:[#allocation2 + $0x8] sm:$0xff] %v1195
  %1204 = vst [vmem:[#allocation2 + $0x10] sm:$0xff] %v1196
  %1205 = vst [vmem:[#allocation2 + $0x20] sm:$0xff] %v1197
  %1206 = vst [vmem:[#allocation2 + $0x28] sm:$0xff] %v1198
  %1207 = vst [vmem:[#allocation3 + $0x80] sm:$0xff] %v1195
  %1208 = vst [vmem:[#allocation3 + $0x88] sm:$0xff] %v1196
  %1209 = vst [vmem:[#allocation3 + $0x90] sm:$0xff] %v1197
  %1210 = vst [vmem:[#allocation3 + $0x98] sm:$0xff] %v1198
  %v1211 = vld [vmem:[#allocation2] sm:$0xff]
  %v1212 = vld [vmem:[#allocation2 + $0x8] sm:$0xff]
  %v1213 = vld [vmem:[#allocation2 + $0x10] sm:$0xff]
  %v1214 = vmul.f32 %v1211, %v58
  %v1215 = vmul.f32 %v1212, %v62
  %v1216 = vmul.f32 %v1213, %v60
  %1220 = vrot.lane.b32.xlu0 %v1214, 17
  %v1221 = vpop.permute.xlu0 %1220
  %1222 = vrot.lane.b32.xlu0 %v1215, 17
  %v1223 = vpop.permute.xlu0 %1222
  %1224 = vrot.lane.b32.xlu0 %v1216, 17
  %v1225 = vpop.permute.xlu0 %1224
  %v1226 = vsel %vm78, %v1221, %v1223
  %v1227 = vsel %vm78, %v1223, %v1225
  %1230 = vst [vmem:[#allocation3] sm:$0xff] %v1226
  %1231 = vst [vmem:[#allocation3 + $0x8] sm:$0xff] %v1227
  %v1232 = vld [vmem:[#allocation2 + $0x18] sm:$0xff]
  %v1233 = vld [vmem:[#allocation2 + $0x20] sm:$0xff]
  %v1234 = vld [vmem:[#allocation2 + $0x28] sm:$0xff]
  %v1235 = vmul.f32 %v1232, %v58
  %v1236 = vmul.f32 %v1233, %v62
  %v1237 = vmul.f32 %v1234, %v60
  %1241 = vrot.lane.b32.xlu0 %v1235, 17
  %v1242 = vpop.permute.xlu0 %1241
  %1243 = vrot.lane.b32.xlu0 %v1236, 17
  %v1244 = vpop.permute.xlu0 %1243
  %1245 = vrot.lane.b32.xlu0 %v1237, 17
  %v1246 = vpop.permute.xlu0 %1245
  %v1247 = vsel %vm78, %v1242, %v1244
  %v1248 = vsel %vm78, %v1244, %v1246
  %1251 = vst [vmem:[#allocation3 + $0x10] sm:$0xff] %v1247
  %1252 = vst [vmem:[#allocation3 + $0x18] sm:$0xff] %v1248
  %v1253 = vld [vmem:[#allocation2] sm:$0xff]
  %v1254 = vld [vmem:[#allocation2 + $0x8] sm:$0xff]
  %v1255 = vld [vmem:[#allocation2 + $0x10] sm:$0xff]
  %1259 = vrot.lane.b32.xlu0 %v1253, 16
  %v1260 = vpop.permute.xlu0 %1259
  %1261 = vrot.lane.b32.xlu0 %v1254, 16
  %v1262 = vpop.permute.xlu0 %1261
  %1263 = vrot.lane.b32.xlu0 %v1255, 16
  %v1264 = vpop.permute.xlu0 %1263
  %v1265 = vsel %vm118, %v1260, %v1262
  %v1266 = vsel %vm118, %v1262, %v1264
  %1269 = vst [vmem:[#allocation3 + $0x20] sm:$0xff] %v1265
  %1270 = vst [vmem:[#allocation3 + $0x28] sm:$0xff] %v1266
  %v1271 = vld [vmem:[#allocation2 + $0x18] sm:$0xff]
  %v1272 = vld [vmem:[#allocation2 + $0x20] sm:$0xff]
  %v1273 = vld [vmem:[#allocation2 + $0x28] sm:$0xff]
  %1277 = vrot.lane.b32.xlu0 %v1271, 16
  %v1278 = vpop.permute.xlu0 %1277
  %1279 = vrot.lane.b32.xlu0 %v1272, 16
  %v1280 = vpop.permute.xlu0 %1279
  %1281 = vrot.lane.b32.xlu0 %v1273, 16
  %v1282 = vpop.permute.xlu0 %1281
  %v1283 = vsel %vm118, %v1278, %v1280
  %v1284 = vsel %vm118, %v1280, %v1282
  %1287 = vst [vmem:[#allocation3 + $0x30] sm:$0xff] %v1283
  %1288 = vst [vmem:[#allocation3 + $0x38] sm:$0xff] %v1284
  %v1289 = vld [vmem:[#allocation2] sm:$0xff]
  %v1290 = vld [vmem:[#allocation2 + $0x8] sm:$0xff]
  %v1291 = vld [vmem:[#allocation2 + $0x10] sm:$0xff]
  %v1292 = vmul.f32 %v1289, %v157
  %v1293 = vmul.f32 %v1290, %v161
  %v1294 = vmul.f32 %v1291, %v159
  %1298 = vrot.lane.b32.xlu0 %v1292, 15
  %v1299 = vpop.permute.xlu0 %1298
  %1300 = vrot.lane.b32.xlu0 %v1293, 15
  %v1301 = vpop.permute.xlu0 %1300
  %1302 = vrot.lane.b32.xlu0 %v1294, 15
  %v1303 = vpop.permute.xlu0 %1302
  %v1304 = vsel %vm177, %v1299, %v1301
  %v1305 = vsel %vm177, %v1301, %v1303
  %1308 = vst [vmem:[#allocation3 + $0x40] sm:$0xff] %v1304
  %1309 = vst [vmem:[#allocation3 + $0x48] sm:$0xff] %v1305
  %v1310 = vld [vmem:[#allocation2 + $0x18] sm:$0xff]
  %v1311 = vld [vmem:[#allocation2 + $0x20] sm:$0xff]
  %v1312 = vld [vmem:[#allocation2 + $0x28] sm:$0xff]
  %v1313 = vmul.f32 %v1310, %v157
  %v1314 = vmul.f32 %v1311, %v161
  %v1315 = vmul.f32 %v1312, %v159
  %1319 = vrot.lane.b32.xlu0 %v1313, 15
  %v1320 = vpop.permute.xlu0 %1319
  %1321 = vrot.lane.b32.xlu0 %v1314, 15
  %v1322 = vpop.permute.xlu0 %1321
  %1323 = vrot.lane.b32.xlu0 %v1315, 15
  %v1324 = vpop.permute.xlu0 %1323
  %v1325 = vsel %vm177, %v1320, %v1322
  %v1326 = vsel %vm177, %v1322, %v1324
  %1329 = vst [vmem:[#allocation3 + $0x50] sm:$0xff] %v1325
  %1330 = vst [vmem:[#allocation3 + $0x58] sm:$0xff] %v1326
  %v1331 = vld [vmem:[#allocation2] sm:$0xff]
  %v1332 = vld [vmem:[#allocation2 + $0x8] sm:$0xff]
  %v1333 = vld [vmem:[#allocation2 + $0x10] sm:$0xff]
  %v1334 = vmul.f32 %v1331, %v219
  %v1335 = vmul.f32 %v1332, %v223
  %v1336 = vmul.f32 %v1333, %v221
  %1340 = vrot.lane.b32.xlu0 %v1334, 1
  %v1341 = vpop.permute.xlu0 %1340
  %1342 = vrot.lane.b32.xlu0 %v1335, 1
  %v1343 = vpop.permute.xlu0 %1342
  %1344 = vrot.lane.b32.xlu0 %v1336, 1
  %v1345 = vpop.permute.xlu0 %1344
  %v1346 = vsel %vm239, %v1341, %v1343
  %v1347 = vsel %vm239, %v1343, %v1345
  %1350 = vst [vmem:[#allocation3 + $0x60] sm:$0xff] %v1346
  %1351 = vst [vmem:[#allocation3 + $0x68] sm:$0xff] %v1347
  %v1352 = vld [vmem:[#allocation2 + $0x18] sm:$0xff]
  %v1353 = vld [vmem:[#allocation2 + $0x20] sm:$0xff]
  %v1354 = vld [vmem:[#allocation2 + $0x28] sm:$0xff]
  %v1355 = vmul.f32 %v1352, %v219
  %v1356 = vmul.f32 %v1353, %v223
  %v1357 = vmul.f32 %v1354, %v221
  %1361 = vrot.lane.b32.xlu0 %v1355, 1
  %v1362 = vpop.permute.xlu0 %1361
  %1363 = vrot.lane.b32.xlu0 %v1356, 1
  %v1364 = vpop.permute.xlu0 %1363
  %1365 = vrot.lane.b32.xlu0 %v1357, 1
  %v1366 = vpop.permute.xlu0 %1365
  %v1367 = vsel %vm239, %v1362, %v1364
  %v1368 = vsel %vm239, %v1364, %v1366
  %1371 = vst [vmem:[#allocation3 + $0x70] sm:$0xff] %v1367
  %1372 = vst [vmem:[#allocation3 + $0x78] sm:$0xff] %v1368
  %v1373 = vld [vmem:[#allocation2 + $0x8] sm:$0xff]
  %v1374 = vld [vmem:[#allocation2 + $0x10] sm:$0xff]
  %v1375 = vld [vmem:[#allocation2 + $0x18] sm:$0xff]
  %v1376 = vmul.f32 %v1373, %v281
  %v1377 = vmul.f32 %v1374, %v284
  %v1378 = vmul.f32 %v1375, %v283
  %1382 = vrot.lane.b32.xlu0 %v1376, 127
  %v1383 = vpop.permute.xlu0 %1382
  %1384 = vrot.lane.b32.xlu0 %v1377, 127
  %v1385 = vpop.permute.xlu0 %1384
  %1386 = vrot.lane.b32.xlu0 %v1378, 127
  %v1387 = vpop.permute.xlu0 %1386
  %v1388 = vsel %vm222, %v1383, %v1385
  %v1389 = vsel %vm222, %v1385, %v1387
  %1392 = vst [vmem:[#allocation3 + $0xa0] sm:$0xff] %v1388
  %1393 = vst [vmem:[#allocation3 + $0xa8] sm:$0xff] %v1389
  %v1394 = vld [vmem:[#allocation2 + $0x20] sm:$0xff]
  %v1395 = vld [vmem:[#allocation2 + $0x28] sm:$0xff]
  %v1396 = vld [vmem:[#allocation2 + $0x30] sm:$0xff]
  %v1397 = vmul.f32 %v1394, %v281
  %v1398 = vmul.f32 %v1395, %v284
  %v1399 = vmul.f32 %v1396, %v283
  %1403 = vrot.lane.b32.xlu0 %v1397, 127
  %v1404 = vpop.permute.xlu0 %1403
  %1405 = vrot.lane.b32.xlu0 %v1398, 127
  %v1406 = vpop.permute.xlu0 %1405
  %1407 = vrot.lane.b32.xlu0 %v1399, 127
  %v1408 = vpop.permute.xlu0 %1407
  %v1409 = vsel %vm222, %v1404, %v1406
  %v1410 = vsel %vm222, %v1406, %v1408
  %1413 = vst [vmem:[#allocation3 + $0xb0] sm:$0xff] %v1409
  %1414 = vst [vmem:[#allocation3 + $0xb8] sm:$0xff] %v1410
  %v1415 = vld [vmem:[#allocation2 + $0x8] sm:$0xff]
  %v1416 = vld [vmem:[#allocation2 + $0x10] sm:$0xff]
  %v1417 = vld [vmem:[#allocation2 + $0x18] sm:$0xff]
  %v1418 = vmul.f32 %v1415, %v341
  %v1419 = vmul.f32 %v1416, %v344
  %v1420 = vmul.f32 %v1417, %v343
  %1424 = vrot.lane.b32.xlu0 %v1418, 113
  %v1425 = vpop.permute.xlu0 %1424
  %1426 = vrot.lane.b32.xlu0 %v1419, 113
  %v1427 = vpop.permute.xlu0 %1426
  %1428 = vrot.lane.b32.xlu0 %v1420, 113
  %v1429 = vpop.permute.xlu0 %1428
  %v1430 = vsel %vm160, %v1425, %v1427
  %v1431 = vsel %vm160, %v1427, %v1429
  %1434 = vst [vmem:[#allocation3 + $0xc0] sm:$0xff] %v1430
  %1435 = vst [vmem:[#allocation3 + $0xc8] sm:$0xff] %v1431
  %v1436 = vld [vmem:[#allocation2 + $0x20] sm:$0xff]
  %v1437 = vld [vmem:[#allocation2 + $0x28] sm:$0xff]
  %v1438 = vld [vmem:[#allocation2 + $0x30] sm:$0xff]
  %v1439 = vmul.f32 %v1436, %v341
  %v1440 = vmul.f32 %v1437, %v344
  %v1441 = vmul.f32 %v1438, %v343
  %1445 = vrot.lane.b32.xlu0 %v1439, 113
  %v1446 = vpop.permute.xlu0 %1445
  %1447 = vrot.lane.b32.xlu0 %v1440, 113
  %v1448 = vpop.permute.xlu0 %1447
  %1449 = vrot.lane.b32.xlu0 %v1441, 113
  %v1450 = vpop.permute.xlu0 %1449
  %v1451 = vsel %vm160, %v1446, %v1448
  %v1452 = vsel %vm160, %v1448, %v1450
  %1455 = vst [vmem:[#allocation3 + $0xd0] sm:$0xff] %v1451
  %1456 = vst [vmem:[#allocation3 + $0xd8] sm:$0xff] %v1452
  %v1457 = vld [vmem:[#allocation2 + $0x8] sm:$0xff]
  %v1458 = vld [vmem:[#allocation2 + $0x10] sm:$0xff]
  %v1459 = vld [vmem:[#allocation2 + $0x18] sm:$0xff]
  %1463 = vrot.lane.b32.xlu0 %v1457, 112
  %v1464 = vpop.permute.xlu0 %1463
  %1465 = vrot.lane.b32.xlu0 %v1458, 112
  %v1466 = vpop.permute.xlu0 %1465
  %1467 = vrot.lane.b32.xlu0 %v1459, 112
  %v1468 = vpop.permute.xlu0 %1467
  %v1469 = vsel %vm399, %v1464, %v1466
  %v1470 = vsel %vm399, %v1466, %v1468
  %1473 = vst [vmem:[#allocation3 + $0xe0] sm:$0xff] %v1469
  %1474 = vst [vmem:[#allocation3 + $0xe8] sm:$0xff] %v1470
  %v1475 = vld [vmem:[#allocation2 + $0x20] sm:$0xff]
  %v1476 = vld [vmem:[#allocation2 + $0x28] sm:$0xff]
  %v1477 = vld [vmem:[#allocation2 + $0x30] sm:$0xff]
  %1481 = vrot.lane.b32.xlu0 %v1475, 112
  %v1482 = vpop.permute.xlu0 %1481
  %1483 = vrot.lane.b32.xlu0 %v1476, 112
  %v1484 = vpop.permute.xlu0 %1483
  %1485 = vrot.lane.b32.xlu0 %v1477, 112
  %v1486 = vpop.permute.xlu0 %1485
  %v1487 = vsel %vm399, %v1482, %v1484
  %v1488 = vsel %vm399, %v1484, %v1486
  %1491 = vst [vmem:[#allocation3 + $0xf0] sm:$0xff] %v1487
  %1492 = vst [vmem:[#allocation3 + $0xf8] sm:$0xff] %v1488
  %v1493 = vld [vmem:[#allocation2 + $0x8] sm:$0xff]
  %v1494 = vld [vmem:[#allocation2 + $0x10] sm:$0xff]
  %v1495 = vld [vmem:[#allocation2 + $0x18] sm:$0xff]
  %v1496 = vmul.f32 %v1493, %v438
  %v1497 = vmul.f32 %v1494, %v441
  %v1498 = vmul.f32 %v1495, %v440
  %1502 = vrot.lane.b32.xlu0 %v1496, 111
  %v1503 = vpop.permute.xlu0 %1502
  %1504 = vrot.lane.b32.xlu0 %v1497, 111
  %v1505 = vpop.permute.xlu0 %1504
  %1506 = vrot.lane.b32.xlu0 %v1498, 111
  %v1507 = vpop.permute.xlu0 %1506
  %v1508 = vsel %vm61, %v1503, %v1505
  %v1509 = vsel %vm61, %v1505, %v1507
  %1512 = vst [vmem:[#allocation3 + $0x100] sm:$0xff] %v1508
  %1513 = vst [vmem:[#allocation3 + $0x108] sm:$0xff] %v1509
  %v1514 = vld [vmem:[#allocation2 + $0x20] sm:$0xff]
  %v1515 = vld [vmem:[#allocation2 + $0x28] sm:$0xff]
  %v1516 = vld [vmem:[#allocation2 + $0x30] sm:$0xff]
  %v1517 = vmul.f32 %v1514, %v438
  %v1518 = vmul.f32 %v1515, %v441
  %v1519 = vmul.f32 %v1516, %v440
  %1523 = vrot.lane.b32.xlu0 %v1517, 111
  %v1524 = vpop.permute.xlu0 %1523
  %1525 = vrot.lane.b32.xlu0 %v1518, 111
  %v1526 = vpop.permute.xlu0 %1525
  %1527 = vrot.lane.b32.xlu0 %v1519, 111
  %v1528 = vpop.permute.xlu0 %1527
  %v1529 = vsel %vm61, %v1524, %v1526
  %v1530 = vsel %vm61, %v1526, %v1528
  %1533 = vst [vmem:[#allocation3 + $0x110] sm:$0xff] %v1529
  %1534 = vst [vmem:[#allocation3 + $0x118] sm:$0xff] %v1530
  %v1535 = vld [vmem:[#allocation3] sm:$0xff]
  %v1536 = vld [vmem:[#allocation3 + $0x8] sm:$0xff]
  %v1537 = vld [vmem:[#allocation3 + $0x10] sm:$0xff]
  %v1538 = vld [vmem:[#allocation3 + $0x18] sm:$0xff]
  %v1539 = vld [vmem:[#allocation3 + $0x20] sm:$0xff]
  %v1540 = vld [vmem:[#allocation3 + $0x28] sm:$0xff]
  %v1541 = vld [vmem:[#allocation3 + $0x30] sm:$0xff]
  %v1542 = vld [vmem:[#allocation3 + $0x38] sm:$0xff]
  %v1543 = vld [vmem:[#allocation3 + $0x40] sm:$0xff]
  %v1544 = vld [vmem:[#allocation3 + $0x48] sm:$0xff]
  %v1545 = vld [vmem:[#allocation3 + $0x50] sm:$0xff]
  %v1546 = vld [vmem:[#allocation3 + $0x58] sm:$0xff]
  %v1547 = vld [vmem:[#allocation3 + $0x60] sm:$0xff]
  %v1548 = vld [vmem:[#allocation3 + $0x68] sm:$0xff]
  %v1549 = vld [vmem:[#allocation3 + $0x70] sm:$0xff]
  %v1550 = vld [vmem:[#allocation3 + $0x78] sm:$0xff]
  %v1551 = vld [vmem:[#allocation3 + $0x80] sm:$0xff]
  %v1552 = vld [vmem:[#allocation3 + $0x88] sm:$0xff]
  %v1553 = vld [vmem:[#allocation3 + $0x90] sm:$0xff]
  %v1554 = vld [vmem:[#allocation3 + $0x98] sm:$0xff]
  %v1555 = vld [vmem:[#allocation3 + $0xa0] sm:$0xff]
  %v1556 = vld [vmem:[#allocation3 + $0xa8] sm:$0xff]
  %v1557 = vld [vmem:[#allocation3 + $0xb0] sm:$0xff]
  %v1558 = vld [vmem:[#allocation3 + $0xb8] sm:$0xff]
  %v1559 = vld [vmem:[#allocation3 + $0xc0] sm:$0xff]
  %v1560 = vld [vmem:[#allocation3 + $0xc8] sm:$0xff]
  %v1561 = vld [vmem:[#allocation3 + $0xd0] sm:$0xff]
  %v1562 = vld [vmem:[#allocation3 + $0xd8] sm:$0xff]
  %v1563 = vld [vmem:[#allocation3 + $0xe0] sm:$0xff]
  %v1564 = vld [vmem:[#allocation3 + $0xe8] sm:$0xff]
  %v1565 = vld [vmem:[#allocation3 + $0xf0] sm:$0xff]
  %v1566 = vld [vmem:[#allocation3 + $0xf8] sm:$0xff]
  %v1567 = vld [vmem:[#allocation3 + $0x100] sm:$0xff]
  %v1568 = vld [vmem:[#allocation3 + $0x108] sm:$0xff]
  %v1569 = vld [vmem:[#allocation3 + $0x110] sm:$0xff]
  %v1570 = vld [vmem:[#allocation3 + $0x118] sm:$0xff]
  %1572 = vset.pattern.permute.xlu0 0
  %1573 = vperm.xlu0 %1572, %v1202
  %v1574 = vpop.permute.xlu0 %1573
  %v1577 = vsel %vm525, %v1200, 0
  %1579 = vmatprep.subr.mxu0 0.0
  %1580 = vmatpush1.msra.mxu0 0.0
  %1581 = vmatprep.subr.mxu0 0.0
  %1582 = vmatpush1.msra.mxu0 0.0
  %1583 = vmatprep.subr.mxu0 0.0
  %1584 = vmatpush1.msra.mxu0 0.0
  %1585 = vmatprep.subr.mxu0 0.0
  %1586 = vmatpush1.msra.mxu0 0.0
  %1587 = vmatprep.subr.mxu0 0.0
  %1588 = vmatpush1.msra.mxu0 0.0
  %1589 = vmatprep.subr.mxu0 0.0
  %1590 = vmatpush1.msra.mxu0 0.0
  %1591 = vmatprep.subr.mxu0 0.0
  %1592 = vmatpush1.msra.mxu0 0.0
  %1593 = vmatprep.subr.mxu0 %v1568
  %1594 = vmatpush1.msra.mxu0 %v1567
  %1595 = vmatprep.subr.mxu0 %v1564
  %1596 = vmatpush1.msra.mxu0 %v1563
  %1597 = vmatprep.subr.mxu0 %v1560
  %1598 = vmatpush1.msra.mxu0 %v1559
  %1599 = vmatprep.subr.mxu0 %v1556
  %1600 = vmatpush1.msra.mxu0 %v1555
  %1601 = vmatprep.subr.mxu0 %v1552
  %1602 = vmatpush1.msra.mxu0 %v1551
  %1603 = vmatprep.subr.mxu0 %v1548
  %1604 = vmatpush1.msra.mxu0 %v1547
  %1605 = vmatprep.subr.mxu0 %v1544
  %1606 = vmatpush1.msra.mxu0 %v1543
  %1607 = vmatprep.subr.mxu0 %v1540
  %1608 = vmatpush1.msra.mxu0 %v1539
  %1609 = vmatprep.subr.mxu0 %v1536
  %1610 = vmatpush1.msra.mxu0 %v1535
  %1611 = vmatprep.subr.mxu0 0.0
  %1612 = vmatpush2.msra.mxu0 0.0
  %1613 = vmatprep.subr.mxu0 0.0
  %1614 = vmatpush2.msra.mxu0 0.0
  %1615 = vmatprep.subr.mxu0 0.0
  %1616 = vmatpush2.msra.mxu0 0.0
  %1617 = vmatprep.subr.mxu0 0.0
  %1618 = vmatpush2.msra.mxu0 0.0
  %1619 = vmatprep.subr.mxu0 0.0
  %1620 = vmatpush2.msra.mxu0 0.0
  %1621 = vmatprep.subr.mxu0 0.0
  %1622 = vmatpush2.msra.mxu0 0.0
  %1623 = vmatprep.subr.mxu0 0.0
  %1624 = vmatpush2.msra.mxu0 0.0
  %1625 = vmatprep.subr.mxu0 0.0
  %1626 = vmatpush2.msra.mxu0 0.0
  %1627 = vmatprep.subr.mxu0 0.0
  %1628 = vmatpush2.msra.mxu0 0.0
  %1629 = vmatprep.subr.mxu0 0.0
  %1630 = vmatpush2.msra.mxu0 0.0
  %1631 = vmatprep.subr.mxu0 0.0
  %1632 = vmatpush2.msra.mxu0 0.0
  %1633 = vmatprep.subr.mxu0 0.0
  %1634 = vmatpush2.msra.mxu0 0.0
  %1635 = vmatprep.subr.mxu0 0.0
  %1636 = vmatpush2.msra.mxu0 0.0
  %1637 = vmatprep.subr.mxu0 0.0
  %1638 = vmatpush2.msra.mxu0 0.0
  %1639 = vmatprep.subr.mxu0 0.0
  %1640 = vmatpush2.msra.mxu0 0.0
  %1641 = vmatprep.subr.mxu0 0.0
  %1642 = vmatpush2.msra.mxu0 0.0
  %1643 = vmatprep.mubr.f32.mxu0 0.0
  %1644 = vmatmul.mubr.f32.gmra.mxu0 %v1577
  %v1645 = vpop.f32.mrf.mxu0
  %v1646 = vadd.f32 %v1574, %v1645
  %v1647 = vpop.f32.mrf.mxu0
  %v1648 = vadd.f32 %v1574, %v1647
  %1649 = vdwg.mxu0
  %1650 = vmatprep.subr.mxu0 0.0
  %1651 = vmatpush1.msra.mxu0 0.0
  %1652 = vmatprep.subr.mxu0 0.0
  %1653 = vmatpush1.msra.mxu0 0.0
  %1654 = vmatprep.subr.mxu0 0.0
  %1655 = vmatpush1.msra.mxu0 0.0
  %1656 = vmatprep.subr.mxu0 0.0
  %1657 = vmatpush1.msra.mxu0 0.0
  %1658 = vmatprep.subr.mxu0 0.0
  %1659 = vmatpush1.msra.mxu0 0.0
  %1660 = vmatprep.subr.mxu0 0.0
  %1661 = vmatpush1.msra.mxu0 0.0
  %1662 = vmatprep.subr.mxu0 0.0
  %1663 = vmatpush1.msra.mxu0 0.0
  %1664 = vmatprep.subr.mxu0 %v1570
  %1665 = vmatpush1.msra.mxu0 %v1569
  %1666 = vmatprep.subr.mxu0 %v1566
  %1667 = vmatpush1.msra.mxu0 %v1565
  %1668 = vmatprep.subr.mxu0 %v1562
  %1669 = vmatpush1.msra.mxu0 %v1561
  %1670 = vmatprep.subr.mxu0 %v1558
  %1671 = vmatpush1.msra.mxu0 %v1557
  %1672 = vmatprep.subr.mxu0 %v1554
  %1673 = vmatpush1.msra.mxu0 %v1553
  %1674 = vmatprep.subr.mxu0 %v1550
  %1675 = vmatpush1.msra.mxu0 %v1549
  %1676 = vmatprep.subr.mxu0 %v1546
  %1677 = vmatpush1.msra.mxu0 %v1545
  %1678 = vmatprep.subr.mxu0 %v1542
  %1679 = vmatpush1.msra.mxu0 %v1541
  %1680 = vmatprep.subr.mxu0 %v1538
  %1681 = vmatpush1.msra.mxu0 %v1537
  %1682 = vmatprep.subr.mxu0 0.0
  %1683 = vmatpush2.msra.mxu0 0.0
  %1684 = vmatprep.subr.mxu0 0.0
  %1685 = vmatpush2.msra.mxu0 0.0
  %1686 = vmatprep.subr.mxu0 0.0
  %1687 = vmatpush2.msra.mxu0 0.0
  %1688 = vmatprep.subr.mxu0 0.0
  %1689 = vmatpush2.msra.mxu0 0.0
  %1690 = vmatprep.subr.mxu0 0.0
  %1691 = vmatpush2.msra.mxu0 0.0
  %1692 = vmatprep.subr.mxu0 0.0
  %1693 = vmatpush2.msra.mxu0 0.0
  %1694 = vmatprep.subr.mxu0 0.0
  %1695 = vmatpush2.msra.mxu0 0.0
  %1696 = vmatprep.subr.mxu0 0.0
  %1697 = vmatpush2.msra.mxu0 0.0
  %1698 = vmatprep.subr.mxu0 0.0
  %1699 = vmatpush2.msra.mxu0 0.0
  %1700 = vmatprep.subr.mxu0 0.0
  %1701 = vmatpush2.msra.mxu0 0.0
  %1702 = vmatprep.subr.mxu0 0.0
  %1703 = vmatpush2.msra.mxu0 0.0
  %1704 = vmatprep.subr.mxu0 0.0
  %1705 = vmatpush2.msra.mxu0 0.0
  %1706 = vmatprep.subr.mxu0 0.0
  %1707 = vmatpush2.msra.mxu0 0.0
  %1708 = vmatprep.subr.mxu0 0.0
  %1709 = vmatpush2.msra.mxu0 0.0
  %1710 = vmatprep.subr.mxu0 0.0
  %1711 = vmatpush2.msra.mxu0 0.0
  %1712 = vmatprep.subr.mxu0 0.0
  %1713 = vmatpush2.msra.mxu0 0.0
  %1714 = vmatprep.mubr.f32.mxu0 0.0
  %1715 = vmatmul.mubr.f32.gmra.mxu0 %v1577
  %v1716 = vpop.f32.mrf.mxu0
  %v1717 = vadd.f32 %v1574, %v1716
  %v1718 = vpop.f32.mrf.mxu0
  %v1719 = vadd.f32 %v1574, %v1718
  %1720 = vdwg.mxu0
  %v1721 = vmax.f32 %v1646, 0.0
  %v1722 = vmax.f32 %v1648, 0.0
  %v1723 = vmax.f32 %v1717, 0.0
  %v1724 = vmax.f32 %v1719, 0.0
  %s1725 = scalar_lea.vmem %s3, 8
  %v1726 = vld [vmem:[%s1725] sm:$0xff]
  %s1727 = scalar_lea.vmem %s4, 8
  %v1728 = vld [vmem:[%s1727] sm:$0xff]
  %1729 = vst [vmem:[#allocation2 + $0x8] sm:$0xff] %v1721
  %1730 = vst [vmem:[#allocation2 + $0x10] sm:$0xff] %v1722
  %1731 = vst [vmem:[#allocation2 + $0x20] sm:$0xff] %v1723
  %1732 = vst [vmem:[#allocation2 + $0x28] sm:$0xff] %v1724
  %1733 = vst [vmem:[#allocation3 + $0x80] sm:$0xff] %v1721
  %1734 = vst [vmem:[#allocation3 + $0x88] sm:$0xff] %v1722
  %1735 = vst [vmem:[#allocation3 + $0x90] sm:$0xff] %v1723
  %1736 = vst [vmem:[#allocation3 + $0x98] sm:$0xff] %v1724
  %v1737 = vld [vmem:[#allocation2] sm:$0xff]
  %v1738 = vld [vmem:[#allocation2 + $0x8] sm:$0xff]
  %v1739 = vld [vmem:[#allocation2 + $0x10] sm:$0xff]
  %v1740 = vmul.f32 %v1737, %v58
  %v1741 = vmul.f32 %v1738, %v62
  %v1742 = vmul.f32 %v1739, %v60
  %1746 = vrot.lane.b32.xlu0 %v1740, 17
  %v1747 = vpop.permute.xlu0 %1746
  %1748 = vrot.lane.b32.xlu0 %v1741, 17
  %v1749 = vpop.permute.xlu0 %1748
  %1750 = vrot.lane.b32.xlu0 %v1742, 17
  %v1751 = vpop.permute.xlu0 %1750
  %v1752 = vsel %vm78, %v1747, %v1749
  %v1753 = vsel %vm78, %v1749, %v1751
  %1756 = vst [vmem:[#allocation3] sm:$0xff] %v1752
  %1757 = vst [vmem:[#allocation3 + $0x8] sm:$0xff] %v1753
  %v1758 = vld [vmem:[#allocation2 + $0x18] sm:$0xff]
  %v1759 = vld [vmem:[#allocation2 + $0x20] sm:$0xff]
  %v1760 = vld [vmem:[#allocation2 + $0x28] sm:$0xff]
  %v1761 = vmul.f32 %v1758, %v58
  %v1762 = vmul.f32 %v1759, %v62
  %v1763 = vmul.f32 %v1760, %v60
  %1767 = vrot.lane.b32.xlu0 %v1761, 17
  %v1768 = vpop.permute.xlu0 %1767
  %1769 = vrot.lane.b32.xlu0 %v1762, 17
  %v1770 = vpop.permute.xlu0 %1769
  %1771 = vrot.lane.b32.xlu0 %v1763, 17
  %v1772 = vpop.permute.xlu0 %1771
  %v1773 = vsel %vm78, %v1768, %v1770
  %v1774 = vsel %vm78, %v1770, %v1772
  %1777 = vst [vmem:[#allocation3 + $0x10] sm:$0xff] %v1773
  %1778 = vst [vmem:[#allocation3 + $0x18] sm:$0xff] %v1774
  %v1779 = vld [vmem:[#allocation2] sm:$0xff]
  %v1780 = vld [vmem:[#allocation2 + $0x8] sm:$0xff]
  %v1781 = vld [vmem:[#allocation2 + $0x10] sm:$0xff]
  %1785 = vrot.lane.b32.xlu0 %v1779, 16
  %v1786 = vpop.permute.xlu0 %1785
  %1787 = vrot.lane.b32.xlu0 %v1780, 16
  %v1788 = vpop.permute.xlu0 %1787
  %1789 = vrot.lane.b32.xlu0 %v1781, 16
  %v1790 = vpop.permute.xlu0 %1789
  %v1791 = vsel %vm118, %v1786, %v1788
  %v1792 = vsel %vm118, %v1788, %v1790
  %1795 = vst [vmem:[#allocation3 + $0x20] sm:$0xff] %v1791
  %1796 = vst [vmem:[#allocation3 + $0x28] sm:$0xff] %v1792
  %v1797 = vld [vmem:[#allocation2 + $0x18] sm:$0xff]
  %v1798 = vld [vmem:[#allocation2 + $0x20] sm:$0xff]
  %v1799 = vld [vmem:[#allocation2 + $0x28] sm:$0xff]
  %1803 = vrot.lane.b32.xlu0 %v1797, 16
  %v1804 = vpop.permute.xlu0 %1803
  %1805 = vrot.lane.b32.xlu0 %v1798, 16
  %v1806 = vpop.permute.xlu0 %1805
  %1807 = vrot.lane.b32.xlu0 %v1799, 16
  %v1808 = vpop.permute.xlu0 %1807
  %v1809 = vsel %vm118, %v1804, %v1806
  %v1810 = vsel %vm118, %v1806, %v1808
  %1813 = vst [vmem:[#allocation3 + $0x30] sm:$0xff] %v1809
  %1814 = vst [vmem:[#allocation3 + $0x38] sm:$0xff] %v1810
  %v1815 = vld [vmem:[#allocation2] sm:$0xff]
  %v1816 = vld [vmem:[#allocation2 + $0x8] sm:$0xff]
  %v1817 = vld [vmem:[#allocation2 + $0x10] sm:$0xff]
  %v1818 = vmul.f32 %v1815, %v157
  %v1819 = vmul.f32 %v1816, %v161
  %v1820 = vmul.f32 %v1817, %v159
  %1824 = vrot.lane.b32.xlu0 %v1818, 15
  %v1825 = vpop.permute.xlu0 %1824
  %1826 = vrot.lane.b32.xlu0 %v1819, 15
  %v1827 = vpop.permute.xlu0 %1826
  %1828 = vrot.lane.b32.xlu0 %v1820, 15
  %v1829 = vpop.permute.xlu0 %1828
  %v1830 = vsel %vm177, %v1825, %v1827
  %v1831 = vsel %vm177, %v1827, %v1829
  %1834 = vst [vmem:[#allocation3 + $0x40] sm:$0xff] %v1830
  %1835 = vst [vmem:[#allocation3 + $0x48] sm:$0xff] %v1831
  %v1836 = vld [vmem:[#allocation2 + $0x18] sm:$0xff]
  %v1837 = vld [vmem:[#allocation2 + $0x20] sm:$0xff]
  %v1838 = vld [vmem:[#allocation2 + $0x28] sm:$0xff]
  %v1839 = vmul.f32 %v1836, %v157
  %v1840 = vmul.f32 %v1837, %v161
  %v1841 = vmul.f32 %v1838, %v159
  %1845 = vrot.lane.b32.xlu0 %v1839, 15
  %v1846 = vpop.permute.xlu0 %1845
  %1847 = vrot.lane.b32.xlu0 %v1840, 15
  %v1848 = vpop.permute.xlu0 %1847
  %1849 = vrot.lane.b32.xlu0 %v1841, 15
  %v1850 = vpop.permute.xlu0 %1849
  %v1851 = vsel %vm177, %v1846, %v1848
  %v1852 = vsel %vm177, %v1848, %v1850
  %1855 = vst [vmem:[#allocation3 + $0x50] sm:$0xff] %v1851
  %1856 = vst [vmem:[#allocation3 + $0x58] sm:$0xff] %v1852
  %v1857 = vld [vmem:[#allocation2] sm:$0xff]
  %v1858 = vld [vmem:[#allocation2 + $0x8] sm:$0xff]
  %v1859 = vld [vmem:[#allocation2 + $0x10] sm:$0xff]
  %v1860 = vmul.f32 %v1857, %v219
  %v1861 = vmul.f32 %v1858, %v223
  %v1862 = vmul.f32 %v1859, %v221
  %1866 = vrot.lane.b32.xlu0 %v1860, 1
  %v1867 = vpop.permute.xlu0 %1866
  %1868 = vrot.lane.b32.xlu0 %v1861, 1
  %v1869 = vpop.permute.xlu0 %1868
  %1870 = vrot.lane.b32.xlu0 %v1862, 1
  %v1871 = vpop.permute.xlu0 %1870
  %v1872 = vsel %vm239, %v1867, %v1869
  %v1873 = vsel %vm239, %v1869, %v1871
  %1876 = vst [vmem:[#allocation3 + $0x60] sm:$0xff] %v1872
  %1877 = vst [vmem:[#allocation3 + $0x68] sm:$0xff] %v1873
  %v1878 = vld [vmem:[#allocation2 + $0x18] sm:$0xff]
  %v1879 = vld [vmem:[#allocation2 + $0x20] sm:$0xff]
  %v1880 = vld [vmem:[#allocation2 + $0x28] sm:$0xff]
  %v1881 = vmul.f32 %v1878, %v219
  %v1882 = vmul.f32 %v1879, %v223
  %v1883 = vmul.f32 %v1880, %v221
  %1887 = vrot.lane.b32.xlu0 %v1881, 1
  %v1888 = vpop.permute.xlu0 %1887
  %1889 = vrot.lane.b32.xlu0 %v1882, 1
  %v1890 = vpop.permute.xlu0 %1889
  %1891 = vrot.lane.b32.xlu0 %v1883, 1
  %v1892 = vpop.permute.xlu0 %1891
  %v1893 = vsel %vm239, %v1888, %v1890
  %v1894 = vsel %vm239, %v1890, %v1892
  %1897 = vst [vmem:[#allocation3 + $0x70] sm:$0xff] %v1893
  %1898 = vst [vmem:[#allocation3 + $0x78] sm:$0xff] %v1894
  %v1899 = vld [vmem:[#allocation2 + $0x8] sm:$0xff]
  %v1900 = vld [vmem:[#allocation2 + $0x10] sm:$0xff]
  %v1901 = vld [vmem:[#allocation2 + $0x18] sm:$0xff]
  %v1902 = vmul.f32 %v1899, %v281
  %v1903 = vmul.f32 %v1900, %v284
  %v1904 = vmul.f32 %v1901, %v283
  %1908 = vrot.lane.b32.xlu0 %v1902, 127
  %v1909 = vpop.permute.xlu0 %1908
  %1910 = vrot.lane.b32.xlu0 %v1903, 127
  %v1911 = vpop.permute.xlu0 %1910
  %1912 = vrot.lane.b32.xlu0 %v1904, 127
  %v1913 = vpop.permute.xlu0 %1912
  %v1914 = vsel %vm222, %v1909, %v1911
  %v1915 = vsel %vm222, %v1911, %v1913
  %1918 = vst [vmem:[#allocation3 + $0xa0] sm:$0xff] %v1914
  %1919 = vst [vmem:[#allocation3 + $0xa8] sm:$0xff] %v1915
  %v1920 = vld [vmem:[#allocation2 + $0x20] sm:$0xff]
  %v1921 = vld [vmem:[#allocation2 + $0x28] sm:$0xff]
  %v1922 = vld [vmem:[#allocation2 + $0x30] sm:$0xff]
  %v1923 = vmul.f32 %v1920, %v281
  %v1924 = vmul.f32 %v1921, %v284
  %v1925 = vmul.f32 %v1922, %v283
  %1929 = vrot.lane.b32.xlu0 %v1923, 127
  %v1930 = vpop.permute.xlu0 %1929
  %1931 = vrot.lane.b32.xlu0 %v1924, 127
  %v1932 = vpop.permute.xlu0 %1931
  %1933 = vrot.lane.b32.xlu0 %v1925, 127
  %v1934 = vpop.permute.xlu0 %1933
  %v1935 = vsel %vm222, %v1930, %v1932
  %v1936 = vsel %vm222, %v1932, %v1934
  %1939 = vst [vmem:[#allocation3 + $0xb0] sm:$0xff] %v1935
  %1940 = vst [vmem:[#allocation3 + $0xb8] sm:$0xff] %v1936
  %v1941 = vld [vmem:[#allocation2 + $0x8] sm:$0xff]
  %v1942 = vld [vmem:[#allocation2 + $0x10] sm:$0xff]
  %v1943 = vld [vmem:[#allocation2 + $0x18] sm:$0xff]
  %v1944 = vmul.f32 %v1941, %v341
  %v1945 = vmul.f32 %v1942, %v344
  %v1946 = vmul.f32 %v1943, %v343
  %1950 = vrot.lane.b32.xlu0 %v1944, 113
  %v1951 = vpop.permute.xlu0 %1950
  %1952 = vrot.lane.b32.xlu0 %v1945, 113
  %v1953 = vpop.permute.xlu0 %1952
  %1954 = vrot.lane.b32.xlu0 %v1946, 113
  %v1955 = vpop.permute.xlu0 %1954
  %v1956 = vsel %vm160, %v1951, %v1953
  %v1957 = vsel %vm160, %v1953, %v1955
  %1960 = vst [vmem:[#allocation3 + $0xc0] sm:$0xff] %v1956
  %1961 = vst [vmem:[#allocation3 + $0xc8] sm:$0xff] %v1957
  %v1962 = vld [vmem:[#allocation2 + $0x20] sm:$0xff]
  %v1963 = vld [vmem:[#allocation2 + $0x28] sm:$0xff]
  %v1964 = vld [vmem:[#allocation2 + $0x30] sm:$0xff]
  %v1965 = vmul.f32 %v1962, %v341
  %v1966 = vmul.f32 %v1963, %v344
  %v1967 = vmul.f32 %v1964, %v343
  %1971 = vrot.lane.b32.xlu0 %v1965, 113
  %v1972 = vpop.permute.xlu0 %1971
  %1973 = vrot.lane.b32.xlu0 %v1966, 113
  %v1974 = vpop.permute.xlu0 %1973
  %1975 = vrot.lane.b32.xlu0 %v1967, 113
  %v1976 = vpop.permute.xlu0 %1975
  %v1977 = vsel %vm160, %v1972, %v1974
  %v1978 = vsel %vm160, %v1974, %v1976
  %1981 = vst [vmem:[#allocation3 + $0xd0] sm:$0xff] %v1977
  %1982 = vst [vmem:[#allocation3 + $0xd8] sm:$0xff] %v1978
  %v1983 = vld [vmem:[#allocation2 + $0x8] sm:$0xff]
  %v1984 = vld [vmem:[#allocation2 + $0x10] sm:$0xff]
  %v1985 = vld [vmem:[#allocation2 + $0x18] sm:$0xff]
  %1989 = vrot.lane.b32.xlu0 %v1983, 112
  %v1990 = vpop.permute.xlu0 %1989
  %1991 = vrot.lane.b32.xlu0 %v1984, 112
  %v1992 = vpop.permute.xlu0 %1991
  %1993 = vrot.lane.b32.xlu0 %v1985, 112
  %v1994 = vpop.permute.xlu0 %1993
  %v1995 = vsel %vm399, %v1990, %v1992
  %v1996 = vsel %vm399, %v1992, %v1994
  %1999 = vst [vmem:[#allocation3 + $0xe0] sm:$0xff] %v1995
  %2000 = vst [vmem:[#allocation3 + $0xe8] sm:$0xff] %v1996
  %v2001 = vld [vmem:[#allocation2 + $0x20] sm:$0xff]
  %v2002 = vld [vmem:[#allocation2 + $0x28] sm:$0xff]
  %v2003 = vld [vmem:[#allocation2 + $0x30] sm:$0xff]
  %2007 = vrot.lane.b32.xlu0 %v2001, 112
  %v2008 = vpop.permute.xlu0 %2007
  %2009 = vrot.lane.b32.xlu0 %v2002, 112
  %v2010 = vpop.permute.xlu0 %2009
  %2011 = vrot.lane.b32.xlu0 %v2003, 112
  %v2012 = vpop.permute.xlu0 %2011
  %v2013 = vsel %vm399, %v2008, %v2010
  %v2014 = vsel %vm399, %v2010, %v2012
  %2017 = vst [vmem:[#allocation3 + $0xf0] sm:$0xff] %v2013
  %2018 = vst [vmem:[#allocation3 + $0xf8] sm:$0xff] %v2014
  %v2019 = vld [vmem:[#allocation2 + $0x8] sm:$0xff]
  %v2020 = vld [vmem:[#allocation2 + $0x10] sm:$0xff]
  %v2021 = vld [vmem:[#allocation2 + $0x18] sm:$0xff]
  %v2022 = vmul.f32 %v2019, %v438
  %v2023 = vmul.f32 %v2020, %v441
  %v2024 = vmul.f32 %v2021, %v440
  %2028 = vrot.lane.b32.xlu0 %v2022, 111
  %v2029 = vpop.permute.xlu0 %2028
  %2030 = vrot.lane.b32.xlu0 %v2023, 111
  %v2031 = vpop.permute.xlu0 %2030
  %2032 = vrot.lane.b32.xlu0 %v2024, 111
  %v2033 = vpop.permute.xlu0 %2032
  %v2034 = vsel %vm61, %v2029, %v2031
  %v2035 = vsel %vm61, %v2031, %v2033
  %2038 = vst [vmem:[#allocation3 + $0x100] sm:$0xff] %v2034
  %2039 = vst [vmem:[#allocation3 + $0x108] sm:$0xff] %v2035
  %v2040 = vld [vmem:[#allocation2 + $0x20] sm:$0xff]
  %v2041 = vld [vmem:[#allocation2 + $0x28] sm:$0xff]
  %v2042 = vld [vmem:[#allocation2 + $0x30] sm:$0xff]
  %v2043 = vmul.f32 %v2040, %v438
  %v2044 = vmul.f32 %v2041, %v441
  %v2045 = vmul.f32 %v2042, %v440
  %2049 = vrot.lane.b32.xlu0 %v2043, 111
  %v2050 = vpop.permute.xlu0 %2049
  %2051 = vrot.lane.b32.xlu0 %v2044, 111
  %v2052 = vpop.permute.xlu0 %2051
  %2053 = vrot.lane.b32.xlu0 %v2045, 111
  %v2054 = vpop.permute.xlu0 %2053
  %v2055 = vsel %vm61, %v2050, %v2052
  %v2056 = vsel %vm61, %v2052, %v2054
  %2059 = vst [vmem:[#allocation3 + $0x110] sm:$0xff] %v2055
  %2060 = vst [vmem:[#allocation3 + $0x118] sm:$0xff] %v2056
  %v2061 = vld [vmem:[#allocation3] sm:$0xff]
  %v2062 = vld [vmem:[#allocation3 + $0x8] sm:$0xff]
  %v2063 = vld [vmem:[#allocation3 + $0x10] sm:$0xff]
  %v2064 = vld [vmem:[#allocation3 + $0x18] sm:$0xff]
  %v2065 = vld [vmem:[#allocation3 + $0x20] sm:$0xff]
  %v2066 = vld [vmem:[#allocation3 + $0x28] sm:$0xff]
  %v2067 = vld [vmem:[#allocation3 + $0x30] sm:$0xff]
  %v2068 = vld [vmem:[#allocation3 + $0x38] sm:$0xff]
  %v2069 = vld [vmem:[#allocation3 + $0x40] sm:$0xff]
  %v2070 = vld [vmem:[#allocation3 + $0x48] sm:$0xff]
  %v2071 = vld [vmem:[#allocation3 + $0x50] sm:$0xff]
  %v2072 = vld [vmem:[#allocation3 + $0x58] sm:$0xff]
  %v2073 = vld [vmem:[#allocation3 + $0x60] sm:$0xff]
  %v2074 = vld [vmem:[#allocation3 + $0x68] sm:$0xff]
  %v2075 = vld [vmem:[#allocation3 + $0x70] sm:$0xff]
  %v2076 = vld [vmem:[#allocation3 + $0x78] sm:$0xff]
  %v2077 = vld [vmem:[#allocation3 + $0x80] sm:$0xff]
  %v2078 = vld [vmem:[#allocation3 + $0x88] sm:$0xff]
  %v2079 = vld [vmem:[#allocation3 + $0x90] sm:$0xff]
  %v2080 = vld [vmem:[#allocation3 + $0x98] sm:$0xff]
  %v2081 = vld [vmem:[#allocation3 + $0xa0] sm:$0xff]
  %v2082 = vld [vmem:[#allocation3 + $0xa8] sm:$0xff]
  %v2083 = vld [vmem:[#allocation3 + $0xb0] sm:$0xff]
  %v2084 = vld [vmem:[#allocation3 + $0xb8] sm:$0xff]
  %v2085 = vld [vmem:[#allocation3 + $0xc0] sm:$0xff]
  %v2086 = vld [vmem:[#allocation3 + $0xc8] sm:$0xff]
  %v2087 = vld [vmem:[#allocation3 + $0xd0] sm:$0xff]
  %v2088 = vld [vmem:[#allocation3 + $0xd8] sm:$0xff]
  %v2089 = vld [vmem:[#allocation3 + $0xe0] sm:$0xff]
  %v2090 = vld [vmem:[#allocation3 + $0xe8] sm:$0xff]
  %v2091 = vld [vmem:[#allocation3 + $0xf0] sm:$0xff]
  %v2092 = vld [vmem:[#allocation3 + $0xf8] sm:$0xff]
  %v2093 = vld [vmem:[#allocation3 + $0x100] sm:$0xff]
  %v2094 = vld [vmem:[#allocation3 + $0x108] sm:$0xff]
  %v2095 = vld [vmem:[#allocation3 + $0x110] sm:$0xff]
  %v2096 = vld [vmem:[#allocation3 + $0x118] sm:$0xff]
  %2098 = vset.pattern.permute.xlu0 0
  %2099 = vperm.xlu0 %2098, %v1728
  %v2100 = vpop.permute.xlu0 %2099
  %v2103 = vsel %vm525, %v1726, 0
  %2105 = vmatprep.subr.mxu0 0.0
  %2106 = vmatpush1.msra.mxu0 0.0
  %2107 = vmatprep.subr.mxu0 0.0
  %2108 = vmatpush1.msra.mxu0 0.0
  %2109 = vmatprep.subr.mxu0 0.0
  %2110 = vmatpush1.msra.mxu0 0.0
  %2111 = vmatprep.subr.mxu0 0.0
  %2112 = vmatpush1.msra.mxu0 0.0
  %2113 = vmatprep.subr.mxu0 0.0
  %2114 = vmatpush1.msra.mxu0 0.0
  %2115 = vmatprep.subr.mxu0 0.0
  %2116 = vmatpush1.msra.mxu0 0.0
  %2117 = vmatprep.subr.mxu0 0.0
  %2118 = vmatpush1.msra.mxu0 0.0
  %2119 = vmatprep.subr.mxu0 %v2094
  %2120 = vmatpush1.msra.mxu0 %v2093
  %2121 = vmatprep.subr.mxu0 %v2090
  %2122 = vmatpush1.msra.mxu0 %v2089
  %2123 = vmatprep.subr.mxu0 %v2086
  %2124 = vmatpush1.msra.mxu0 %v2085
  %2125 = vmatprep.subr.mxu0 %v2082
  %2126 = vmatpush1.msra.mxu0 %v2081
  %2127 = vmatprep.subr.mxu0 %v2078
  %2128 = vmatpush1.msra.mxu0 %v2077
  %2129 = vmatprep.subr.mxu0 %v2074
  %2130 = vmatpush1.msra.mxu0 %v2073
  %2131 = vmatprep.subr.mxu0 %v2070
  %2132 = vmatpush1.msra.mxu0 %v2069
  %2133 = vmatprep.subr.mxu0 %v2066
  %2134 = vmatpush1.msra.mxu0 %v2065
  %2135 = vmatprep.subr.mxu0 %v2062
  %2136 = vmatpush1.msra.mxu0 %v2061
  %2137 = vmatprep.subr.mxu0 0.0
  %2138 = vmatpush2.msra.mxu0 0.0
  %2139 = vmatprep.subr.mxu0 0.0
  %2140 = vmatpush2.msra.mxu0 0.0
  %2141 = vmatprep.subr.mxu0 0.0
  %2142 = vmatpush2.msra.mxu0 0.0
  %2143 = vmatprep.subr.mxu0 0.0
  %2144 = vmatpush2.msra.mxu0 0.0
  %2145 = vmatprep.subr.mxu0 0.0
  %2146 = vmatpush2.msra.mxu0 0.0
  %2147 = vmatprep.subr.mxu0 0.0
  %2148 = vmatpush2.msra.mxu0 0.0
  %2149 = vmatprep.subr.mxu0 0.0
  %2150 = vmatpush2.msra.mxu0 0.0
  %2151 = vmatprep.subr.mxu0 0.0
  %2152 = vmatpush2.msra.mxu0 0.0
  %2153 = vmatprep.subr.mxu0 0.0
  %2154 = vmatpush2.msra.mxu0 0.0
  %2155 = vmatprep.subr.mxu0 0.0
  %2156 = vmatpush2.msra.mxu0 0.0
  %2157 = vmatprep.subr.mxu0 0.0
  %2158 = vmatpush2.msra.mxu0 0.0
  %2159 = vmatprep.subr.mxu0 0.0
  %2160 = vmatpush2.msra.mxu0 0.0
  %2161 = vmatprep.subr.mxu0 0.0
  %2162 = vmatpush2.msra.mxu0 0.0
  %2163 = vmatprep.subr.mxu0 0.0
  %2164 = vmatpush2.msra.mxu0 0.0
  %2165 = vmatprep.subr.mxu0 0.0
  %2166 = vmatpush2.msra.mxu0 0.0
  %2167 = vmatprep.subr.mxu0 0.0
  %2168 = vmatpush2.msra.mxu0 0.0
  %2169 = vmatprep.mubr.f32.mxu0 0.0
  %2170 = vmatmul.mubr.f32.gmra.mxu0 %v2103
  %v2171 = vpop.f32.mrf.mxu0
  %v2172 = vadd.f32 %v2100, %v2171
  %v2173 = vpop.f32.mrf.mxu0
  %v2174 = vadd.f32 %v2100, %v2173
  %2175 = vdwg.mxu0
  %2176 = vmatprep.subr.mxu0 0.0
  %2177 = vmatpush1.msra.mxu0 0.0
  %2178 = vmatprep.subr.mxu0 0.0
  %2179 = vmatpush1.msra.mxu0 0.0
  %2180 = vmatprep.subr.mxu0 0.0
  %2181 = vmatpush1.msra.mxu0 0.0
  %2182 = vmatprep.subr.mxu0 0.0
  %2183 = vmatpush1.msra.mxu0 0.0
  %2184 = vmatprep.subr.mxu0 0.0
  %2185 = vmatpush1.msra.mxu0 0.0
  %2186 = vmatprep.subr.mxu0 0.0
  %2187 = vmatpush1.msra.mxu0 0.0
  %2188 = vmatprep.subr.mxu0 0.0
  %2189 = vmatpush1.msra.mxu0 0.0
  %2190 = vmatprep.subr.mxu0 %v2096
  %2191 = vmatpush1.msra.mxu0 %v2095
  %2192 = vmatprep.subr.mxu0 %v2092
  %2193 = vmatpush1.msra.mxu0 %v2091
  %2194 = vmatprep.subr.mxu0 %v2088
  %2195 = vmatpush1.msra.mxu0 %v2087
  %2196 = vmatprep.subr.mxu0 %v2084
  %2197 = vmatpush1.msra.mxu0 %v2083
  %2198 = vmatprep.subr.mxu0 %v2080
  %2199 = vmatpush1.msra.mxu0 %v2079
  %2200 = vmatprep.subr.mxu0 %v2076
  %2201 = vmatpush1.msra.mxu0 %v2075
  %2202 = vmatprep.subr.mxu0 %v2072
  %2203 = vmatpush1.msra.mxu0 %v2071
  %2204 = vmatprep.subr.mxu0 %v2068
  %2205 = vmatpush1.msra.mxu0 %v2067
  %2206 = vmatprep.subr.mxu0 %v2064
  %2207 = vmatpush1.msra.mxu0 %v2063
  %2208 = vmatprep.subr.mxu0 0.0
  %2209 = vmatpush2.msra.mxu0 0.0
  %2210 = vmatprep.subr.mxu0 0.0
  %2211 = vmatpush2.msra.mxu0 0.0
  %2212 = vmatprep.subr.mxu0 0.0
  %2213 = vmatpush2.msra.mxu0 0.0
  %2214 = vmatprep.subr.mxu0 0.0
  %2215 = vmatpush2.msra.mxu0 0.0
  %2216 = vmatprep.subr.mxu0 0.0
  %2217 = vmatpush2.msra.mxu0 0.0
  %2218 = vmatprep.subr.mxu0 0.0
  %2219 = vmatpush2.msra.mxu0 0.0
  %2220 = vmatprep.subr.mxu0 0.0
  %2221 = vmatpush2.msra.mxu0 0.0
  %2222 = vmatprep.subr.mxu0 0.0
  %2223 = vmatpush2.msra.mxu0 0.0
  %2224 = vmatprep.subr.mxu0 0.0
  %2225 = vmatpush2.msra.mxu0 0.0
  %2226 = vmatprep.subr.mxu0 0.0
  %2227 = vmatpush2.msra.mxu0 0.0
  %2228 = vmatprep.subr.mxu0 0.0
  %2229 = vmatpush2.msra.mxu0 0.0
  %2230 = vmatprep.subr.mxu0 0.0
  %2231 = vmatpush2.msra.mxu0 0.0
  %2232 = vmatprep.subr.mxu0 0.0
  %2233 = vmatpush2.msra.mxu0 0.0
  %2234 = vmatprep.subr.mxu0 0.0
  %2235 = vmatpush2.msra.mxu0 0.0
  %2236 = vmatprep.subr.mxu0 0.0
  %2237 = vmatpush2.msra.mxu0 0.0
  %2238 = vmatprep.subr.mxu0 0.0
  %2239 = vmatpush2.msra.mxu0 0.0
  %2240 = vmatprep.mubr.f32.mxu0 0.0
  %2241 = vmatmul.mubr.f32.gmra.mxu0 %v2103
  %v2242 = vpop.f32.mrf.mxu0
  %v2243 = vadd.f32 %v2100, %v2242
  %v2244 = vpop.f32.mrf.mxu0
  %v2245 = vadd.f32 %v2100, %v2244
  %2246 = vdwg.mxu0
  %v2247 = vadd.f32 %v2172, %v1195
  %v2248 = vadd.f32 %v2174, %v1196
  %v2249 = vadd.f32 %v2243, %v1197
  %v2250 = vadd.f32 %v2245, %v1198
  %v2251 = vadd.f32 %v2247, %v30
  %v2252 = vadd.f32 %v2248, %v31
  %v2253 = vadd.f32 %v2249, %v32
  %v2254 = vadd.f32 %v2250, %v33
  %2255 = vst [vmem:[%s6] sm:$0xff] %v2251
  %2256 = vst [vmem:[%s6 + $0x8] sm:$0xff] %v2252
  %2257 = vst [vmem:[%s6 + $0x10] sm:$0xff] %v2253
  %2258 = vst [vmem:[%s6 + $0x18] sm:$0xff] %v2254
  // Predicated region
  $region26: #{residual_group.1} parent=0 // pred_check
    _
  $region27: #{residual_group.1} parent=0 // pred_check_branch
    %2260 = sbr.rel (0) target = $region29
  $region28: #{residual_group.1} parent=0 // pred_region
    _
  $region29: #{residual_group.1} parent=0 // pred_fallthru
    _
  // Predicated region
  $region30: #{residual_group.1} parent=0 // pred_check
    _
  $region31: #{residual_group.1} parent=0 // pred_check_branch
    %2262 = sbr.rel (0) target = $region33
  $region32: #{residual_group.1} parent=0 // pred_region
    _
  $region33: #{residual_group.1} parent=0 // pred_fallthru
    _

</llo_original>
